<compile_context>
chip_gen: v6e
topology: v6e:2x2x1
jax: 0.10.0
libtpu: 0.0.40
codegen_flags: <defaults>
</compile_context>

<pallas_src>
import functools

import jax
import jax.numpy as jnp
import numpy as np
from jax import lax
from jax.experimental import pallas as pl
from jax.experimental.pallas import tpu as pltpu

LANE = 128
EPS = 1e-5


def _round_up(x, m):
    return ((x + m - 1) // m) * m


def _conv_k_layout(cin):
    """Per-tap K stride and total (lane-padded) K of the im2col matrix."""
    if 9 * cin <= LANE:                 # tiny-C entry layers: pack taps tightly
        return cin, LANE
    kt = _round_up(cin, LANE)           # realistic C: lane-pad each tap
    return kt, 9 * kt


def _fold_bn(gamma, beta, mean, var):
    scale = gamma / jnp.sqrt(var + EPS)
    shift = beta - mean * scale
    return scale, shift


def _prep_conv_weight(w_oihw, kt, ktot, npad):
    """OIHW -> (ktot, npad) bf16 matrix matching the in-kernel im2col layout."""
    cout, cin = w_oihw.shape[0], w_oihw.shape[1]
    w = jnp.transpose(w_oihw, (2, 3, 1, 0)).reshape(9, cin, cout)   # tap-major HWIO
    w = jnp.pad(w, ((0, 0), (0, kt - cin), (0, npad - cout)))       # (9, kt, npad)
    w = w.reshape(9 * kt, npad)
    w = jnp.pad(w, ((0, ktot - 9 * kt), (0, 0)))                    # (ktot, npad)
    return w.astype(jnp.bfloat16)


def _shift_range(k, in_size, out_size, stride):
    """(dst_start, src_start, length) for conv tap offset k in {0,1,2}, pad=1."""
    dst0 = 1 if k == 0 else 0
    dst_max = min(out_size - 1, (in_size - k) // stride)
    length = dst_max - dst0 + 1
    src0 = dst0 * stride + (k - 1)
    return dst0, src0, length


def _scatter_taps(patches_ref, val, c, kt, h_in, w_in, h_out, w_out, stride):
    """Write the 9 shifted copies of `val` into the im2col scratch.

    Halo strips and channel-pad lanes are never written here; they hold the
    zeros laid down by the one-time init at grid step 0.
    """
    for kh in range(3):
        di0, si0, li = _shift_range(kh, h_in, h_out, stride)
        for kw in range(3):
            dj0, sj0, lj = _shift_range(kw, w_in, w_out, stride)
            if li <= 0 or lj <= 0:
                continue
            if stride == 1:
                v = val[si0:si0 + li, sj0:sj0 + lj, :c]
            else:
                # TODO(synk): stride>1 path (strided value slice) is correct but
                # not exercised by the test below.
                v = lax.slice(val, (si0, sj0, 0),
                              (si0 + (li - 1) * stride + 1,
                               sj0 + (lj - 1) * stride + 1, c),
                              (stride, stride, 1))
            t = kh * 3 + kw
            patches_ref[pl.ds(di0, li), pl.ds(dj0, lj), pl.ds(t * kt, c)] = v


# -----------------------------------------------------------------------------
# Fused kernel: BN1+ReLU -> im2col -> conv1 -> BN2+ReLU -> im2col -> conv2
# Grid = (N,); one image per grid step; each conv is ONE deep-K MXU matmul.
# -----------------------------------------------------------------------------
def _preact_block_kernel(x_ref, s1_ref, b1_ref, w1_ref, s2_ref, b2_ref, w2_ref,
                         o_ref, patches1, patches2, *,
                         H, W, Cin, Hout, Wout, stride,
                         Kt1, K1, Cout, Cpout, Kt2, K2):
    bf16 = jnp.bfloat16
    M = Hout * Wout

    # One-time zero of the im2col buffers: the interior is fully overwritten
    # every step; halo strips / channel-pad lanes are never written again.
    @pl.when(pl.program_id(0) == 0)
    def _init():
        patches1[...] = jnp.zeros_like(patches1)
        patches2[...] = jnp.zeros_like(patches2)

    # ---- stage 1: BN1 + ReLU (f32 VPU math), bf16 MXU operand
    x = x_ref[0]                                           # (H, W, Cin) f32
    s1 = s1_ref[...].reshape(1, 1, Cin)
    b1 = b1_ref[...].reshape(1, 1, Cin)
    y1 = jnp.maximum(x * s1 + b1, 0.0).astype(bf16)        # (H, W, Cin)

    # ---- stage 2: conv1 (3x3, stride) as a single deep-K matmul
    _scatter_taps(patches1, y1, Cin, Kt1, H, W, Hout, Wout, stride)
    p1 = patches1[...].reshape(M, K1)
    z1 = jnp.dot(p1, w1_ref[...], preferred_element_type=jnp.float32)  # (M, Cpout)
    # dropout1: identity (inference)

    # ---- stage 3: BN2 + ReLU (channel-pad lanes of z1 stay exactly zero)
    y2 = jnp.maximum(z1 * s2_ref[...] + b2_ref[...], 0.0)
    y2 = y2.astype(bf16).reshape(Hout, Wout, Cpout)

    # ---- stage 4: conv2 (3x3, stride 1) as a single deep-K matmul
    _scatter_taps(patches2, y2, Cout, Kt2, Hout, Wout, Hout, Wout, 1)
    p2 = patches2[...].reshape(M, K2)
    z2 = jnp.dot(p2, w2_ref[...], preferred_element_type=jnp.float32)  # (M, Cpout)
    # dropout2: identity (inference)

    # ---- stage 5: store the UNPADDED NHWC output (lane-dense when Cout%128==0)
    o_ref[...] = z2[:, :Cout].reshape(1, Hout, Wout, Cout).astype(o_ref.dtype)


def _vmem_limit_bytes():
    """Scoped VMEM limit with headroom below physical per-core VMEM."""
    try:
        cap = pltpu.get_tpu_info().vmem_capacity_bytes
    except Exception:
        cap = 64 * 1024 * 1024              # conservative (v7x-sized) fallback
    return max(32 * 1024 * 1024, min(cap * 3 // 4, 100 * 1024 * 1024))


# -----------------------------------------------------------------------------
# Wrapper: fold/pack parameters ONCE, return a jitted NCHW -> NCHW forward.
# -----------------------------------------------------------------------------
def make_preact_block(params, stride=1):
    Cout, Cin = params["w1"].shape[0], params["w1"].shape[1]
    Cpout = _round_up(Cout, LANE)
    Kt1, K1 = _conv_k_layout(Cin)
    Kt2, K2 = _conv_k_layout(Cout)

    s1, b1 = _fold_bn(params["gamma1"], params["beta1"],
                      params["mean1"], params["var1"])
    s2, b2 = _fold_bn(params["gamma2"], params["beta2"],
                      params["mean2"], params["var2"])
    s1 = s1.reshape(1, Cin).astype(jnp.float32)
    b1 = b1.reshape(1, Cin).astype(jnp.float32)
    s2p = jnp.pad(s2, (0, Cpout - Cout)).reshape(1, Cpout).astype(jnp.float32)
    b2p = jnp.pad(b2, (0, Cpout - Cout)).reshape(1, Cpout).astype(jnp.float32)
    w1k = _prep_conv_weight(params["w1"], Kt1, K1, Cpout)   # (K1, Cpout) bf16
    w2k = _prep_conv_weight(params["w2"], Kt2, K2, Cpout)   # (K2, Cpout) bf16

    vmem_limit = _vmem_limit_bytes()

    @jax.jit
    def forward(x_nchw):
        N, _, H, W = x_nchw.shape
        Hout = (H + 2 - 3) // stride + 1
        Wout = (W + 2 - 3) // stride + 1

        # NCHW -> NHWC (required only by the module's NCHW contract; a model
        # kept NHWC end-to-end would drop this HBM pass entirely).
        x = jnp.transpose(x_nchw, (0, 2, 3, 1)).astype(jnp.float32)

        kernel = functools.partial(
            _preact_block_kernel,
            H=H, W=W, Cin=Cin, Hout=Hout, Wout=Wout, stride=stride,
            Kt1=Kt1, K1=K1, Cout=Cout, Cpout=Cpout, Kt2=Kt2, K2=K2)

        out = pl.pallas_call(
            kernel,
            out_shape=jax.ShapeDtypeStruct((N, Hout, Wout, Cout), jnp.float32),
            grid_spec=pltpu.PrefetchScalarGridSpec(
                num_scalar_prefetch=0,
                grid=(N,),
                in_specs=[
                    pl.BlockSpec((1, H, W, Cin), lambda n: (n, 0, 0, 0)),
                    pl.BlockSpec((1, Cin), lambda n: (0, 0)),
                    pl.BlockSpec((1, Cin), lambda n: (0, 0)),
                    pl.BlockSpec((K1, Cpout), lambda n: (0, 0)),
                    pl.BlockSpec((1, Cpout), lambda n: (0, 0)),
                    pl.BlockSpec((1, Cpout), lambda n: (0, 0)),
                    pl.BlockSpec((K2, Cpout), lambda n: (0, 0)),
                ],
                out_specs=pl.BlockSpec((1, Hout, Wout, Cout),
                                       lambda n: (n, 0, 0, 0)),
                scratch_shapes=[
                    pltpu.VMEM((Hout, Wout, K1), jnp.bfloat16),  # im2col, conv1
                    pltpu.VMEM((Hout, Wout, K2), jnp.bfloat16),  # im2col, conv2
                ],
            ),
            compiler_params=pltpu.CompilerParams(
                # "arbitrary": sequential per-image loop on one core, so the
                # one-time scratch init at step 0 is valid everywhere.
                # TODO(synk): row tiling + per-tile halo refill to use both v7x
                # TensorCores via a "parallel" spatial axis.
                dimension_semantics=("arbitrary",),
                vmem_limit_bytes=vmem_limit,
            ),
        )(x, s1, b1, w1k, s2p, b2p, w2k)

        return jnp.transpose(out, (0, 3, 1, 2))                # NHWC -> NCHW

    return forward


# -----------------------------------------------------------------------------
# Pure-JAX reference (same numerics: f32 BN/ReLU, bf16 conv operands, f32 acc).
# -----------------------------------------------------------------------------
def ref_forward(x_nchw, params, stride=1):
    x = jnp.transpose(x_nchw, (0, 2, 3, 1)).astype(jnp.float32)
    s1, b1 = _fold_bn(params["gamma1"], params["beta1"],
                      params["mean1"], params["var1"])
    s2, b2 = _fold_bn(params["gamma2"], params["beta2"],
                      params["mean2"], params["var2"])
    w1 = jnp.transpose(params["w1"], (2, 3, 1, 0)).astype(jnp.bfloat16)
    w2 = jnp.transpose(params["w2"], (2, 3, 1, 0)).astype(jnp.bfloat16)
    dn = ("NHWC", "HWIO", "NHWC")
    y = jnp.maximum(x * s1 + b1, 0.0).astype(jnp.bfloat16)
    y = lax.conv_general_dilated(y, w1, (stride, stride), ((1, 1), (1, 1)),
                                 dimension_numbers=dn,
                                 preferred_element_type=jnp.float32)
    y = jnp.maximum(y * s2 + b2, 0.0).astype(jnp.bfloat16)
    y = lax.conv_general_dilated(y, w2, (1, 1), ((1, 1), (1, 1)),
                                 dimension_numbers=dn,
                                 preferred_element_type=jnp.float32)
    return jnp.transpose(y, (0, 3, 1, 2))


if __name__ == "__main__":
    N, C_in, C_out, H, W = 2, 4, 8, 16, 16
    stride = 1

    key = jax.random.PRNGKey(0)
    keys = jax.random.split(key, 11)

    params = {
        # bn1 (over in_channels)
        "gamma1": jax.random.uniform(keys[0], (C_in,), jnp.float32, 0.5, 1.5),
        "beta1":  0.1 * jax.random.normal(keys[1], (C_in,), jnp.float32),
        "mean1":  0.1 * jax.random.normal(keys[2], (C_in,), jnp.float32),
        "var1":   jax.random.uniform(keys[3], (C_in,), jnp.float32, 0.5, 1.5),
        # conv1 weight (OIHW like PyTorch), no bias
        "w1": 0.1 * jax.random.normal(keys[4], (C_out, C_in, 3, 3), jnp.float32),
        # bn2 (over out_channels)
        "gamma2": jax.random.uniform(keys[5], (C_out,), jnp.float32, 0.5, 1.5),
        "beta2":  0.1 * jax.random.normal(keys[6], (C_out,), jnp.float32),
        "mean2":  0.1 * jax.random.normal(keys[7], (C_out,), jnp.float32),
        "var2":   jax.random.uniform(keys[8], (C_out,), jnp.float32, 0.5, 1.5),
        # conv2 weight
        "w2": 0.1 * jax.random.normal(keys[9], (C_out, C_out, 3, 3), jnp.float32),
    }

    x = jax.random.normal(keys[10], (N, C_in, H, W), jnp.float32)   # NCHW input

    forward = make_preact_block(params, stride=stride)              # prep once
    out = jax.block_until_ready(forward(x))
    ref = jax.block_until_ready(ref_forward(x, params, stride=stride))

    assert out.shape == (N, C_out, H // stride, W // stride), out.shape
    np.testing.assert_allclose(np.asarray(out), np.asarray(ref),
                               atol=2e-3, rtol=2e-3)

    print("KERNEL_OK")
</pallas_src>

<mosaic_0001>
module attributes {stable_mosaic.version = 11 : i64} {
  func.func @_preact_block_kernel(%arg0: i32, %arg1: memref<1x16x16x4xf32, #tpu.memory_space<vmem>>, %arg2: memref<1x4xf32, #tpu.memory_space<vmem>>, %arg3: memref<1x4xf32, #tpu.memory_space<vmem>>, %arg4: memref<128x128xbf16, #tpu.memory_space<vmem>>, %arg5: memref<1x128xf32, #tpu.memory_space<vmem>>, %arg6: memref<1x128xf32, #tpu.memory_space<vmem>>, %arg7: memref<128x128xbf16, #tpu.memory_space<vmem>>, %arg8: memref<1x16x16x8xf32, #tpu.memory_space<vmem>>, %arg9: memref<16x16x128xbf16, #tpu.memory_space<vmem>>, %arg10: memref<16x16x128xbf16, #tpu.memory_space<vmem>>) attributes {dimension_semantics = [#tpu.dimension_semantics<arbitrary>], iteration_bounds = array<i64: 2>, scalar_prefetch = 0 : i64, scratch_operands = 2 : i64, tpu.core_type = #tpu.core_type<tc>, window_params = [{transform_indices = @transform_0, window_bounds = array<i64: 1, 16, 16, 4>}, {pipeline_mode = #tpu.pipeline_mode<synchronous>, transform_indices = @transform_1, window_bounds = array<i64: 1, 4>}, {pipeline_mode = #tpu.pipeline_mode<synchronous>, transform_indices = @transform_2, window_bounds = array<i64: 1, 4>}, {pipeline_mode = #tpu.pipeline_mode<synchronous>, transform_indices = @transform_3, window_bounds = array<i64: 128, 128>}, {pipeline_mode = #tpu.pipeline_mode<synchronous>, transform_indices = @transform_4, window_bounds = array<i64: 1, 128>}, {pipeline_mode = #tpu.pipeline_mode<synchronous>, transform_indices = @transform_5, window_bounds = array<i64: 1, 128>}, {pipeline_mode = #tpu.pipeline_mode<synchronous>, transform_indices = @transform_6, window_bounds = array<i64: 128, 128>}, {transform_indices = @transform_7, window_bounds = array<i64: 1, 16, 16, 8>}]} {
    %c0_i32 = arith.constant 0 : i32
    %0 = arith.cmpi eq, %arg0, %c0_i32 : i32
    %1 = arith.extui %0 : i1 to i32
    %c0_i32_0 = arith.constant 0 : i32
    %2 = arith.cmpi ne, %1, %c0_i32_0 : i32
    scf.if %2 {
      %cst_70 = arith.constant 0.000000e+00 : bf16
      %72 = vector.broadcast %cst_70 : bf16 to vector<16x16x128xbf16>
      %c0_71 = arith.constant 0 : index
      %c0_72 = arith.constant 0 : index
      %c0_73 = arith.constant 0 : index
      %73 = vector.load %arg9[%c0_71, %c0_72, %c0_73] : memref<16x16x128xbf16, #tpu.memory_space<vmem>>, vector<16x16x128xbf16>
      tpu.vector_store %arg9[%c0_71, %c0_72, %c0_73], %72 {strides = array<i32>} : memref<16x16x128xbf16, #tpu.memory_space<vmem>>, vector<16x16x128xbf16>,
      %cst_74 = arith.constant 0.000000e+00 : bf16
      %74 = vector.broadcast %cst_74 : bf16 to vector<16x16x128xbf16>
      %c0_75 = arith.constant 0 : index
      %c0_76 = arith.constant 0 : index
      %c0_77 = arith.constant 0 : index
      %75 = vector.load %arg10[%c0_75, %c0_76, %c0_77] : memref<16x16x128xbf16, #tpu.memory_space<vmem>>, vector<16x16x128xbf16>
      tpu.vector_store %arg10[%c0_75, %c0_76, %c0_77], %74 {strides = array<i32>} : memref<16x16x128xbf16, #tpu.memory_space<vmem>>, vector<16x16x128xbf16>,
    } else {
    }
    %c0 = arith.constant 0 : index
    %c0_1 = arith.constant 0 : index
    %c0_2 = arith.constant 0 : index
    %c0_3 = arith.constant 0 : index
    %3 = vector.load %arg1[%c0, %c0_1, %c0_2, %c0_3] : memref<1x16x16x4xf32, #tpu.memory_space<vmem>>, vector<1x16x16x4xf32>
    %4 = vector.shape_cast %3 : vector<1x16x16x4xf32> to vector<16x16x4xf32>
    %c0_4 = arith.constant 0 : index
    %c0_5 = arith.constant 0 : index
    %5 = vector.load %arg2[%c0_4, %c0_5] : memref<1x4xf32, #tpu.memory_space<vmem>>, vector<1x4xf32>
    %6 = vector.shape_cast %5 : vector<1x4xf32> to vector<1x1x4xf32>
    %c0_6 = arith.constant 0 : index
    %c0_7 = arith.constant 0 : index
    %7 = vector.load %arg3[%c0_6, %c0_7] : memref<1x4xf32, #tpu.memory_space<vmem>>, vector<1x4xf32>
    %8 = vector.shape_cast %7 : vector<1x4xf32> to vector<1x1x4xf32>
    %9 = vector.broadcast %6 : vector<1x1x4xf32> to vector<16x16x4xf32>
    %10 = arith.mulf %4, %9 : vector<16x16x4xf32>
    %11 = vector.broadcast %8 : vector<1x1x4xf32> to vector<16x16x4xf32>
    %12 = arith.addf %10, %11 : vector<16x16x4xf32>
    %cst = arith.constant 0.000000e+00 : f32
    %13 = vector.broadcast %cst : f32 to vector<16x16x4xf32>
    %14 = arith.maximumf %12, %13 : vector<16x16x4xf32>
    %15 = arith.truncf %14 : vector<16x16x4xf32> to vector<16x16x4xbf16>
    %16 = vector.extract_strided_slice %15 {offsets = [0, 0, 0], sizes = [15, 15, 4], strides = [1, 1, 1]} : vector<16x16x4xbf16> to vector<15x15x4xbf16>
    %c1 = arith.constant 1 : index
    %c1_8 = arith.constant 1 : index
    %c0_9 = arith.constant 0 : index
    %17 = vector.load %arg9[%c1, %c1_8, %c0_9] : memref<16x16x128xbf16, #tpu.memory_space<vmem>>, vector<15x15x4xbf16>
    tpu.vector_store %arg9[%c1, %c1_8, %c0_9], %16 {strides = array<i32>} : memref<16x16x128xbf16, #tpu.memory_space<vmem>>, vector<15x15x4xbf16>,
    %18 = vector.extract_strided_slice %15 {offsets = [0, 0, 0], sizes = [15, 16, 4], strides = [1, 1, 1]} : vector<16x16x4xbf16> to vector<15x16x4xbf16>
    %c1_10 = arith.constant 1 : index
    %c0_11 = arith.constant 0 : index
    %c4 = arith.constant 4 : index
    %19 = vector.load %arg9[%c1_10, %c0_11, %c4] : memref<16x16x128xbf16, #tpu.memory_space<vmem>>, vector<15x16x4xbf16>
    tpu.vector_store %arg9[%c1_10, %c0_11, %c4], %18 {strides = array<i32>} : memref<16x16x128xbf16, #tpu.memory_space<vmem>>, vector<15x16x4xbf16>,
    %20 = vector.extract_strided_slice %15 {offsets = [0, 1, 0], sizes = [15, 15, 4], strides = [1, 1, 1]} : vector<16x16x4xbf16> to vector<15x15x4xbf16>
    %c1_12 = arith.constant 1 : index
    %c0_13 = arith.constant 0 : index
    %c8 = arith.constant 8 : index
    %21 = vector.load %arg9[%c1_12, %c0_13, %c8] : memref<16x16x128xbf16, #tpu.memory_space<vmem>>, vector<15x15x4xbf16>
    tpu.vector_store %arg9[%c1_12, %c0_13, %c8], %20 {strides = array<i32>} : memref<16x16x128xbf16, #tpu.memory_space<vmem>>, vector<15x15x4xbf16>,
    %22 = vector.extract_strided_slice %15 {offsets = [0, 0, 0], sizes = [16, 15, 4], strides = [1, 1, 1]} : vector<16x16x4xbf16> to vector<16x15x4xbf16>
    %c0_14 = arith.constant 0 : index
    %c1_15 = arith.constant 1 : index
    %c12 = arith.constant 12 : index
    %23 = vector.load %arg9[%c0_14, %c1_15, %c12] : memref<16x16x128xbf16, #tpu.memory_space<vmem>>, vector<16x15x4xbf16>
    tpu.vector_store %arg9[%c0_14, %c1_15, %c12], %22 {strides = array<i32>} : memref<16x16x128xbf16, #tpu.memory_space<vmem>>, vector<16x15x4xbf16>,
    %c0_16 = arith.constant 0 : index
    %c0_17 = arith.constant 0 : index
    %c16 = arith.constant 16 : index
    %24 = vector.load %arg9[%c0_16, %c0_17, %c16] : memref<16x16x128xbf16, #tpu.memory_space<vmem>>, vector<16x16x4xbf16>
    tpu.vector_store %arg9[%c0_16, %c0_17, %c16], %15 {strides = array<i32>} : memref<16x16x128xbf16, #tpu.memory_space<vmem>>, vector<16x16x4xbf16>,
    %25 = vector.extract_strided_slice %15 {offsets = [0, 1, 0], sizes = [16, 15, 4], strides = [1, 1, 1]} : vector<16x16x4xbf16> to vector<16x15x4xbf16>
    %c0_18 = arith.constant 0 : index
    %c0_19 = arith.constant 0 : index
    %c20 = arith.constant 20 : index
    %26 = vector.load %arg9[%c0_18, %c0_19, %c20] : memref<16x16x128xbf16, #tpu.memory_space<vmem>>, vector<16x15x4xbf16>
    tpu.vector_store %arg9[%c0_18, %c0_19, %c20], %25 {strides = array<i32>} : memref<16x16x128xbf16, #tpu.memory_space<vmem>>, vector<16x15x4xbf16>,
    %27 = vector.extract_strided_slice %15 {offsets = [1, 0, 0], sizes = [15, 15, 4], strides = [1, 1, 1]} : vector<16x16x4xbf16> to vector<15x15x4xbf16>
    %c0_20 = arith.constant 0 : index
    %c1_21 = arith.constant 1 : index
    %c24 = arith.constant 24 : index
    %28 = vector.load %arg9[%c0_20, %c1_21, %c24] : memref<16x16x128xbf16, #tpu.memory_space<vmem>>, vector<15x15x4xbf16>
    tpu.vector_store %arg9[%c0_20, %c1_21, %c24], %27 {strides = array<i32>} : memref<16x16x128xbf16, #tpu.memory_space<vmem>>, vector<15x15x4xbf16>,
    %29 = vector.extract_strided_slice %15 {offsets = [1, 0, 0], sizes = [15, 16, 4], strides = [1, 1, 1]} : vector<16x16x4xbf16> to vector<15x16x4xbf16>
    %c0_22 = arith.constant 0 : index
    %c0_23 = arith.constant 0 : index
    %c28 = arith.constant 28 : index
    %30 = vector.load %arg9[%c0_22, %c0_23, %c28] : memref<16x16x128xbf16, #tpu.memory_space<vmem>>, vector<15x16x4xbf16>
    tpu.vector_store %arg9[%c0_22, %c0_23, %c28], %29 {strides = array<i32>} : memref<16x16x128xbf16, #tpu.memory_space<vmem>>, vector<15x16x4xbf16>,
    %31 = vector.extract_strided_slice %15 {offsets = [1, 1, 0], sizes = [15, 15, 4], strides = [1, 1, 1]} : vector<16x16x4xbf16> to vector<15x15x4xbf16>
    %c0_24 = arith.constant 0 : index
    %c0_25 = arith.constant 0 : index
    %c32 = arith.constant 32 : index
    %32 = vector.load %arg9[%c0_24, %c0_25, %c32] : memref<16x16x128xbf16, #tpu.memory_space<vmem>>, vector<15x15x4xbf16>
    tpu.vector_store %arg9[%c0_24, %c0_25, %c32], %31 {strides = array<i32>} : memref<16x16x128xbf16, #tpu.memory_space<vmem>>, vector<15x15x4xbf16>,
    %c0_26 = arith.constant 0 : index
    %c0_27 = arith.constant 0 : index
    %c0_28 = arith.constant 0 : index
    %33 = vector.load %arg9[%c0_26, %c0_27, %c0_28] : memref<16x16x128xbf16, #tpu.memory_space<vmem>>, vector<16x16x128xbf16>
    %34 = vector.shape_cast %33 : vector<16x16x128xbf16> to vector<256x128xbf16>
    %c0_29 = arith.constant 0 : index
    %c0_30 = arith.constant 0 : index
    %35 = vector.load %arg4[%c0_29, %c0_30] : memref<128x128xbf16, #tpu.memory_space<vmem>>, vector<128x128xbf16>
    %cst_31 = arith.constant dense<0.000000e+00> : vector<256x128xf32>
    %36 = tpu.matmul %34, %35, %cst_31 {dimension_numbers = #tpu.dot_dimension_numbers<[1], [0], [0], [1], [0, 0, 1, 1], [], []>} : vector<256x128xbf16>, vector<128x128xbf16>, vector<256x128xf32> -> vector<256x128xf32>
    %c0_32 = arith.constant 0 : index
    %c0_33 = arith.constant 0 : index
    %37 = vector.load %arg5[%c0_32, %c0_33] : memref<1x128xf32, #tpu.memory_space<vmem>>, vector<1x128xf32>
    %38 = vector.broadcast %37 : vector<1x128xf32> to vector<256x128xf32>
    %39 = arith.mulf %36, %38 : vector<256x128xf32>
    %c0_34 = arith.constant 0 : index
    %c0_35 = arith.constant 0 : index
    %40 = vector.load %arg6[%c0_34, %c0_35] : memref<1x128xf32, #tpu.memory_space<vmem>>, vector<1x128xf32>
    %41 = vector.broadcast %40 : vector<1x128xf32> to vector<256x128xf32>
    %42 = arith.addf %39, %41 : vector<256x128xf32>
    %cst_36 = arith.constant 0.000000e+00 : f32
    %43 = vector.broadcast %cst_36 : f32 to vector<256x128xf32>
    %44 = arith.maximumf %42, %43 : vector<256x128xf32>
    %45 = arith.truncf %44 : vector<256x128xf32> to vector<256x128xbf16>
    %46 = vector.shape_cast %45 : vector<256x128xbf16> to vector<16x16x128xbf16>
    %47 = vector.extract_strided_slice %46 {offsets = [0, 0, 0], sizes = [15, 15, 8], strides = [1, 1, 1]} : vector<16x16x128xbf16> to vector<15x15x8xbf16>
    %c1_37 = arith.constant 1 : index
    %c1_38 = arith.constant 1 : index
    %c0_39 = arith.constant 0 : index
    %48 = vector.load %arg10[%c1_37, %c1_38, %c0_39] : memref<16x16x128xbf16, #tpu.memory_space<vmem>>, vector<15x15x8xbf16>
    tpu.vector_store %arg10[%c1_37, %c1_38, %c0_39], %47 {strides = array<i32>} : memref<16x16x128xbf16, #tpu.memory_space<vmem>>, vector<15x15x8xbf16>,
    %49 = vector.extract_strided_slice %46 {offsets = [0, 0, 0], sizes = [15, 16, 8], strides = [1, 1, 1]} : vector<16x16x128xbf16> to vector<15x16x8xbf16>
    %c1_40 = arith.constant 1 : index
    %c0_41 = arith.constant 0 : index
    %c8_42 = arith.constant 8 : index
    %50 = vector.load %arg10[%c1_40, %c0_41, %c8_42] : memref<16x16x128xbf16, #tpu.memory_space<vmem>>, vector<15x16x8xbf16>
    tpu.vector_store %arg10[%c1_40, %c0_41, %c8_42], %49 {strides = array<i32>} : memref<16x16x128xbf16, #tpu.memory_space<vmem>>, vector<15x16x8xbf16>,
    %51 = vector.extract_strided_slice %46 {offsets = [0, 1, 0], sizes = [15, 15, 8], strides = [1, 1, 1]} : vector<16x16x128xbf16> to vector<15x15x8xbf16>
    %c1_43 = arith.constant 1 : index
    %c0_44 = arith.constant 0 : index
    %c16_45 = arith.constant 16 : index
    %52 = vector.load %arg10[%c1_43, %c0_44, %c16_45] : memref<16x16x128xbf16, #tpu.memory_space<vmem>>, vector<15x15x8xbf16>
    tpu.vector_store %arg10[%c1_43, %c0_44, %c16_45], %51 {strides = array<i32>} : memref<16x16x128xbf16, #tpu.memory_space<vmem>>, vector<15x15x8xbf16>,
    %53 = vector.extract_strided_slice %46 {offsets = [0, 0, 0], sizes = [16, 15, 8], strides = [1, 1, 1]} : vector<16x16x128xbf16> to vector<16x15x8xbf16>
    %c0_46 = arith.constant 0 : index
    %c1_47 = arith.constant 1 : index
    %c24_48 = arith.constant 24 : index
    %54 = vector.load %arg10[%c0_46, %c1_47, %c24_48] : memref<16x16x128xbf16, #tpu.memory_space<vmem>>, vector<16x15x8xbf16>
    tpu.vector_store %arg10[%c0_46, %c1_47, %c24_48], %53 {strides = array<i32>} : memref<16x16x128xbf16, #tpu.memory_space<vmem>>, vector<16x15x8xbf16>,
    %55 = vector.extract_strided_slice %46 {offsets = [0, 0, 0], sizes = [16, 16, 8], strides = [1, 1, 1]} : vector<16x16x128xbf16> to vector<16x16x8xbf16>
    %c0_49 = arith.constant 0 : index
    %c0_50 = arith.constant 0 : index
    %c32_51 = arith.constant 32 : index
    %56 = vector.load %arg10[%c0_49, %c0_50, %c32_51] : memref<16x16x128xbf16, #tpu.memory_space<vmem>>, vector<16x16x8xbf16>
    tpu.vector_store %arg10[%c0_49, %c0_50, %c32_51], %55 {strides = array<i32>} : memref<16x16x128xbf16, #tpu.memory_space<vmem>>, vector<16x16x8xbf16>,
    %57 = vector.extract_strided_slice %46 {offsets = [0, 1, 0], sizes = [16, 15, 8], strides = [1, 1, 1]} : vector<16x16x128xbf16> to vector<16x15x8xbf16>
    %c0_52 = arith.constant 0 : index
    %c0_53 = arith.constant 0 : index
    %c40 = arith.constant 40 : index
    %58 = vector.load %arg10[%c0_52, %c0_53, %c40] : memref<16x16x128xbf16, #tpu.memory_space<vmem>>, vector<16x15x8xbf16>
    tpu.vector_store %arg10[%c0_52, %c0_53, %c40], %57 {strides = array<i32>} : memref<16x16x128xbf16, #tpu.memory_space<vmem>>, vector<16x15x8xbf16>,
    %59 = vector.extract_strided_slice %46 {offsets = [1, 0, 0], sizes = [15, 15, 8], strides = [1, 1, 1]} : vector<16x16x128xbf16> to vector<15x15x8xbf16>
    %c0_54 = arith.constant 0 : index
    %c1_55 = arith.constant 1 : index
    %c48 = arith.constant 48 : index
    %60 = vector.load %arg10[%c0_54, %c1_55, %c48] : memref<16x16x128xbf16, #tpu.memory_space<vmem>>, vector<15x15x8xbf16>
    tpu.vector_store %arg10[%c0_54, %c1_55, %c48], %59 {strides = array<i32>} : memref<16x16x128xbf16, #tpu.memory_space<vmem>>, vector<15x15x8xbf16>,
    %61 = vector.extract_strided_slice %46 {offsets = [1, 0, 0], sizes = [15, 16, 8], strides = [1, 1, 1]} : vector<16x16x128xbf16> to vector<15x16x8xbf16>
    %c0_56 = arith.constant 0 : index
    %c0_57 = arith.constant 0 : index
    %c56 = arith.constant 56 : index
    %62 = vector.load %arg10[%c0_56, %c0_57, %c56] : memref<16x16x128xbf16, #tpu.memory_space<vmem>>, vector<15x16x8xbf16>
    tpu.vector_store %arg10[%c0_56, %c0_57, %c56], %61 {strides = array<i32>} : memref<16x16x128xbf16, #tpu.memory_space<vmem>>, vector<15x16x8xbf16>,
    %63 = vector.extract_strided_slice %46 {offsets = [1, 1, 0], sizes = [15, 15, 8], strides = [1, 1, 1]} : vector<16x16x128xbf16> to vector<15x15x8xbf16>
    %c0_58 = arith.constant 0 : index
    %c0_59 = arith.constant 0 : index
    %c64 = arith.constant 64 : index
    %64 = vector.load %arg10[%c0_58, %c0_59, %c64] : memref<16x16x128xbf16, #tpu.memory_space<vmem>>, vector<15x15x8xbf16>
    tpu.vector_store %arg10[%c0_58, %c0_59, %c64], %63 {strides = array<i32>} : memref<16x16x128xbf16, #tpu.memory_space<vmem>>, vector<15x15x8xbf16>,
    %c0_60 = arith.constant 0 : index
    %c0_61 = arith.constant 0 : index
    %c0_62 = arith.constant 0 : index
    %65 = vector.load %arg10[%c0_60, %c0_61, %c0_62] : memref<16x16x128xbf16, #tpu.memory_space<vmem>>, vector<16x16x128xbf16>
    %66 = vector.shape_cast %65 : vector<16x16x128xbf16> to vector<256x128xbf16>
    %c0_63 = arith.constant 0 : index
    %c0_64 = arith.constant 0 : index
    %67 = vector.load %arg7[%c0_63, %c0_64] : memref<128x128xbf16, #tpu.memory_space<vmem>>, vector<128x128xbf16>
    %cst_65 = arith.constant dense<0.000000e+00> : vector<256x128xf32>
    %68 = tpu.matmul %66, %67, %cst_65 {dimension_numbers = #tpu.dot_dimension_numbers<[1], [0], [0], [1], [0, 0, 1, 1], [], []>} : vector<256x128xbf16>, vector<128x128xbf16>, vector<256x128xf32> -> vector<256x128xf32>
    %69 = vector.extract_strided_slice %68 {offsets = [0, 0], sizes = [256, 8], strides = [1, 1]} : vector<256x128xf32> to vector<256x8xf32>
    %70 = vector.shape_cast %69 : vector<256x8xf32> to vector<1x16x16x8xf32>
    %c0_66 = arith.constant 0 : index
    %c0_67 = arith.constant 0 : index
    %c0_68 = arith.constant 0 : index
    %c0_69 = arith.constant 0 : index
    %71 = vector.load %arg8[%c0_66, %c0_67, %c0_68, %c0_69] : memref<1x16x16x8xf32, #tpu.memory_space<vmem>>, vector<1x16x16x8xf32>
    tpu.vector_store %arg8[%c0_66, %c0_67, %c0_68, %c0_69], %70 {strides = array<i32>} : memref<1x16x16x8xf32, #tpu.memory_space<vmem>>, vector<1x16x16x8xf32>,
    return
  }
  func.func @transform_0(%arg0: i32) -> (i32, i32, i32, i32) {
    %c0_i32 = arith.constant 0 : i32
    %c0_i32_0 = arith.constant 0 : i32
    %c0_i32_1 = arith.constant 0 : i32
    %c0_i32_2 = arith.constant 0 : i32
    return %arg0, %c0_i32, %c0_i32_0, %c0_i32_1 : i32, i32, i32, i32
  }
  func.func @transform_1(%arg0: i32) -> (i32, i32) {
    %c0_i32 = arith.constant 0 : i32
    %c0_i32_0 = arith.constant 0 : i32
    %c0_i32_1 = arith.constant 0 : i32
    return %c0_i32, %c0_i32_0 : i32, i32
  }
  func.func @transform_2(%arg0: i32) -> (i32, i32) {
    %c0_i32 = arith.constant 0 : i32
    %c0_i32_0 = arith.constant 0 : i32
    %c0_i32_1 = arith.constant 0 : i32
    return %c0_i32, %c0_i32_0 : i32, i32
  }
  func.func @transform_3(%arg0: i32) -> (i32, i32) {
    %c0_i32 = arith.constant 0 : i32
    %c0_i32_0 = arith.constant 0 : i32
    %c0_i32_1 = arith.constant 0 : i32
    return %c0_i32, %c0_i32_0 : i32, i32
  }
  func.func @transform_4(%arg0: i32) -> (i32, i32) {
    %c0_i32 = arith.constant 0 : i32
    %c0_i32_0 = arith.constant 0 : i32
    %c0_i32_1 = arith.constant 0 : i32
    return %c0_i32, %c0_i32_0 : i32, i32
  }
  func.func @transform_5(%arg0: i32) -> (i32, i32) {
    %c0_i32 = arith.constant 0 : i32
    %c0_i32_0 = arith.constant 0 : i32
    %c0_i32_1 = arith.constant 0 : i32
    return %c0_i32, %c0_i32_0 : i32, i32
  }
  func.func @transform_6(%arg0: i32) -> (i32, i32) {
    %c0_i32 = arith.constant 0 : i32
    %c0_i32_0 = arith.constant 0 : i32
    %c0_i32_1 = arith.constant 0 : i32
    return %c0_i32, %c0_i32_0 : i32, i32
  }
  func.func @transform_7(%arg0: i32) -> (i32, i32, i32, i32) {
    %c0_i32 = arith.constant 0 : i32
    %c0_i32_0 = arith.constant 0 : i32
    %c0_i32_1 = arith.constant 0 : i32
    %c0_i32_2 = arith.constant 0 : i32
    return %arg0, %c0_i32, %c0_i32_0, %c0_i32_1 : i32, i32, i32, i32
  }
}

</mosaic_0001>

<llo_original>
// kernel: forward.1
$region0: #{forward.1}
  #allocation0 [shape = 'u32[]', space=smem, size = 0x4, offset = 0x4, fixed_abs, tag = 'smem constant byte address 0x4 - core index']
  #allocation1 [shape = 'u32[144,128]{1,0:T(1,128)}', space=vmem, size = 0x12000, scoped, tag = 'internal scratch']
  #allocation2 [shape = 'bf16[16,16,128]{2,1,0:T(8,128)(2,1)}', space=vmem, size = 0x10000, scoped, tag = 'scratch operand']
  #allocation3 [shape = 'bf16[16,16,128]{2,1,0:T(8,128)(2,1)}', space=vmem, size = 0x10000, scoped, tag = 'scratch operand']
  %s0 = inlined_call_operand.vmem [shape: f32[2,16,16,4], index: 0, kind: input, shape index: {}]
  %s1 = inlined_call_operand.vmem [shape: f32[1,4], index: 1, kind: input, shape index: {}]
  %s2 = inlined_call_operand.vmem [shape: f32[1,4], index: 2, kind: input, shape index: {}]
  %s3 = inlined_call_operand.vmem [shape: bf16[128,128], index: 3, kind: input, shape index: {}]
  %s4 = inlined_call_operand.vmem [shape: f32[1,128], index: 4, kind: input, shape index: {}]
  %s5 = inlined_call_operand.vmem [shape: f32[1,128], index: 5, kind: input, shape index: {}]
  %s6 = inlined_call_operand.vmem [shape: bf16[128,128], index: 6, kind: input, shape index: {}]
  %s7 = inlined_call_operand.vmem [shape: f32[2,16,16,8], index: 7, kind: output, shape index: {}]
  %s8 = sld [smem:[#allocation0]]
  $region65: #{forward.1} parent=0
    _
  %s10 = ssub.s32 1, %s8
  %s11 = scalar_select 0, %s10, %s8
  loop: start=0, step=1, limit=4
  $region2: #{forward.1} parent=0 // loop_pre_header
    _
  $region3: #{forward.1} parent=0 // loop_header
    %s13 = sphi 0, %s17
    %p14 = scmp.ge.s32.totalorder %s13, 4
    %s23 = sphi 0, %s25
    %s26 = sphi 0, %s23
    %s27 = sphi 0, %s26
    %s43 = sphi 0, %s27
    %s47 = sphi 0, %s47
    %s49 = sphi 0, %s47
    %s50 = sphi 0, %s49
    %s64 = sphi 0, %s50
    %s68 = sphi 0, %s68
    %s70 = sphi 0, %s68
    %s71 = sphi 0, %s70
    %s85 = sphi 0, %s71
    %s89 = sphi 0, %s89
    %s91 = sphi 0, %s89
    %s92 = sphi 0, %s91
    %s106 = sphi 0, %s92
    %s110 = sphi 0, %s110
    %s112 = sphi 0, %s110
    %s113 = sphi 0, %s112
    %s127 = sphi 0, %s113
    %s131 = sphi 0, %s131
    %s133 = sphi 0, %s131
    %s134 = sphi 0, %s133
    %s148 = sphi 0, %s134
    %s152 = sphi 0, %s152
    %s154 = sphi 0, %s152
    %s155 = sphi 0, %s154
    %s169 = sphi 0, %s155
    %s175 = sphi 0, %s177
    %s178 = sphi 0, %s175
    %s179 = sphi 0, %s178
    %s195 = sphi 0, %s179
  $region4: #{forward.1} parent=0 // loop_header_branch
    %16 = sbr.rel (%p14) target = $region8
  $region5: #{forward.1} parent=0 // loop_body
    %s18 = ssub.s32 %s13, 1
    %s19 = ssub.s32 %s13, 2
    %s20 = sadd.s32 %s13, 1
    %s21 = ssub.s32 %s13, %s20
    %p22 = scmp.eq.s32.totalorder %s21, 0
    %s24 = sadd.s32 %s23, 1
    %s25 = scalar_select %p22, %s23, %s24
    %p28 = pneg %p22
    %p29 = scmp.eq.s32.totalorder %s13, 1
    %p30 = por %p28, %p29
    %p31 = scmp.ne.s32.totalorder %s23, %s26
    %p32 = scmp.eq.s32.totalorder %s13, 0
    %p33 = por %p31, %p32
    %p34 = scmp.ne.s32.totalorder %s23, %s26
    %p35 = scmp.eq.s32.totalorder %s18, 1
    %p36 = por %p34, %p35
    %p37 = scmp.ne.s32.totalorder %s26, %s27
    %p38 = scmp.eq.s32.totalorder %s18, 0
    %p39 = por %p37, %p38
    %p40 = scmp.ne.s32.totalorder %s26, %s27
    %p41 = scmp.eq.s32.totalorder %s19, 1
    %p42 = por %p40, %p41
    %p44 = scmp.ne.s32.totalorder %s27, %s43
    %p45 = scmp.eq.s32.totalorder %s19, 0
    %p46 = por %p44, %p45
    %s48 = sadd.s32 %s47, 1
    %p51 = scmp.eq.s32.totalorder %s13, 1
    %p52 = scmp.ne.s32.totalorder %s47, %s49
    %p53 = scmp.eq.s32.totalorder %s13, 0
    %p54 = por %p52, %p53
    %p55 = scmp.ne.s32.totalorder %s47, %s49
    %p56 = scmp.eq.s32.totalorder %s18, 1
    %p57 = por %p55, %p56
    %p58 = scmp.ne.s32.totalorder %s49, %s50
    %p59 = scmp.eq.s32.totalorder %s18, 0
    %p60 = por %p58, %p59
    %p61 = scmp.ne.s32.totalorder %s49, %s50
    %p62 = scmp.eq.s32.totalorder %s19, 1
    %p63 = por %p61, %p62
    %p65 = scmp.ne.s32.totalorder %s50, %s64
    %p66 = scmp.eq.s32.totalorder %s19, 0
    %p67 = por %p65, %p66
    %s69 = sadd.s32 %s68, 1
    %p72 = scmp.eq.s32.totalorder %s13, 1
    %p73 = scmp.ne.s32.totalorder %s68, %s70
    %p74 = scmp.eq.s32.totalorder %s13, 0
    %p75 = por %p73, %p74
    %p76 = scmp.ne.s32.totalorder %s68, %s70
    %p77 = scmp.eq.s32.totalorder %s18, 1
    %p78 = por %p76, %p77
    %p79 = scmp.ne.s32.totalorder %s70, %s71
    %p80 = scmp.eq.s32.totalorder %s18, 0
    %p81 = por %p79, %p80
    %p82 = scmp.ne.s32.totalorder %s70, %s71
    %p83 = scmp.eq.s32.totalorder %s19, 1
    %p84 = por %p82, %p83
    %p86 = scmp.ne.s32.totalorder %s71, %s85
    %p87 = scmp.eq.s32.totalorder %s19, 0
    %p88 = por %p86, %p87
    %s90 = sadd.s32 %s89, 1
    %p93 = scmp.eq.s32.totalorder %s13, 1
    %p94 = scmp.ne.s32.totalorder %s89, %s91
    %p95 = scmp.eq.s32.totalorder %s13, 0
    %p96 = por %p94, %p95
    %p97 = scmp.ne.s32.totalorder %s89, %s91
    %p98 = scmp.eq.s32.totalorder %s18, 1
    %p99 = por %p97, %p98
    %p100 = scmp.ne.s32.totalorder %s91, %s92
    %p101 = scmp.eq.s32.totalorder %s18, 0
    %p102 = por %p100, %p101
    %p103 = scmp.ne.s32.totalorder %s91, %s92
    %p104 = scmp.eq.s32.totalorder %s19, 1
    %p105 = por %p103, %p104
    %p107 = scmp.ne.s32.totalorder %s92, %s106
    %p108 = scmp.eq.s32.totalorder %s19, 0
    %p109 = por %p107, %p108
    %s111 = sadd.s32 %s110, 1
    %p114 = scmp.eq.s32.totalorder %s13, 1
    %p115 = scmp.ne.s32.totalorder %s110, %s112
    %p116 = scmp.eq.s32.totalorder %s13, 0
    %p117 = por %p115, %p116
    %p118 = scmp.ne.s32.totalorder %s110, %s112
    %p119 = scmp.eq.s32.totalorder %s18, 1
    %p120 = por %p118, %p119
    %p121 = scmp.ne.s32.totalorder %s112, %s113
    %p122 = scmp.eq.s32.totalorder %s18, 0
    %p123 = por %p121, %p122
    %p124 = scmp.ne.s32.totalorder %s112, %s113
    %p125 = scmp.eq.s32.totalorder %s19, 1
    %p126 = por %p124, %p125
    %p128 = scmp.ne.s32.totalorder %s113, %s127
    %p129 = scmp.eq.s32.totalorder %s19, 0
    %p130 = por %p128, %p129
    %s132 = sadd.s32 %s131, 1
    %p135 = scmp.eq.s32.totalorder %s13, 1
    %p136 = scmp.ne.s32.totalorder %s131, %s133
    %p137 = scmp.eq.s32.totalorder %s13, 0
    %p138 = por %p136, %p137
    %p139 = scmp.ne.s32.totalorder %s131, %s133
    %p140 = scmp.eq.s32.totalorder %s18, 1
    %p141 = por %p139, %p140
    %p142 = scmp.ne.s32.totalorder %s133, %s134
    %p143 = scmp.eq.s32.totalorder %s18, 0
    %p144 = por %p142, %p143
    %p145 = scmp.ne.s32.totalorder %s133, %s134
    %p146 = scmp.eq.s32.totalorder %s19, 1
    %p147 = por %p145, %p146
    %p149 = scmp.ne.s32.totalorder %s134, %s148
    %p150 = scmp.eq.s32.totalorder %s19, 0
    %p151 = por %p149, %p150
    %s153 = sadd.s32 %s152, 1
    %p156 = scmp.eq.s32.totalorder %s13, 1
    %p157 = scmp.ne.s32.totalorder %s152, %s154
    %p158 = scmp.eq.s32.totalorder %s13, 0
    %p159 = por %p157, %p158
    %p160 = scmp.ne.s32.totalorder %s152, %s154
    %p161 = scmp.eq.s32.totalorder %s18, 1
    %p162 = por %p160, %p161
    %p163 = scmp.ne.s32.totalorder %s154, %s155
    %p164 = scmp.eq.s32.totalorder %s18, 0
    %p165 = por %p163, %p164
    %p166 = scmp.ne.s32.totalorder %s154, %s155
    %p167 = scmp.eq.s32.totalorder %s19, 1
    %p168 = por %p166, %p167
    %p170 = scmp.ne.s32.totalorder %s155, %s169
    %p171 = scmp.eq.s32.totalorder %s19, 0
    %p172 = por %p170, %p171
    %s173 = ssub.s32 %s13, %s20
    %p174 = scmp.eq.s32.totalorder %s173, 0
    %s176 = sadd.s32 %s175, 1
    %s177 = scalar_select %p174, %s175, %s176
    %p180 = pneg %p174
    %p181 = scmp.eq.s32.totalorder %s13, 1
    %p182 = por %p180, %p181
    %p183 = scmp.ne.s32.totalorder %s175, %s178
    %p184 = scmp.eq.s32.totalorder %s13, 0
    %p185 = por %p183, %p184
    %p186 = scmp.ne.s32.totalorder %s175, %s178
    %p187 = scmp.eq.s32.totalorder %s18, 1
    %p188 = por %p186, %p187
    %p189 = scmp.ne.s32.totalorder %s178, %s179
    %p190 = scmp.eq.s32.totalorder %s18, 0
    %p191 = por %p189, %p190
    %p192 = scmp.ne.s32.totalorder %s178, %s179
    %p193 = scmp.eq.s32.totalorder %s19, 1
    %p194 = por %p192, %p193
    %p196 = scmp.ne.s32.totalorder %s179, %s195
    %p197 = scmp.eq.s32.totalorder %s19, 0
    %p198 = por %p196, %p197
    %p199 = scmp.le.s32.totalorder 1, %s13
    %p200 = scmp.lt.s32.totalorder %s13, 3
    %p201 = pnand %p199, %p200
    %p202 = pneg %p201
    // Predicated region
    $region9: #{forward.1} parent=5 // pred_check
      _
    $region10: #{forward.1} parent=5 // pred_check_branch
      %204 = sbr.rel (%p201) target = $region12
    $region11: #{forward.1} parent=5 // pred_region
      %s205 = ssub.s32 %s13, 1
      // Predicated region
      $region13: #{forward.1} parent=11 // pred_check
        %p206 = pneg %p60
      $region14: #{forward.1} parent=11 // pred_check_branch
        %208 = sbr.rel (%p206) target = $region16
      $region15: #{forward.1} parent=11 // pred_region
        _
      $region16: #{forward.1} parent=11 // pred_fallthru
        _
      // Predicated region
      $region17: #{forward.1} parent=11 // pred_check
        %p209 = pneg %p81
      $region18: #{forward.1} parent=11 // pred_check_branch
        %211 = sbr.rel (%p209) target = $region20
      $region19: #{forward.1} parent=11 // pred_region
        _
      $region20: #{forward.1} parent=11 // pred_fallthru
        _
      // Predicated region
      $region21: #{forward.1} parent=11 // pred_check
        %p212 = pneg %p102
      $region22: #{forward.1} parent=11 // pred_check_branch
        %214 = sbr.rel (%p212) target = $region24
      $region23: #{forward.1} parent=11 // pred_region
        _
      $region24: #{forward.1} parent=11 // pred_fallthru
        _
      // Predicated region
      $region25: #{forward.1} parent=11 // pred_check
        %p215 = pneg %p123
      $region26: #{forward.1} parent=11 // pred_check_branch
        %217 = sbr.rel (%p215) target = $region28
      $region27: #{forward.1} parent=11 // pred_region
        _
      $region28: #{forward.1} parent=11 // pred_fallthru
        _
      // Predicated region
      $region29: #{forward.1} parent=11 // pred_check
        %p218 = pneg %p144
      $region30: #{forward.1} parent=11 // pred_check_branch
        %220 = sbr.rel (%p218) target = $region32
      $region31: #{forward.1} parent=11 // pred_region
        _
      $region32: #{forward.1} parent=11 // pred_fallthru
        _
      // Predicated region
      $region33: #{forward.1} parent=11 // pred_check
        %p221 = pneg %p165
      $region34: #{forward.1} parent=11 // pred_check_branch
        %223 = sbr.rel (%p221) target = $region36
      $region35: #{forward.1} parent=11 // pred_region
        _
      $region36: #{forward.1} parent=11 // pred_fallthru
        _
    $region12: #{forward.1} parent=5 // pred_fallthru
      _
    %p224 = scmp.lt.s32.totalorder %s13, 2
    // Predicated region
    $region37: #{forward.1} parent=5 // pred_check
      %p225 = pneg %p224
    $region38: #{forward.1} parent=5 // pred_check_branch
      %227 = sbr.rel (%p225) target = $region40
    $region39: #{forward.1} parent=5 // pred_region
      // Predicated region
      $region41: #{forward.1} parent=39 // pred_check
        %p228 = pneg %p33
      $region42: #{forward.1} parent=39 // pred_check_branch
        %230 = sbr.rel (%p228) target = $region44
      $region43: #{forward.1} parent=39 // pred_region
        %p231 = scmp.lt.s32.totalorder %s13, 1
        %s232 = scalar_select %p231, %s13, 1
        %s233 = smul.addr %s232, 32
        %s234 = smul.addr %s233, 8
        %s235 = scalar_lea.vmem %s0, %s234
      $region44: #{forward.1} parent=39 // pred_fallthru
        _
    $region40: #{forward.1} parent=5 // pred_fallthru
      _
    %p236 = scmp.le.s32.totalorder 1, %s13
    %p237 = scmp.lt.s32.totalorder %s13, 3
    %p238 = pnand %p236, %p237
    %p239 = pneg %p238
    // Predicated region
    $region45: #{forward.1} parent=5 // pred_check
      _
    $region46: #{forward.1} parent=5 // pred_check_branch
      %241 = sbr.rel (%p238) target = $region48
    $region47: #{forward.1} parent=5 // pred_region
      %s242 = ssub.s32 %s13, 1
      %p243 = scmp.lt.s32.totalorder %s18, 1
      %s244 = scalar_select %p243, %s18, 1
      %s245 = smul.addr %s244, 32
      %s246 = smul.addr %s245, 8
      %s247 = scalar_lea.vmem %s0, %s246
      %p248 = pneg %p39
      %p249 = pneg %p36
      %p250 = pneg %p60
      %p251 = pneg %p57
      %p252 = pneg %p81
      %p253 = pneg %p78
      %p254 = pneg %p102
      %p255 = pneg %p99
      %p256 = pneg %p123
      %p257 = pneg %p120
      %p258 = pneg %p144
      %p259 = pneg %p141
      %p260 = pneg %p165
      %p261 = pneg %p162
      %p262 = pneg %p191
      %p263 = pneg %p188
      %p264 = scmp.lt.s32.totalorder %s18, 1
      %s265 = scalar_select %p264, %s18, 1
      %s266 = smul.addr %s265, 32
      %s267 = smul.addr %s266, 8
      %s268 = scalar_lea.vmem %s7, %s267
      %p269 = scmp.lt.s32.totalorder %s18, 1
      %s270 = scalar_select %p269, %s18, 1
      %s271 = smul.addr %s270, 32
      %s272 = smul.addr %s271, 8
      %s273 = scalar_lea.vmem %s0, %s272
      %p274 = scmp.lt.s32.totalorder %s18, 1
      %s275 = scalar_select %p274, %s18, 1
      %s276 = smul.addr %s275, 32
      %s277 = smul.addr %s276, 8
      %s278 = scalar_lea.vmem %s7, %s277
      %p280 = scmp.eq.s32.totalorder %s18, 0
      // Predicated region
      $region49: #{forward.1} parent=47 // pred_check
        %p281 = pneg %p280
      $region50: #{forward.1} parent=47 // pred_check_branch
        %283 = sbr.rel (%p281) target = $region52
      $region51: #{forward.1} parent=47 // pred_region
        %284 = vst [vmem:[#allocation2] sm:$0xf] 0
        %285 = vst [vmem:[#allocation2 + $0x4] sm:$0xf] 0
        %286 = vst [vmem:[#allocation2 + $0x8] sm:$0xf] 0
        %287 = vst [vmem:[#allocation2 + $0xc] sm:$0xf] 0
        %288 = vst [vmem:[#allocation2 + $0x10] sm:$0xf] 0
        %289 = vst [vmem:[#allocation2 + $0x14] sm:$0xf] 0
        %290 = vst [vmem:[#allocation2 + $0x18] sm:$0xf] 0
        %291 = vst [vmem:[#allocation2 + $0x1c] sm:$0xf] 0
        %292 = vst [vmem:[#allocation2 + $0x20] sm:$0xf] 0
        %293 = vst [vmem:[#allocation2 + $0x24] sm:$0xf] 0
        %294 = vst [vmem:[#allocation2 + $0x28] sm:$0xf] 0
        %295 = vst [vmem:[#allocation2 + $0x2c] sm:$0xf] 0
        %296 = vst [vmem:[#allocation2 + $0x30] sm:$0xf] 0
        %297 = vst [vmem:[#allocation2 + $0x34] sm:$0xf] 0
        %298 = vst [vmem:[#allocation2 + $0x38] sm:$0xf] 0
        %299 = vst [vmem:[#allocation2 + $0x3c] sm:$0xf] 0
        %300 = vst [vmem:[#allocation2 + $0x40] sm:$0xf] 0
        %301 = vst [vmem:[#allocation2 + $0x44] sm:$0xf] 0
        %302 = vst [vmem:[#allocation2 + $0x48] sm:$0xf] 0
        %303 = vst [vmem:[#allocation2 + $0x4c] sm:$0xf] 0
        %304 = vst [vmem:[#allocation2 + $0x50] sm:$0xf] 0
        %305 = vst [vmem:[#allocation2 + $0x54] sm:$0xf] 0
        %306 = vst [vmem:[#allocation2 + $0x58] sm:$0xf] 0
        %307 = vst [vmem:[#allocation2 + $0x5c] sm:$0xf] 0
        %308 = vst [vmem:[#allocation2 + $0x60] sm:$0xf] 0
        %309 = vst [vmem:[#allocation2 + $0x64] sm:$0xf] 0
        %310 = vst [vmem:[#allocation2 + $0x68] sm:$0xf] 0
        %311 = vst [vmem:[#allocation2 + $0x6c] sm:$0xf] 0
        %312 = vst [vmem:[#allocation2 + $0x70] sm:$0xf] 0
        %313 = vst [vmem:[#allocation2 + $0x74] sm:$0xf] 0
        %314 = vst [vmem:[#allocation2 + $0x78] sm:$0xf] 0
        %315 = vst [vmem:[#allocation2 + $0x7c] sm:$0xf] 0
        %316 = vst [vmem:[#allocation3] sm:$0xf] 0
        %317 = vst [vmem:[#allocation3 + $0x4] sm:$0xf] 0
        %318 = vst [vmem:[#allocation3 + $0x8] sm:$0xf] 0
        %319 = vst [vmem:[#allocation3 + $0xc] sm:$0xf] 0
        %320 = vst [vmem:[#allocation3 + $0x10] sm:$0xf] 0
        %321 = vst [vmem:[#allocation3 + $0x14] sm:$0xf] 0
        %322 = vst [vmem:[#allocation3 + $0x18] sm:$0xf] 0
        %323 = vst [vmem:[#allocation3 + $0x1c] sm:$0xf] 0
        %324 = vst [vmem:[#allocation3 + $0x20] sm:$0xf] 0
        %325 = vst [vmem:[#allocation3 + $0x24] sm:$0xf] 0
        %326 = vst [vmem:[#allocation3 + $0x28] sm:$0xf] 0
        %327 = vst [vmem:[#allocation3 + $0x2c] sm:$0xf] 0
        %328 = vst [vmem:[#allocation3 + $0x30] sm:$0xf] 0
        %329 = vst [vmem:[#allocation3 + $0x34] sm:$0xf] 0
        %330 = vst [vmem:[#allocation3 + $0x38] sm:$0xf] 0
        %331 = vst [vmem:[#allocation3 + $0x3c] sm:$0xf] 0
        %332 = vst [vmem:[#allocation3 + $0x40] sm:$0xf] 0
        %333 = vst [vmem:[#allocation3 + $0x44] sm:$0xf] 0
        %334 = vst [vmem:[#allocation3 + $0x48] sm:$0xf] 0
        %335 = vst [vmem:[#allocation3 + $0x4c] sm:$0xf] 0
        %336 = vst [vmem:[#allocation3 + $0x50] sm:$0xf] 0
        %337 = vst [vmem:[#allocation3 + $0x54] sm:$0xf] 0
        %338 = vst [vmem:[#allocation3 + $0x58] sm:$0xf] 0
        %339 = vst [vmem:[#allocation3 + $0x5c] sm:$0xf] 0
        %340 = vst [vmem:[#allocation3 + $0x60] sm:$0xf] 0
        %341 = vst [vmem:[#allocation3 + $0x64] sm:$0xf] 0
        %342 = vst [vmem:[#allocation3 + $0x68] sm:$0xf] 0
        %343 = vst [vmem:[#allocation3 + $0x6c] sm:$0xf] 0
        %344 = vst [vmem:[#allocation3 + $0x70] sm:$0xf] 0
        %345 = vst [vmem:[#allocation3 + $0x74] sm:$0xf] 0
        %346 = vst [vmem:[#allocation3 + $0x78] sm:$0xf] 0
        %347 = vst [vmem:[#allocation3 + $0x7c] sm:$0xf] 0
      $region52: #{forward.1} parent=47 // pred_fallthru
        _
      %v348 = vld [vmem:[%s273] sm:$0xff]
      %v349 = vld [vmem:[%s273 + $0x8] sm:$0xff]
      %v350 = vld [vmem:[%s273 + $0x10] sm:$0xff]
      %v351 = vld [vmem:[%s273 + $0x18] sm:$0xff]
      %v352 = vld [vmem:[%s273 + $0x20] sm:$0xff]
      %v353 = vld [vmem:[%s273 + $0x28] sm:$0xff]
      %v354 = vld [vmem:[%s273 + $0x30] sm:$0xff]
      %v355 = vld [vmem:[%s273 + $0x38] sm:$0xff]
      %v356 = vld [vmem:[%s273 + $0x40] sm:$0xff]
      %v357 = vld [vmem:[%s273 + $0x48] sm:$0xff]
      %v358 = vld [vmem:[%s273 + $0x50] sm:$0xff]
      %v359 = vld [vmem:[%s273 + $0x58] sm:$0xff]
      %v360 = vld [vmem:[%s273 + $0x60] sm:$0xff]
      %v361 = vld [vmem:[%s273 + $0x68] sm:$0xff]
      %v362 = vld [vmem:[%s273 + $0x70] sm:$0xff]
      %v363 = vld [vmem:[%s273 + $0x78] sm:$0xff]
      %v364 = vld [vmem:[%s273 + $0x80] sm:$0xff]
      %v365 = vld [vmem:[%s273 + $0x88] sm:$0xff]
      %v366 = vld [vmem:[%s273 + $0x90] sm:$0xff]
      %v367 = vld [vmem:[%s273 + $0x98] sm:$0xff]
      %v368 = vld [vmem:[%s273 + $0xa0] sm:$0xff]
      %v369 = vld [vmem:[%s273 + $0xa8] sm:$0xff]
      %v370 = vld [vmem:[%s273 + $0xb0] sm:$0xff]
      %v371 = vld [vmem:[%s273 + $0xb8] sm:$0xff]
      %v372 = vld [vmem:[%s273 + $0xc0] sm:$0xff]
      %v373 = vld [vmem:[%s273 + $0xc8] sm:$0xff]
      %v374 = vld [vmem:[%s273 + $0xd0] sm:$0xff]
      %v375 = vld [vmem:[%s273 + $0xd8] sm:$0xff]
      %v376 = vld [vmem:[%s273 + $0xe0] sm:$0xff]
      %v377 = vld [vmem:[%s273 + $0xe8] sm:$0xff]
      %v378 = vld [vmem:[%s273 + $0xf0] sm:$0xff]
      %v379 = vld [vmem:[%s273 + $0xf8] sm:$0xff]
      %v380 = vld [vmem:[%s1] sm:$0x1]
      %v381 = vld [vmem:[%s2] sm:$0x1]
      %v383 = vlaneseq
      %v384 = vshrl.u32 %v383, 7
      %v385 = vsub.s32 0, %v384
      %v386 = vrot.slane %v380, %v385
      %v388 = vmul.f32 %v348, %v386
      %v389 = vmul.f32 %v349, %v386
      %v390 = vmul.f32 %v350, %v386
      %v391 = vmul.f32 %v351, %v386
      %v392 = vmul.f32 %v352, %v386
      %v393 = vmul.f32 %v353, %v386
      %v394 = vmul.f32 %v354, %v386
      %v395 = vmul.f32 %v355, %v386
      %v396 = vmul.f32 %v356, %v386
      %v397 = vmul.f32 %v357, %v386
      %v398 = vmul.f32 %v358, %v386
      %v399 = vmul.f32 %v359, %v386
      %v400 = vmul.f32 %v360, %v386
      %v401 = vmul.f32 %v361, %v386
      %v402 = vmul.f32 %v362, %v386
      %v403 = vmul.f32 %v363, %v386
      %v404 = vmul.f32 %v364, %v386
      %v405 = vmul.f32 %v365, %v386
      %v406 = vmul.f32 %v366, %v386
      %v407 = vmul.f32 %v367, %v386
      %v408 = vmul.f32 %v368, %v386
      %v409 = vmul.f32 %v369, %v386
      %v410 = vmul.f32 %v370, %v386
      %v411 = vmul.f32 %v371, %v386
      %v412 = vmul.f32 %v372, %v386
      %v413 = vmul.f32 %v373, %v386
      %v414 = vmul.f32 %v374, %v386
      %v415 = vmul.f32 %v375, %v386
      %v416 = vmul.f32 %v376, %v386
      %v417 = vmul.f32 %v377, %v386
      %v418 = vmul.f32 %v378, %v386
      %v419 = vmul.f32 %v379, %v386
      %v421 = vlaneseq
      %v422 = vshrl.u32 %v421, 7
      %v423 = vsub.s32 0, %v422
      %v424 = vrot.slane %v381, %v423
      %v426 = vadd.f32 %v388, %v424
      %v427 = vadd.f32 %v389, %v424
      %v428 = vadd.f32 %v390, %v424
      %v429 = vadd.f32 %v391, %v424
      %v430 = vadd.f32 %v392, %v424
      %v431 = vadd.f32 %v393, %v424
      %v432 = vadd.f32 %v394, %v424
      %v433 = vadd.f32 %v395, %v424
      %v434 = vadd.f32 %v396, %v424
      %v435 = vadd.f32 %v397, %v424
      %v436 = vadd.f32 %v398, %v424
      %v437 = vadd.f32 %v399, %v424
      %v438 = vadd.f32 %v400, %v424
      %v439 = vadd.f32 %v401, %v424
      %v440 = vadd.f32 %v402, %v424
      %v441 = vadd.f32 %v403, %v424
      %v442 = vadd.f32 %v404, %v424
      %v443 = vadd.f32 %v405, %v424
      %v444 = vadd.f32 %v406, %v424
      %v445 = vadd.f32 %v407, %v424
      %v446 = vadd.f32 %v408, %v424
      %v447 = vadd.f32 %v409, %v424
      %v448 = vadd.f32 %v410, %v424
      %v449 = vadd.f32 %v411, %v424
      %v450 = vadd.f32 %v412, %v424
      %v451 = vadd.f32 %v413, %v424
      %v452 = vadd.f32 %v414, %v424
      %v453 = vadd.f32 %v415, %v424
      %v454 = vadd.f32 %v416, %v424
      %v455 = vadd.f32 %v417, %v424
      %v456 = vadd.f32 %v418, %v424
      %v457 = vadd.f32 %v419, %v424
      %v458 = vmax.f32 %v426, 0.0
      %v459 = vmax.f32 %v427, 0.0
      %v460 = vmax.f32 %v428, 0.0
      %v461 = vmax.f32 %v429, 0.0
      %v462 = vmax.f32 %v430, 0.0
      %v463 = vmax.f32 %v431, 0.0
      %v464 = vmax.f32 %v432, 0.0
      %v465 = vmax.f32 %v433, 0.0
      %v466 = vmax.f32 %v434, 0.0
      %v467 = vmax.f32 %v435, 0.0
      %v468 = vmax.f32 %v436, 0.0
      %v469 = vmax.f32 %v437, 0.0
      %v470 = vmax.f32 %v438, 0.0
      %v471 = vmax.f32 %v439, 0.0
      %v472 = vmax.f32 %v440, 0.0
      %v473 = vmax.f32 %v441, 0.0
      %v474 = vmax.f32 %v442, 0.0
      %v475 = vmax.f32 %v443, 0.0
      %v476 = vmax.f32 %v444, 0.0
      %v477 = vmax.f32 %v445, 0.0
      %v478 = vmax.f32 %v446, 0.0
      %v479 = vmax.f32 %v447, 0.0
      %v480 = vmax.f32 %v448, 0.0
      %v481 = vmax.f32 %v449, 0.0
      %v482 = vmax.f32 %v450, 0.0
      %v483 = vmax.f32 %v451, 0.0
      %v484 = vmax.f32 %v452, 0.0
      %v485 = vmax.f32 %v453, 0.0
      %v486 = vmax.f32 %v454, 0.0
      %v487 = vmax.f32 %v455, 0.0
      %v488 = vmax.f32 %v456, 0.0
      %v489 = vmax.f32 %v457, 0.0
      %v490 = vpack.c.bf16 %v459, %v458
      %v491 = vpack.c.bf16 %v461, %v460
      %v492 = vpack.c.bf16 %v463, %v462
      %v493 = vpack.c.bf16 %v465, %v464
      %v494 = vpack.c.bf16 %v467, %v466
      %v495 = vpack.c.bf16 %v469, %v468
      %v496 = vpack.c.bf16 %v471, %v470
      %v497 = vpack.c.bf16 %v473, %v472
      %v498 = vpack.c.bf16 %v475, %v474
      %v499 = vpack.c.bf16 %v477, %v476
      %v500 = vpack.c.bf16 %v479, %v478
      %v501 = vpack.c.bf16 %v481, %v480
      %v502 = vpack.c.bf16 %v483, %v482
      %v503 = vpack.c.bf16 %v485, %v484
      %v504 = vpack.c.bf16 %v487, %v486
      %v505 = vpack.c.bf16 %v489, %v488
      %v521 = vunpack.c.l.b16 %v490
      %v522 = vunpack.c.h.b16 %v490
      %v523 = vunpack.c.l.b16 %v491
      %v524 = vunpack.c.h.b16 %v491
      %v525 = vunpack.c.l.b16 %v492
      %v526 = vunpack.c.h.b16 %v492
      %v527 = vunpack.c.l.b16 %v493
      %v528 = vunpack.c.h.b16 %v493
      %v529 = vunpack.c.l.b16 %v494
      %v530 = vunpack.c.h.b16 %v494
      %v531 = vunpack.c.l.b16 %v495
      %v532 = vunpack.c.h.b16 %v495
      %v533 = vunpack.c.l.b16 %v496
      %v534 = vunpack.c.h.b16 %v496
      %v535 = vunpack.c.l.b16 %v497
      %v536 = vunpack.c.h.b16 %v497
      %v537 = vunpack.c.l.b16 %v498
      %v538 = vunpack.c.h.b16 %v498
      %v539 = vunpack.c.l.b16 %v499
      %v540 = vunpack.c.h.b16 %v499
      %v541 = vunpack.c.l.b16 %v500
      %v542 = vunpack.c.h.b16 %v500
      %v543 = vunpack.c.l.b16 %v501
      %v544 = vunpack.c.h.b16 %v501
      %v545 = vunpack.c.l.b16 %v502
      %v546 = vunpack.c.h.b16 %v502
      %v547 = vunpack.c.l.b16 %v503
      %v548 = vunpack.c.h.b16 %v503
      %v549 = vunpack.c.l.b16 %v504
      %v550 = vunpack.c.h.b16 %v504
      %v551 = vpack.c.b16 %v521, %v521
      %v552 = vpack.c.b16 %v522, %v522
      %v553 = vpack.c.b16 %v523, %v523
      %v554 = vpack.c.b16 %v524, %v524
      %v555 = vpack.c.b16 %v525, %v525
      %v556 = vpack.c.b16 %v526, %v526
      %v557 = vpack.c.b16 %v527, %v527
      %v558 = vpack.c.b16 %v528, %v528
      %v559 = vpack.c.b16 %v529, %v529
      %v560 = vpack.c.b16 %v530, %v530
      %v561 = vpack.c.b16 %v531, %v531
      %v562 = vpack.c.b16 %v532, %v532
      %v563 = vpack.c.b16 %v533, %v533
      %v564 = vpack.c.b16 %v534, %v534
      %v565 = vpack.c.b16 %v535, %v535
      %v566 = vpack.c.b16 %v536, %v536
      %v567 = vpack.c.b16 %v537, %v537
      %v568 = vpack.c.b16 %v538, %v538
      %v569 = vpack.c.b16 %v539, %v539
      %v570 = vpack.c.b16 %v540, %v540
      %v571 = vpack.c.b16 %v541, %v541
      %v572 = vpack.c.b16 %v542, %v542
      %v573 = vpack.c.b16 %v543, %v543
      %v574 = vpack.c.b16 %v544, %v544
      %v575 = vpack.c.b16 %v545, %v545
      %v576 = vpack.c.b16 %v546, %v546
      %v577 = vpack.c.b16 %v547, %v547
      %v578 = vpack.c.b16 %v548, %v548
      %v579 = vpack.c.b16 %v549, %v549
      %v580 = vpack.c.b16 %v550, %v550
      %vm581 = vsmask.f32 256
      %vm582 = vsmask.f32 4368
      %vm583 = vmor %vm581, %vm582
      %v585 = vshrl.u32 %v551, 16
      %v587 = vrot.slane %v585, 7
      %v588 = vshll.u32 %v551, 16
      %v590 = vor.u32 %v587, %v588
      %v591 = vrot.slane %v587, 4
      %v593 = vshrl.u32 %v552, 16
      %v595 = vrot.slane %v593, 7
      %v596 = vshll.u32 %v552, 16
      %v598 = vor.u32 %v595, %v596
      %v599 = vsel %vm583, %v591, %v598
      %v601 = vshrl.u32 %v553, 16
      %v603 = vrot.slane %v601, 7
      %v604 = vshll.u32 %v553, 16
      %v606 = vor.u32 %v603, %v604
      %v607 = vrot.slane %v603, 4
      %v609 = vshrl.u32 %v554, 16
      %v611 = vrot.slane %v609, 7
      %v612 = vshll.u32 %v554, 16
      %v614 = vor.u32 %v611, %v612
      %v615 = vsel %vm583, %v607, %v614
      %v617 = vshrl.u32 %v555, 16
      %v619 = vrot.slane %v617, 7
      %v620 = vshll.u32 %v555, 16
      %v622 = vor.u32 %v619, %v620
      %v623 = vrot.slane %v619, 4
      %v625 = vshrl.u32 %v556, 16
      %v627 = vrot.slane %v625, 7
      %v628 = vshll.u32 %v556, 16
      %v630 = vor.u32 %v627, %v628
      %v631 = vsel %vm583, %v623, %v630
      %v633 = vshrl.u32 %v557, 16
      %v635 = vrot.slane %v633, 7
      %v636 = vshll.u32 %v557, 16
      %v638 = vor.u32 %v635, %v636
      %v639 = vrot.slane %v635, 4
      %v641 = vshrl.u32 %v558, 16
      %v643 = vrot.slane %v641, 7
      %v644 = vshll.u32 %v558, 16
      %v646 = vor.u32 %v643, %v644
      %v647 = vsel %vm583, %v639, %v646
      %v649 = vshrl.u32 %v559, 16
      %v651 = vrot.slane %v649, 7
      %v652 = vshll.u32 %v559, 16
      %v654 = vor.u32 %v651, %v652
      %v655 = vrot.slane %v651, 4
      %v657 = vshrl.u32 %v560, 16
      %v659 = vrot.slane %v657, 7
      %v660 = vshll.u32 %v560, 16
      %v662 = vor.u32 %v659, %v660
      %v663 = vsel %vm583, %v655, %v662
      %v665 = vshrl.u32 %v561, 16
      %v667 = vrot.slane %v665, 7
      %v668 = vshll.u32 %v561, 16
      %v670 = vor.u32 %v667, %v668
      %v671 = vrot.slane %v667, 4
      %v673 = vshrl.u32 %v562, 16
      %v675 = vrot.slane %v673, 7
      %v676 = vshll.u32 %v562, 16
      %v678 = vor.u32 %v675, %v676
      %v679 = vsel %vm583, %v671, %v678
      %v681 = vshrl.u32 %v563, 16
      %v683 = vrot.slane %v681, 7
      %v684 = vshll.u32 %v563, 16
      %v686 = vor.u32 %v683, %v684
      %v687 = vrot.slane %v683, 4
      %v689 = vshrl.u32 %v564, 16
      %v691 = vrot.slane %v689, 7
      %v692 = vshll.u32 %v564, 16
      %v694 = vor.u32 %v691, %v692
      %v695 = vsel %vm583, %v687, %v694
      %v697 = vshrl.u32 %v565, 16
      %v699 = vrot.slane %v697, 7
      %v700 = vshll.u32 %v565, 16
      %v702 = vor.u32 %v699, %v700
      %v703 = vrot.slane %v699, 4
      %v705 = vshrl.u32 %v566, 16
      %v707 = vrot.slane %v705, 7
      %v708 = vshll.u32 %v566, 16
      %v710 = vor.u32 %v707, %v708
      %v711 = vsel %vm583, %v703, %v710
      %v713 = vshrl.u32 %v567, 16
      %v715 = vrot.slane %v713, 7
      %v716 = vshll.u32 %v567, 16
      %v718 = vor.u32 %v715, %v716
      %v719 = vrot.slane %v715, 4
      %v721 = vshrl.u32 %v568, 16
      %v723 = vrot.slane %v721, 7
      %v724 = vshll.u32 %v568, 16
      %v726 = vor.u32 %v723, %v724
      %v727 = vsel %vm583, %v719, %v726
      %v729 = vshrl.u32 %v569, 16
      %v731 = vrot.slane %v729, 7
      %v732 = vshll.u32 %v569, 16
      %v734 = vor.u32 %v731, %v732
      %v735 = vrot.slane %v731, 4
      %v737 = vshrl.u32 %v570, 16
      %v739 = vrot.slane %v737, 7
      %v740 = vshll.u32 %v570, 16
      %v742 = vor.u32 %v739, %v740
      %v743 = vsel %vm583, %v735, %v742
      %v745 = vshrl.u32 %v571, 16
      %v747 = vrot.slane %v745, 7
      %v748 = vshll.u32 %v571, 16
      %v750 = vor.u32 %v747, %v748
      %v751 = vrot.slane %v747, 4
      %v753 = vshrl.u32 %v572, 16
      %v755 = vrot.slane %v753, 7
      %v756 = vshll.u32 %v572, 16
      %v758 = vor.u32 %v755, %v756
      %v759 = vsel %vm583, %v751, %v758
      %v761 = vshrl.u32 %v573, 16
      %v763 = vrot.slane %v761, 7
      %v764 = vshll.u32 %v573, 16
      %v766 = vor.u32 %v763, %v764
      %v767 = vrot.slane %v763, 4
      %v769 = vshrl.u32 %v574, 16
      %v771 = vrot.slane %v769, 7
      %v772 = vshll.u32 %v574, 16
      %v774 = vor.u32 %v771, %v772
      %v775 = vsel %vm583, %v767, %v774
      %v777 = vshrl.u32 %v575, 16
      %v779 = vrot.slane %v777, 7
      %v780 = vshll.u32 %v575, 16
      %v782 = vor.u32 %v779, %v780
      %v783 = vrot.slane %v779, 4
      %v785 = vshrl.u32 %v576, 16
      %v787 = vrot.slane %v785, 7
      %v788 = vshll.u32 %v576, 16
      %v790 = vor.u32 %v787, %v788
      %v791 = vsel %vm583, %v783, %v790
      %v793 = vshrl.u32 %v577, 16
      %v795 = vrot.slane %v793, 7
      %v796 = vshll.u32 %v577, 16
      %v798 = vor.u32 %v795, %v796
      %v799 = vrot.slane %v795, 4
      %v801 = vshrl.u32 %v578, 16
      %v803 = vrot.slane %v801, 7
      %v804 = vshll.u32 %v578, 16
      %v806 = vor.u32 %v803, %v804
      %v807 = vsel %vm583, %v799, %v806
      %v809 = vshrl.u32 %v579, 16
      %v811 = vrot.slane %v809, 7
      %v812 = vshll.u32 %v579, 16
      %v814 = vor.u32 %v811, %v812
      %v815 = vrot.slane %v811, 4
      %v817 = vshrl.u32 %v580, 16
      %v819 = vrot.slane %v817, 7
      %v820 = vshll.u32 %v580, 16
      %v822 = vor.u32 %v819, %v820
      %v823 = vsel %vm583, %v815, %v822
      %s854 = scalar_lea.vmem [#allocation2], 8
      %vm855 = vcmask 27648
      %vm856 = vsmask.f32 7938
      %vm857 = vmand %vm855, %vm856
      %v858 = vld [vmem:[%s854] sm:$0xf]
      %v859 = vsel %vm857, %v590, %v858
      %860 = vst [vmem:[%s854] sm:$0xf] %v859
      %vm861 = vcmask 27648
      %862 = vst.msk [vmem:[%s854 + $0x4] sm:$0xf] %vm861, %v599
      %v863 = vld [vmem:[%s854 + $0x8] sm:$0xf]
      %v864 = vsel %vm857, %v606, %v863
      %865 = vst [vmem:[%s854 + $0x8] sm:$0xf] %v864
      %866 = vst.msk [vmem:[%s854 + $0xc] sm:$0xf] %vm861, %v615
      %v867 = vld [vmem:[%s854 + $0x10] sm:$0xf]
      %v868 = vsel %vm857, %v622, %v867
      %869 = vst [vmem:[%s854 + $0x10] sm:$0xf] %v868
      %870 = vst.msk [vmem:[%s854 + $0x14] sm:$0xf] %vm861, %v631
      %v871 = vld [vmem:[%s854 + $0x18] sm:$0xf]
      %v872 = vsel %vm857, %v638, %v871
      %873 = vst [vmem:[%s854 + $0x18] sm:$0xf] %v872
      %874 = vst.msk [vmem:[%s854 + $0x1c] sm:$0xf] %vm861, %v647
      %v875 = vld [vmem:[%s854 + $0x20] sm:$0xf]
      %v876 = vsel %vm857, %v654, %v875
      %877 = vst [vmem:[%s854 + $0x20] sm:$0xf] %v876
      %878 = vst.msk [vmem:[%s854 + $0x24] sm:$0xf] %vm861, %v663
      %v879 = vld [vmem:[%s854 + $0x28] sm:$0xf]
      %v880 = vsel %vm857, %v670, %v879
      %881 = vst [vmem:[%s854 + $0x28] sm:$0xf] %v880
      %882 = vst.msk [vmem:[%s854 + $0x2c] sm:$0xf] %vm861, %v679
      %v883 = vld [vmem:[%s854 + $0x30] sm:$0xf]
      %v884 = vsel %vm857, %v686, %v883
      %885 = vst [vmem:[%s854 + $0x30] sm:$0xf] %v884
      %886 = vst.msk [vmem:[%s854 + $0x34] sm:$0xf] %vm861, %v695
      %v887 = vld [vmem:[%s854 + $0x38] sm:$0xf]
      %v888 = vsel %vm857, %v702, %v887
      %889 = vst [vmem:[%s854 + $0x38] sm:$0xf] %v888
      %890 = vst.msk [vmem:[%s854 + $0x3c] sm:$0xf] %vm861, %v711
      %v891 = vld [vmem:[%s854 + $0x40] sm:$0xf]
      %v892 = vsel %vm857, %v718, %v891
      %893 = vst [vmem:[%s854 + $0x40] sm:$0xf] %v892
      %894 = vst.msk [vmem:[%s854 + $0x44] sm:$0xf] %vm861, %v727
      %v895 = vld [vmem:[%s854 + $0x48] sm:$0xf]
      %v896 = vsel %vm857, %v734, %v895
      %897 = vst [vmem:[%s854 + $0x48] sm:$0xf] %v896
      %898 = vst.msk [vmem:[%s854 + $0x4c] sm:$0xf] %vm861, %v743
      %v899 = vld [vmem:[%s854 + $0x50] sm:$0xf]
      %v900 = vsel %vm857, %v750, %v899
      %901 = vst [vmem:[%s854 + $0x50] sm:$0xf] %v900
      %902 = vst.msk [vmem:[%s854 + $0x54] sm:$0xf] %vm861, %v759
      %v903 = vld [vmem:[%s854 + $0x58] sm:$0xf]
      %v904 = vsel %vm857, %v766, %v903
      %905 = vst [vmem:[%s854 + $0x58] sm:$0xf] %v904
      %906 = vst.msk [vmem:[%s854 + $0x5c] sm:$0xf] %vm861, %v775
      %v907 = vld [vmem:[%s854 + $0x60] sm:$0xf]
      %v908 = vsel %vm857, %v782, %v907
      %909 = vst [vmem:[%s854 + $0x60] sm:$0xf] %v908
      %910 = vst.msk [vmem:[%s854 + $0x64] sm:$0xf] %vm861, %v791
      %v911 = vld [vmem:[%s854 + $0x68] sm:$0xf]
      %v912 = vsel %vm857, %v798, %v911
      %913 = vst [vmem:[%s854 + $0x68] sm:$0xf] %v912
      %914 = vst.msk [vmem:[%s854 + $0x6c] sm:$0xf] %vm861, %v807
      %v915 = vld [vmem:[%s854 + $0x70] sm:$0xf]
      %v916 = vsel %vm857, %v814, %v915
      %917 = vst [vmem:[%s854 + $0x70] sm:$0xf] %v916
      %918 = vst.msk [vmem:[%s854 + $0x74] sm:$0xf] %vm861, %v823
      %919 = vrot.lane.b32.xlu0 %v551, 4
      %v920 = vpop.permute.xlu0 %919
      %921 = vrot.lane.b32.xlu0 %v552, 4
      %v922 = vpop.permute.xlu0 %921
      %923 = vrot.lane.b32.xlu0 %v553, 4
      %v924 = vpop.permute.xlu0 %923
      %925 = vrot.lane.b32.xlu0 %v554, 4
      %v926 = vpop.permute.xlu0 %925
      %927 = vrot.lane.b32.xlu0 %v555, 4
      %v928 = vpop.permute.xlu0 %927
      %929 = vrot.lane.b32.xlu0 %v556, 4
      %v930 = vpop.permute.xlu0 %929
      %931 = vrot.lane.b32.xlu0 %v557, 4
      %v932 = vpop.permute.xlu0 %931
      %933 = vrot.lane.b32.xlu0 %v558, 4
      %v934 = vpop.permute.xlu0 %933
      %935 = vrot.lane.b32.xlu0 %v559, 4
      %v936 = vpop.permute.xlu0 %935
      %937 = vrot.lane.b32.xlu0 %v560, 4
      %v938 = vpop.permute.xlu0 %937
      %939 = vrot.lane.b32.xlu0 %v561, 4
      %v940 = vpop.permute.xlu0 %939
      %941 = vrot.lane.b32.xlu0 %v562, 4
      %v942 = vpop.permute.xlu0 %941
      %943 = vrot.lane.b32.xlu0 %v563, 4
      %v944 = vpop.permute.xlu0 %943
      %945 = vrot.lane.b32.xlu0 %v564, 4
      %v946 = vpop.permute.xlu0 %945
      %947 = vrot.lane.b32.xlu0 %v565, 4
      %v948 = vpop.permute.xlu0 %947
      %949 = vrot.lane.b32.xlu0 %v566, 4
      %v950 = vpop.permute.xlu0 %949
      %951 = vrot.lane.b32.xlu0 %v567, 4
      %v952 = vpop.permute.xlu0 %951
      %953 = vrot.lane.b32.xlu0 %v568, 4
      %v954 = vpop.permute.xlu0 %953
      %955 = vrot.lane.b32.xlu0 %v569, 4
      %v956 = vpop.permute.xlu0 %955
      %957 = vrot.lane.b32.xlu0 %v570, 4
      %v958 = vpop.permute.xlu0 %957
      %959 = vrot.lane.b32.xlu0 %v571, 4
      %v960 = vpop.permute.xlu0 %959
      %961 = vrot.lane.b32.xlu0 %v572, 4
      %v962 = vpop.permute.xlu0 %961
      %963 = vrot.lane.b32.xlu0 %v573, 4
      %v964 = vpop.permute.xlu0 %963
      %965 = vrot.lane.b32.xlu0 %v574, 4
      %v966 = vpop.permute.xlu0 %965
      %967 = vrot.lane.b32.xlu0 %v575, 4
      %v968 = vpop.permute.xlu0 %967
      %969 = vrot.lane.b32.xlu0 %v576, 4
      %v970 = vpop.permute.xlu0 %969
      %971 = vrot.lane.b32.xlu0 %v577, 4
      %v972 = vpop.permute.xlu0 %971
      %973 = vrot.lane.b32.xlu0 %v578, 4
      %v974 = vpop.permute.xlu0 %973
      %975 = vrot.lane.b32.xlu0 %v579, 4
      %v976 = vpop.permute.xlu0 %975
      %977 = vrot.lane.b32.xlu0 %v580, 4
      %v978 = vpop.permute.xlu0 %977
      %vm1009 = vcmask 60448
      %1010 = vst.msk [vmem:[%s854] sm:$0xf] %vm1009, %v920
      %1011 = vst.msk [vmem:[%s854 + $0x4] sm:$0xf] %vm1009, %v922
      %1012 = vst.msk [vmem:[%s854 + $0x8] sm:$0xf] %vm1009, %v924
      %1013 = vst.msk [vmem:[%s854 + $0xc] sm:$0xf] %vm1009, %v926
      %1014 = vst.msk [vmem:[%s854 + $0x10] sm:$0xf] %vm1009, %v928
      %1015 = vst.msk [vmem:[%s854 + $0x14] sm:$0xf] %vm1009, %v930
      %1016 = vst.msk [vmem:[%s854 + $0x18] sm:$0xf] %vm1009, %v932
      %1017 = vst.msk [vmem:[%s854 + $0x1c] sm:$0xf] %vm1009, %v934
      %1018 = vst.msk [vmem:[%s854 + $0x20] sm:$0xf] %vm1009, %v936
      %1019 = vst.msk [vmem:[%s854 + $0x24] sm:$0xf] %vm1009, %v938
      %1020 = vst.msk [vmem:[%s854 + $0x28] sm:$0xf] %vm1009, %v940
      %1021 = vst.msk [vmem:[%s854 + $0x2c] sm:$0xf] %vm1009, %v942
      %1022 = vst.msk [vmem:[%s854 + $0x30] sm:$0xf] %vm1009, %v944
      %1023 = vst.msk [vmem:[%s854 + $0x34] sm:$0xf] %vm1009, %v946
      %1024 = vst.msk [vmem:[%s854 + $0x38] sm:$0xf] %vm1009, %v948
      %1025 = vst.msk [vmem:[%s854 + $0x3c] sm:$0xf] %vm1009, %v950
      %1026 = vst.msk [vmem:[%s854 + $0x40] sm:$0xf] %vm1009, %v952
      %1027 = vst.msk [vmem:[%s854 + $0x44] sm:$0xf] %vm1009, %v954
      %1028 = vst.msk [vmem:[%s854 + $0x48] sm:$0xf] %vm1009, %v956
      %1029 = vst.msk [vmem:[%s854 + $0x4c] sm:$0xf] %vm1009, %v958
      %1030 = vst.msk [vmem:[%s854 + $0x50] sm:$0xf] %vm1009, %v960
      %1031 = vst.msk [vmem:[%s854 + $0x54] sm:$0xf] %vm1009, %v962
      %1032 = vst.msk [vmem:[%s854 + $0x58] sm:$0xf] %vm1009, %v964
      %1033 = vst.msk [vmem:[%s854 + $0x5c] sm:$0xf] %vm1009, %v966
      %1034 = vst.msk [vmem:[%s854 + $0x60] sm:$0xf] %vm1009, %v968
      %1035 = vst.msk [vmem:[%s854 + $0x64] sm:$0xf] %vm1009, %v970
      %1036 = vst.msk [vmem:[%s854 + $0x68] sm:$0xf] %vm1009, %v972
      %1037 = vst.msk [vmem:[%s854 + $0x6c] sm:$0xf] %vm1009, %v974
      %1038 = vst.msk [vmem:[%s854 + $0x70] sm:$0xf] %vm1009, %v976
      %1039 = vst.msk [vmem:[%s854 + $0x74] sm:$0xf] %vm1009, %v978
      %vm1040 = vsmask.f32 3328
      %vm1041 = vsmask.f32 7440
      %vm1042 = vmor %vm1040, %vm1041
      %v1043 = vrot.slane %v585, 4
      %v1044 = vrot.slane %v588, 5
      %v1045 = vor.u32 %v1043, %v1044
      %v1046 = vrot.slane %v1045, 4
      %v1047 = vrot.slane %v596, 5
      %v1048 = vsel %vm1042, %v1046, %v1047
      %v1049 = vrot.slane %v593, 4
      %v1050 = vor.u32 %v1049, %v1047
      %v1051 = vrot.slane %v1050, 4
      %v1052 = vrot.slane %v601, 4
      %v1053 = vrot.slane %v604, 5
      %v1054 = vor.u32 %v1052, %v1053
      %v1055 = vrot.slane %v1054, 4
      %v1056 = vrot.slane %v612, 5
      %v1057 = vsel %vm1042, %v1055, %v1056
      %v1058 = vrot.slane %v609, 4
      %v1059 = vor.u32 %v1058, %v1056
      %v1060 = vrot.slane %v1059, 4
      %v1061 = vrot.slane %v617, 4
      %v1062 = vrot.slane %v620, 5
      %v1063 = vor.u32 %v1061, %v1062
      %v1064 = vrot.slane %v1063, 4
      %v1065 = vrot.slane %v628, 5
      %v1066 = vsel %vm1042, %v1064, %v1065
      %v1067 = vrot.slane %v625, 4
      %v1068 = vor.u32 %v1067, %v1065
      %v1069 = vrot.slane %v1068, 4
      %v1070 = vrot.slane %v633, 4
      %v1071 = vrot.slane %v636, 5
      %v1072 = vor.u32 %v1070, %v1071
      %v1073 = vrot.slane %v1072, 4
      %v1074 = vrot.slane %v644, 5
      %v1075 = vsel %vm1042, %v1073, %v1074
      %v1076 = vrot.slane %v641, 4
      %v1077 = vor.u32 %v1076, %v1074
      %v1078 = vrot.slane %v1077, 4
      %v1079 = vrot.slane %v649, 4
      %v1080 = vrot.slane %v652, 5
      %v1081 = vor.u32 %v1079, %v1080
      %v1082 = vrot.slane %v1081, 4
      %v1083 = vrot.slane %v660, 5
      %v1084 = vsel %vm1042, %v1082, %v1083
      %v1085 = vrot.slane %v657, 4
      %v1086 = vor.u32 %v1085, %v1083
      %v1087 = vrot.slane %v1086, 4
      %v1088 = vrot.slane %v665, 4
      %v1089 = vrot.slane %v668, 5
      %v1090 = vor.u32 %v1088, %v1089
      %v1091 = vrot.slane %v1090, 4
      %v1092 = vrot.slane %v676, 5
      %v1093 = vsel %vm1042, %v1091, %v1092
      %v1094 = vrot.slane %v673, 4
      %v1095 = vor.u32 %v1094, %v1092
      %v1096 = vrot.slane %v1095, 4
      %v1097 = vrot.slane %v681, 4
      %v1098 = vrot.slane %v684, 5
      %v1099 = vor.u32 %v1097, %v1098
      %v1100 = vrot.slane %v1099, 4
      %v1101 = vrot.slane %v692, 5
      %v1102 = vsel %vm1042, %v1100, %v1101
      %v1103 = vrot.slane %v689, 4
      %v1104 = vor.u32 %v1103, %v1101
      %v1105 = vrot.slane %v1104, 4
      %v1106 = vrot.slane %v697, 4
      %v1107 = vrot.slane %v700, 5
      %v1108 = vor.u32 %v1106, %v1107
      %v1109 = vrot.slane %v1108, 4
      %v1110 = vrot.slane %v708, 5
      %v1111 = vsel %vm1042, %v1109, %v1110
      %v1112 = vrot.slane %v705, 4
      %v1113 = vor.u32 %v1112, %v1110
      %v1114 = vrot.slane %v1113, 4
      %v1115 = vrot.slane %v713, 4
      %v1116 = vrot.slane %v716, 5
      %v1117 = vor.u32 %v1115, %v1116
      %v1118 = vrot.slane %v1117, 4
      %v1119 = vrot.slane %v724, 5
      %v1120 = vsel %vm1042, %v1118, %v1119
      %v1121 = vrot.slane %v721, 4
      %v1122 = vor.u32 %v1121, %v1119
      %v1123 = vrot.slane %v1122, 4
      %v1124 = vrot.slane %v729, 4
      %v1125 = vrot.slane %v732, 5
      %v1126 = vor.u32 %v1124, %v1125
      %v1127 = vrot.slane %v1126, 4
      %v1128 = vrot.slane %v740, 5
      %v1129 = vsel %vm1042, %v1127, %v1128
      %v1130 = vrot.slane %v737, 4
      %v1131 = vor.u32 %v1130, %v1128
      %v1132 = vrot.slane %v1131, 4
      %v1133 = vrot.slane %v745, 4
      %v1134 = vrot.slane %v748, 5
      %v1135 = vor.u32 %v1133, %v1134
      %v1136 = vrot.slane %v1135, 4
      %v1137 = vrot.slane %v756, 5
      %v1138 = vsel %vm1042, %v1136, %v1137
      %v1139 = vrot.slane %v753, 4
      %v1140 = vor.u32 %v1139, %v1137
      %v1141 = vrot.slane %v1140, 4
      %v1142 = vrot.slane %v761, 4
      %v1143 = vrot.slane %v764, 5
      %v1144 = vor.u32 %v1142, %v1143
      %v1145 = vrot.slane %v1144, 4
      %v1146 = vrot.slane %v772, 5
      %v1147 = vsel %vm1042, %v1145, %v1146
      %v1148 = vrot.slane %v769, 4
      %v1149 = vor.u32 %v1148, %v1146
      %v1150 = vrot.slane %v1149, 4
      %v1151 = vrot.slane %v777, 4
      %v1152 = vrot.slane %v780, 5
      %v1153 = vor.u32 %v1151, %v1152
      %v1154 = vrot.slane %v1153, 4
      %v1155 = vrot.slane %v788, 5
      %v1156 = vsel %vm1042, %v1154, %v1155
      %v1157 = vrot.slane %v785, 4
      %v1158 = vor.u32 %v1157, %v1155
      %v1159 = vrot.slane %v1158, 4
      %v1160 = vrot.slane %v793, 4
      %v1161 = vrot.slane %v796, 5
      %v1162 = vor.u32 %v1160, %v1161
      %v1163 = vrot.slane %v1162, 4
      %v1164 = vrot.slane %v804, 5
      %v1165 = vsel %vm1042, %v1163, %v1164
      %v1166 = vrot.slane %v801, 4
      %v1167 = vor.u32 %v1166, %v1164
      %v1168 = vrot.slane %v1167, 4
      %v1169 = vrot.slane %v809, 4
      %v1170 = vrot.slane %v812, 5
      %v1171 = vor.u32 %v1169, %v1170
      %v1172 = vrot.slane %v1171, 4
      %v1173 = vrot.slane %v820, 5
      %v1174 = vsel %vm1042, %v1172, %v1173
      %v1175 = vrot.slane %v817, 4
      %v1176 = vor.u32 %v1175, %v1173
      %v1177 = vrot.slane %v1176, 4
      %1178 = vrot.lane.b32.xlu0 %v1048, 8
      %v1179 = vpop.permute.xlu0 %1178
      %1180 = vrot.lane.b32.xlu0 %v1051, 8
      %v1181 = vpop.permute.xlu0 %1180
      %1182 = vrot.lane.b32.xlu0 %v1057, 8
      %v1183 = vpop.permute.xlu0 %1182
      %1184 = vrot.lane.b32.xlu0 %v1060, 8
      %v1185 = vpop.permute.xlu0 %1184
      %1186 = vrot.lane.b32.xlu0 %v1066, 8
      %v1187 = vpop.permute.xlu0 %1186
      %1188 = vrot.lane.b32.xlu0 %v1069, 8
      %v1189 = vpop.permute.xlu0 %1188
      %1190 = vrot.lane.b32.xlu0 %v1075, 8
      %v1191 = vpop.permute.xlu0 %1190
      %1192 = vrot.lane.b32.xlu0 %v1078, 8
      %v1193 = vpop.permute.xlu0 %1192
      %1194 = vrot.lane.b32.xlu0 %v1084, 8
      %v1195 = vpop.permute.xlu0 %1194
      %1196 = vrot.lane.b32.xlu0 %v1087, 8
      %v1197 = vpop.permute.xlu0 %1196
      %1198 = vrot.lane.b32.xlu0 %v1093, 8
      %v1199 = vpop.permute.xlu0 %1198
      %1200 = vrot.lane.b32.xlu0 %v1096, 8
      %v1201 = vpop.permute.xlu0 %1200
      %1202 = vrot.lane.b32.xlu0 %v1102, 8
      %v1203 = vpop.permute.xlu0 %1202
      %1204 = vrot.lane.b32.xlu0 %v1105, 8
      %v1205 = vpop.permute.xlu0 %1204
      %1206 = vrot.lane.b32.xlu0 %v1111, 8
      %v1207 = vpop.permute.xlu0 %1206
      %1208 = vrot.lane.b32.xlu0 %v1114, 8
      %v1209 = vpop.permute.xlu0 %1208
      %1210 = vrot.lane.b32.xlu0 %v1120, 8
      %v1211 = vpop.permute.xlu0 %1210
      %1212 = vrot.lane.b32.xlu0 %v1123, 8
      %v1213 = vpop.permute.xlu0 %1212
      %1214 = vrot.lane.b32.xlu0 %v1129, 8
      %v1215 = vpop.permute.xlu0 %1214
      %1216 = vrot.lane.b32.xlu0 %v1132, 8
      %v1217 = vpop.permute.xlu0 %1216
      %1218 = vrot.lane.b32.xlu0 %v1138, 8
      %v1219 = vpop.permute.xlu0 %1218
      %1220 = vrot.lane.b32.xlu0 %v1141, 8
      %v1221 = vpop.permute.xlu0 %1220
      %1222 = vrot.lane.b32.xlu0 %v1147, 8
      %v1223 = vpop.permute.xlu0 %1222
      %1224 = vrot.lane.b32.xlu0 %v1150, 8
      %v1225 = vpop.permute.xlu0 %1224
      %1226 = vrot.lane.b32.xlu0 %v1156, 8
      %v1227 = vpop.permute.xlu0 %1226
      %1228 = vrot.lane.b32.xlu0 %v1159, 8
      %v1229 = vpop.permute.xlu0 %1228
      %1230 = vrot.lane.b32.xlu0 %v1165, 8
      %v1231 = vpop.permute.xlu0 %1230
      %1232 = vrot.lane.b32.xlu0 %v1168, 8
      %v1233 = vpop.permute.xlu0 %1232
      %1234 = vrot.lane.b32.xlu0 %v1174, 8
      %v1235 = vpop.permute.xlu0 %1234
      %1236 = vrot.lane.b32.xlu0 %v1177, 8
      %v1237 = vpop.permute.xlu0 %1236
      %vm1268 = vcmask 93248
      %1269 = vst.msk [vmem:[%s854] sm:$0xf] %vm1268, %v1179
      %vm1270 = vcmask 93248
      %vm1271 = vmand %vm1270, %vm1040
      %v1272 = vld [vmem:[%s854 + $0x4] sm:$0xf]
      %v1273 = vsel %vm1271, %v1181, %v1272
      %1274 = vst [vmem:[%s854 + $0x4] sm:$0xf] %v1273
      %1275 = vst.msk [vmem:[%s854 + $0x8] sm:$0xf] %vm1268, %v1183
      %v1276 = vld [vmem:[%s854 + $0xc] sm:$0xf]
      %v1277 = vsel %vm1271, %v1185, %v1276
      %1278 = vst [vmem:[%s854 + $0xc] sm:$0xf] %v1277
      %1279 = vst.msk [vmem:[%s854 + $0x10] sm:$0xf] %vm1268, %v1187
      %v1280 = vld [vmem:[%s854 + $0x14] sm:$0xf]
      %v1281 = vsel %vm1271, %v1189, %v1280
      %1282 = vst [vmem:[%s854 + $0x14] sm:$0xf] %v1281
      %1283 = vst.msk [vmem:[%s854 + $0x18] sm:$0xf] %vm1268, %v1191
      %v1284 = vld [vmem:[%s854 + $0x1c] sm:$0xf]
      %v1285 = vsel %vm1271, %v1193, %v1284
      %1286 = vst [vmem:[%s854 + $0x1c] sm:$0xf] %v1285
      %1287 = vst.msk [vmem:[%s854 + $0x20] sm:$0xf] %vm1268, %v1195
      %v1288 = vld [vmem:[%s854 + $0x24] sm:$0xf]
      %v1289 = vsel %vm1271, %v1197, %v1288
      %1290 = vst [vmem:[%s854 + $0x24] sm:$0xf] %v1289
      %1291 = vst.msk [vmem:[%s854 + $0x28] sm:$0xf] %vm1268, %v1199
      %v1292 = vld [vmem:[%s854 + $0x2c] sm:$0xf]
      %v1293 = vsel %vm1271, %v1201, %v1292
      %1294 = vst [vmem:[%s854 + $0x2c] sm:$0xf] %v1293
      %1295 = vst.msk [vmem:[%s854 + $0x30] sm:$0xf] %vm1268, %v1203
      %v1296 = vld [vmem:[%s854 + $0x34] sm:$0xf]
      %v1297 = vsel %vm1271, %v1205, %v1296
      %1298 = vst [vmem:[%s854 + $0x34] sm:$0xf] %v1297
      %1299 = vst.msk [vmem:[%s854 + $0x38] sm:$0xf] %vm1268, %v1207
      %v1300 = vld [vmem:[%s854 + $0x3c] sm:$0xf]
      %v1301 = vsel %vm1271, %v1209, %v1300
      %1302 = vst [vmem:[%s854 + $0x3c] sm:$0xf] %v1301
      %1303 = vst.msk [vmem:[%s854 + $0x40] sm:$0xf] %vm1268, %v1211
      %v1304 = vld [vmem:[%s854 + $0x44] sm:$0xf]
      %v1305 = vsel %vm1271, %v1213, %v1304
      %1306 = vst [vmem:[%s854 + $0x44] sm:$0xf] %v1305
      %1307 = vst.msk [vmem:[%s854 + $0x48] sm:$0xf] %vm1268, %v1215
      %v1308 = vld [vmem:[%s854 + $0x4c] sm:$0xf]
      %v1309 = vsel %vm1271, %v1217, %v1308
      %1310 = vst [vmem:[%s854 + $0x4c] sm:$0xf] %v1309
      %1311 = vst.msk [vmem:[%s854 + $0x50] sm:$0xf] %vm1268, %v1219
      %v1312 = vld [vmem:[%s854 + $0x54] sm:$0xf]
      %v1313 = vsel %vm1271, %v1221, %v1312
      %1314 = vst [vmem:[%s854 + $0x54] sm:$0xf] %v1313
      %1315 = vst.msk [vmem:[%s854 + $0x58] sm:$0xf] %vm1268, %v1223
      %v1316 = vld [vmem:[%s854 + $0x5c] sm:$0xf]
      %v1317 = vsel %vm1271, %v1225, %v1316
      %1318 = vst [vmem:[%s854 + $0x5c] sm:$0xf] %v1317
      %1319 = vst.msk [vmem:[%s854 + $0x60] sm:$0xf] %vm1268, %v1227
      %v1320 = vld [vmem:[%s854 + $0x64] sm:$0xf]
      %v1321 = vsel %vm1271, %v1229, %v1320
      %1322 = vst [vmem:[%s854 + $0x64] sm:$0xf] %v1321
      %1323 = vst.msk [vmem:[%s854 + $0x68] sm:$0xf] %vm1268, %v1231
      %v1324 = vld [vmem:[%s854 + $0x6c] sm:$0xf]
      %v1325 = vsel %vm1271, %v1233, %v1324
      %1326 = vst [vmem:[%s854 + $0x6c] sm:$0xf] %v1325
      %1327 = vst.msk [vmem:[%s854 + $0x70] sm:$0xf] %vm1268, %v1235
      %v1328 = vld [vmem:[%s854 + $0x74] sm:$0xf]
      %v1329 = vsel %vm1271, %v1237, %v1328
      %1330 = vst [vmem:[%s854 + $0x74] sm:$0xf] %v1329
      %v1332 = vunpack.c.l.b16 %v505
      %v1333 = vunpack.c.h.b16 %v505
      %v1334 = vpack.c.b16 %v1332, %v1332
      %v1335 = vpack.c.b16 %v1333, %v1333
      %v1337 = vshrl.u32 %v1334, 16
      %v1339 = vrot.slane %v1337, 7
      %v1340 = vshll.u32 %v1334, 16
      %v1342 = vor.u32 %v1339, %v1340
      %v1343 = vrot.slane %v1339, 4
      %v1345 = vshrl.u32 %v1335, 16
      %v1347 = vrot.slane %v1345, 7
      %v1348 = vshll.u32 %v1335, 16
      %v1350 = vor.u32 %v1347, %v1348
      %v1351 = vsel %vm583, %v1343, %v1350
      %1352 = vrot.lane.b32.xlu0 %v590, 12
      %v1353 = vpop.permute.xlu0 %1352
      %1354 = vrot.lane.b32.xlu0 %v599, 12
      %v1355 = vpop.permute.xlu0 %1354
      %1356 = vrot.lane.b32.xlu0 %v606, 12
      %v1357 = vpop.permute.xlu0 %1356
      %1358 = vrot.lane.b32.xlu0 %v615, 12
      %v1359 = vpop.permute.xlu0 %1358
      %1360 = vrot.lane.b32.xlu0 %v622, 12
      %v1361 = vpop.permute.xlu0 %1360
      %1362 = vrot.lane.b32.xlu0 %v631, 12
      %v1363 = vpop.permute.xlu0 %1362
      %1364 = vrot.lane.b32.xlu0 %v638, 12
      %v1365 = vpop.permute.xlu0 %1364
      %1366 = vrot.lane.b32.xlu0 %v647, 12
      %v1367 = vpop.permute.xlu0 %1366
      %1368 = vrot.lane.b32.xlu0 %v654, 12
      %v1369 = vpop.permute.xlu0 %1368
      %1370 = vrot.lane.b32.xlu0 %v663, 12
      %v1371 = vpop.permute.xlu0 %1370
      %1372 = vrot.lane.b32.xlu0 %v670, 12
      %v1373 = vpop.permute.xlu0 %1372
      %1374 = vrot.lane.b32.xlu0 %v679, 12
      %v1375 = vpop.permute.xlu0 %1374
      %1376 = vrot.lane.b32.xlu0 %v686, 12
      %v1377 = vpop.permute.xlu0 %1376
      %1378 = vrot.lane.b32.xlu0 %v695, 12
      %v1379 = vpop.permute.xlu0 %1378
      %1380 = vrot.lane.b32.xlu0 %v702, 12
      %v1381 = vpop.permute.xlu0 %1380
      %1382 = vrot.lane.b32.xlu0 %v711, 12
      %v1383 = vpop.permute.xlu0 %1382
      %1384 = vrot.lane.b32.xlu0 %v718, 12
      %v1385 = vpop.permute.xlu0 %1384
      %1386 = vrot.lane.b32.xlu0 %v727, 12
      %v1387 = vpop.permute.xlu0 %1386
      %1388 = vrot.lane.b32.xlu0 %v734, 12
      %v1389 = vpop.permute.xlu0 %1388
      %1390 = vrot.lane.b32.xlu0 %v743, 12
      %v1391 = vpop.permute.xlu0 %1390
      %1392 = vrot.lane.b32.xlu0 %v750, 12
      %v1393 = vpop.permute.xlu0 %1392
      %1394 = vrot.lane.b32.xlu0 %v759, 12
      %v1395 = vpop.permute.xlu0 %1394
      %1396 = vrot.lane.b32.xlu0 %v766, 12
      %v1397 = vpop.permute.xlu0 %1396
      %1398 = vrot.lane.b32.xlu0 %v775, 12
      %v1399 = vpop.permute.xlu0 %1398
      %1400 = vrot.lane.b32.xlu0 %v782, 12
      %v1401 = vpop.permute.xlu0 %1400
      %1402 = vrot.lane.b32.xlu0 %v791, 12
      %v1403 = vpop.permute.xlu0 %1402
      %1404 = vrot.lane.b32.xlu0 %v798, 12
      %v1405 = vpop.permute.xlu0 %1404
      %1406 = vrot.lane.b32.xlu0 %v807, 12
      %v1407 = vpop.permute.xlu0 %1406
      %1408 = vrot.lane.b32.xlu0 %v814, 12
      %v1409 = vpop.permute.xlu0 %1408
      %1410 = vrot.lane.b32.xlu0 %v823, 12
      %v1411 = vpop.permute.xlu0 %1410
      %1412 = vrot.lane.b32.xlu0 %v1342, 12
      %v1413 = vpop.permute.xlu0 %1412
      %1414 = vrot.lane.b32.xlu0 %v1351, 12
      %v1415 = vpop.permute.xlu0 %1414
      %vm1448 = vcmask 126048
      %vm1449 = vmand %vm1448, %vm856
      %v1450 = vld [vmem:[#allocation2] sm:$0xf]
      %v1451 = vsel %vm1449, %v1353, %v1450
      %1452 = vst [vmem:[#allocation2] sm:$0xf] %v1451
      %vm1453 = vcmask 126048
      %1454 = vst.msk [vmem:[#allocation2 + $0x4] sm:$0xf] %vm1453, %v1355
      %v1455 = vld [vmem:[#allocation2 + $0x8] sm:$0xf]
      %v1456 = vsel %vm1449, %v1357, %v1455
      %1457 = vst [vmem:[#allocation2 + $0x8] sm:$0xf] %v1456
      %1458 = vst.msk [vmem:[#allocation2 + $0xc] sm:$0xf] %vm1453, %v1359
      %v1459 = vld [vmem:[#allocation2 + $0x10] sm:$0xf]
      %v1460 = vsel %vm1449, %v1361, %v1459
      %1461 = vst [vmem:[#allocation2 + $0x10] sm:$0xf] %v1460
      %1462 = vst.msk [vmem:[#allocation2 + $0x14] sm:$0xf] %vm1453, %v1363
      %v1463 = vld [vmem:[#allocation2 + $0x18] sm:$0xf]
      %v1464 = vsel %vm1449, %v1365, %v1463
      %1465 = vst [vmem:[#allocation2 + $0x18] sm:$0xf] %v1464
      %1466 = vst.msk [vmem:[#allocation2 + $0x1c] sm:$0xf] %vm1453, %v1367
      %v1467 = vld [vmem:[#allocation2 + $0x20] sm:$0xf]
      %v1468 = vsel %vm1449, %v1369, %v1467
      %1469 = vst [vmem:[#allocation2 + $0x20] sm:$0xf] %v1468
      %1470 = vst.msk [vmem:[#allocation2 + $0x24] sm:$0xf] %vm1453, %v1371
      %v1471 = vld [vmem:[#allocation2 + $0x28] sm:$0xf]
      %v1472 = vsel %vm1449, %v1373, %v1471
      %1473 = vst [vmem:[#allocation2 + $0x28] sm:$0xf] %v1472
      %1474 = vst.msk [vmem:[#allocation2 + $0x2c] sm:$0xf] %vm1453, %v1375
      %v1475 = vld [vmem:[#allocation2 + $0x30] sm:$0xf]
      %v1476 = vsel %vm1449, %v1377, %v1475
      %1477 = vst [vmem:[#allocation2 + $0x30] sm:$0xf] %v1476
      %1478 = vst.msk [vmem:[#allocation2 + $0x34] sm:$0xf] %vm1453, %v1379
      %v1479 = vld [vmem:[#allocation2 + $0x38] sm:$0xf]
      %v1480 = vsel %vm1449, %v1381, %v1479
      %1481 = vst [vmem:[#allocation2 + $0x38] sm:$0xf] %v1480
      %1482 = vst.msk [vmem:[#allocation2 + $0x3c] sm:$0xf] %vm1453, %v1383
      %v1483 = vld [vmem:[#allocation2 + $0x40] sm:$0xf]
      %v1484 = vsel %vm1449, %v1385, %v1483
      %1485 = vst [vmem:[#allocation2 + $0x40] sm:$0xf] %v1484
      %1486 = vst.msk [vmem:[#allocation2 + $0x44] sm:$0xf] %vm1453, %v1387
      %v1487 = vld [vmem:[#allocation2 + $0x48] sm:$0xf]
      %v1488 = vsel %vm1449, %v1389, %v1487
      %1489 = vst [vmem:[#allocation2 + $0x48] sm:$0xf] %v1488
      %1490 = vst.msk [vmem:[#allocation2 + $0x4c] sm:$0xf] %vm1453, %v1391
      %v1491 = vld [vmem:[#allocation2 + $0x50] sm:$0xf]
      %v1492 = vsel %vm1449, %v1393, %v1491
      %1493 = vst [vmem:[#allocation2 + $0x50] sm:$0xf] %v1492
      %1494 = vst.msk [vmem:[#allocation2 + $0x54] sm:$0xf] %vm1453, %v1395
      %v1495 = vld [vmem:[#allocation2 + $0x58] sm:$0xf]
      %v1496 = vsel %vm1449, %v1397, %v1495
      %1497 = vst [vmem:[#allocation2 + $0x58] sm:$0xf] %v1496
      %1498 = vst.msk [vmem:[#allocation2 + $0x5c] sm:$0xf] %vm1453, %v1399
      %v1499 = vld [vmem:[#allocation2 + $0x60] sm:$0xf]
      %v1500 = vsel %vm1449, %v1401, %v1499
      %1501 = vst [vmem:[#allocation2 + $0x60] sm:$0xf] %v1500
      %1502 = vst.msk [vmem:[#allocation2 + $0x64] sm:$0xf] %vm1453, %v1403
      %v1503 = vld [vmem:[#allocation2 + $0x68] sm:$0xf]
      %v1504 = vsel %vm1449, %v1405, %v1503
      %1505 = vst [vmem:[#allocation2 + $0x68] sm:$0xf] %v1504
      %1506 = vst.msk [vmem:[#allocation2 + $0x6c] sm:$0xf] %vm1453, %v1407
      %v1507 = vld [vmem:[#allocation2 + $0x70] sm:$0xf]
      %v1508 = vsel %vm1449, %v1409, %v1507
      %1509 = vst [vmem:[#allocation2 + $0x70] sm:$0xf] %v1508
      %1510 = vst.msk [vmem:[#allocation2 + $0x74] sm:$0xf] %vm1453, %v1411
      %v1511 = vld [vmem:[#allocation2 + $0x78] sm:$0xf]
      %v1512 = vsel %vm1449, %v1413, %v1511
      %1513 = vst [vmem:[#allocation2 + $0x78] sm:$0xf] %v1512
      %1514 = vst.msk [vmem:[#allocation2 + $0x7c] sm:$0xf] %vm1453, %v1415
      %1515 = vrot.lane.b32.xlu0 %v551, 16
      %v1516 = vpop.permute.xlu0 %1515
      %1517 = vrot.lane.b32.xlu0 %v552, 16
      %v1518 = vpop.permute.xlu0 %1517
      %1519 = vrot.lane.b32.xlu0 %v553, 16
      %v1520 = vpop.permute.xlu0 %1519
      %1521 = vrot.lane.b32.xlu0 %v554, 16
      %v1522 = vpop.permute.xlu0 %1521
      %1523 = vrot.lane.b32.xlu0 %v555, 16
      %v1524 = vpop.permute.xlu0 %1523
      %1525 = vrot.lane.b32.xlu0 %v556, 16
      %v1526 = vpop.permute.xlu0 %1525
      %1527 = vrot.lane.b32.xlu0 %v557, 16
      %v1528 = vpop.permute.xlu0 %1527
      %1529 = vrot.lane.b32.xlu0 %v558, 16
      %v1530 = vpop.permute.xlu0 %1529
      %1531 = vrot.lane.b32.xlu0 %v559, 16
      %v1532 = vpop.permute.xlu0 %1531
      %1533 = vrot.lane.b32.xlu0 %v560, 16
      %v1534 = vpop.permute.xlu0 %1533
      %1535 = vrot.lane.b32.xlu0 %v561, 16
      %v1536 = vpop.permute.xlu0 %1535
      %1537 = vrot.lane.b32.xlu0 %v562, 16
      %v1538 = vpop.permute.xlu0 %1537
      %1539 = vrot.lane.b32.xlu0 %v563, 16
      %v1540 = vpop.permute.xlu0 %1539
      %1541 = vrot.lane.b32.xlu0 %v564, 16
      %v1542 = vpop.permute.xlu0 %1541
      %1543 = vrot.lane.b32.xlu0 %v565, 16
      %v1544 = vpop.permute.xlu0 %1543
      %1545 = vrot.lane.b32.xlu0 %v566, 16
      %v1546 = vpop.permute.xlu0 %1545
      %1547 = vrot.lane.b32.xlu0 %v567, 16
      %v1548 = vpop.permute.xlu0 %1547
      %1549 = vrot.lane.b32.xlu0 %v568, 16
      %v1550 = vpop.permute.xlu0 %1549
      %1551 = vrot.lane.b32.xlu0 %v569, 16
      %v1552 = vpop.permute.xlu0 %1551
      %1553 = vrot.lane.b32.xlu0 %v570, 16
      %v1554 = vpop.permute.xlu0 %1553
      %1555 = vrot.lane.b32.xlu0 %v571, 16
      %v1556 = vpop.permute.xlu0 %1555
      %1557 = vrot.lane.b32.xlu0 %v572, 16
      %v1558 = vpop.permute.xlu0 %1557
      %1559 = vrot.lane.b32.xlu0 %v573, 16
      %v1560 = vpop.permute.xlu0 %1559
      %1561 = vrot.lane.b32.xlu0 %v574, 16
      %v1562 = vpop.permute.xlu0 %1561
      %1563 = vrot.lane.b32.xlu0 %v575, 16
      %v1564 = vpop.permute.xlu0 %1563
      %1565 = vrot.lane.b32.xlu0 %v576, 16
      %v1566 = vpop.permute.xlu0 %1565
      %1567 = vrot.lane.b32.xlu0 %v577, 16
      %v1568 = vpop.permute.xlu0 %1567
      %1569 = vrot.lane.b32.xlu0 %v578, 16
      %v1570 = vpop.permute.xlu0 %1569
      %1571 = vrot.lane.b32.xlu0 %v579, 16
      %v1572 = vpop.permute.xlu0 %1571
      %1573 = vrot.lane.b32.xlu0 %v580, 16
      %v1574 = vpop.permute.xlu0 %1573
      %1575 = vrot.lane.b32.xlu0 %v1334, 16
      %v1576 = vpop.permute.xlu0 %1575
      %1577 = vrot.lane.b32.xlu0 %v1335, 16
      %v1578 = vpop.permute.xlu0 %1577
      %vm1611 = vcmask 158848
      %1612 = vst.msk [vmem:[#allocation2] sm:$0xf] %vm1611, %v1516
      %1613 = vst.msk [vmem:[#allocation2 + $0x4] sm:$0xf] %vm1611, %v1518
      %1614 = vst.msk [vmem:[#allocation2 + $0x8] sm:$0xf] %vm1611, %v1520
      %1615 = vst.msk [vmem:[#allocation2 + $0xc] sm:$0xf] %vm1611, %v1522
      %1616 = vst.msk [vmem:[#allocation2 + $0x10] sm:$0xf] %vm1611, %v1524
      %1617 = vst.msk [vmem:[#allocation2 + $0x14] sm:$0xf] %vm1611, %v1526
      %1618 = vst.msk [vmem:[#allocation2 + $0x18] sm:$0xf] %vm1611, %v1528
      %1619 = vst.msk [vmem:[#allocation2 + $0x1c] sm:$0xf] %vm1611, %v1530
      %1620 = vst.msk [vmem:[#allocation2 + $0x20] sm:$0xf] %vm1611, %v1532
      %1621 = vst.msk [vmem:[#allocation2 + $0x24] sm:$0xf] %vm1611, %v1534
      %1622 = vst.msk [vmem:[#allocation2 + $0x28] sm:$0xf] %vm1611, %v1536
      %1623 = vst.msk [vmem:[#allocation2 + $0x2c] sm:$0xf] %vm1611, %v1538
      %1624 = vst.msk [vmem:[#allocation2 + $0x30] sm:$0xf] %vm1611, %v1540
      %1625 = vst.msk [vmem:[#allocation2 + $0x34] sm:$0xf] %vm1611, %v1542
      %1626 = vst.msk [vmem:[#allocation2 + $0x38] sm:$0xf] %vm1611, %v1544
      %1627 = vst.msk [vmem:[#allocation2 + $0x3c] sm:$0xf] %vm1611, %v1546
      %1628 = vst.msk [vmem:[#allocation2 + $0x40] sm:$0xf] %vm1611, %v1548
      %1629 = vst.msk [vmem:[#allocation2 + $0x44] sm:$0xf] %vm1611, %v1550
      %1630 = vst.msk [vmem:[#allocation2 + $0x48] sm:$0xf] %vm1611, %v1552
      %1631 = vst.msk [vmem:[#allocation2 + $0x4c] sm:$0xf] %vm1611, %v1554
      %1632 = vst.msk [vmem:[#allocation2 + $0x50] sm:$0xf] %vm1611, %v1556
      %1633 = vst.msk [vmem:[#allocation2 + $0x54] sm:$0xf] %vm1611, %v1558
      %1634 = vst.msk [vmem:[#allocation2 + $0x58] sm:$0xf] %vm1611, %v1560
      %1635 = vst.msk [vmem:[#allocation2 + $0x5c] sm:$0xf] %vm1611, %v1562
      %1636 = vst.msk [vmem:[#allocation2 + $0x60] sm:$0xf] %vm1611, %v1564
      %1637 = vst.msk [vmem:[#allocation2 + $0x64] sm:$0xf] %vm1611, %v1566
      %1638 = vst.msk [vmem:[#allocation2 + $0x68] sm:$0xf] %vm1611, %v1568
      %1639 = vst.msk [vmem:[#allocation2 + $0x6c] sm:$0xf] %vm1611, %v1570
      %1640 = vst.msk [vmem:[#allocation2 + $0x70] sm:$0xf] %vm1611, %v1572
      %1641 = vst.msk [vmem:[#allocation2 + $0x74] sm:$0xf] %vm1611, %v1574
      %1642 = vst.msk [vmem:[#allocation2 + $0x78] sm:$0xf] %vm1611, %v1576
      %1643 = vst.msk [vmem:[#allocation2 + $0x7c] sm:$0xf] %vm1611, %v1578
      %v1644 = vrot.slane %v1337, 4
      %v1645 = vrot.slane %v1340, 5
      %v1646 = vor.u32 %v1644, %v1645
      %v1647 = vrot.slane %v1646, 4
      %v1648 = vrot.slane %v1348, 5
      %v1649 = vsel %vm1042, %v1647, %v1648
      %v1650 = vrot.slane %v1345, 4
      %v1651 = vor.u32 %v1650, %v1648
      %v1652 = vrot.slane %v1651, 4
      %1653 = vrot.lane.b32.xlu0 %v1048, 20
      %v1654 = vpop.permute.xlu0 %1653
      %1655 = vrot.lane.b32.xlu0 %v1051, 20
      %v1656 = vpop.permute.xlu0 %1655
      %1657 = vrot.lane.b32.xlu0 %v1057, 20
      %v1658 = vpop.permute.xlu0 %1657
      %1659 = vrot.lane.b32.xlu0 %v1060, 20
      %v1660 = vpop.permute.xlu0 %1659
      %1661 = vrot.lane.b32.xlu0 %v1066, 20
      %v1662 = vpop.permute.xlu0 %1661
      %1663 = vrot.lane.b32.xlu0 %v1069, 20
      %v1664 = vpop.permute.xlu0 %1663
      %1665 = vrot.lane.b32.xlu0 %v1075, 20
      %v1666 = vpop.permute.xlu0 %1665
      %1667 = vrot.lane.b32.xlu0 %v1078, 20
      %v1668 = vpop.permute.xlu0 %1667
      %1669 = vrot.lane.b32.xlu0 %v1084, 20
      %v1670 = vpop.permute.xlu0 %1669
      %1671 = vrot.lane.b32.xlu0 %v1087, 20
      %v1672 = vpop.permute.xlu0 %1671
      %1673 = vrot.lane.b32.xlu0 %v1093, 20
      %v1674 = vpop.permute.xlu0 %1673
      %1675 = vrot.lane.b32.xlu0 %v1096, 20
      %v1676 = vpop.permute.xlu0 %1675
      %1677 = vrot.lane.b32.xlu0 %v1102, 20
      %v1678 = vpop.permute.xlu0 %1677
      %1679 = vrot.lane.b32.xlu0 %v1105, 20
      %v1680 = vpop.permute.xlu0 %1679
      %1681 = vrot.lane.b32.xlu0 %v1111, 20
      %v1682 = vpop.permute.xlu0 %1681
      %1683 = vrot.lane.b32.xlu0 %v1114, 20
      %v1684 = vpop.permute.xlu0 %1683
      %1685 = vrot.lane.b32.xlu0 %v1120, 20
      %v1686 = vpop.permute.xlu0 %1685
      %1687 = vrot.lane.b32.xlu0 %v1123, 20
      %v1688 = vpop.permute.xlu0 %1687
      %1689 = vrot.lane.b32.xlu0 %v1129, 20
      %v1690 = vpop.permute.xlu0 %1689
      %1691 = vrot.lane.b32.xlu0 %v1132, 20
      %v1692 = vpop.permute.xlu0 %1691
      %1693 = vrot.lane.b32.xlu0 %v1138, 20
      %v1694 = vpop.permute.xlu0 %1693
      %1695 = vrot.lane.b32.xlu0 %v1141, 20
      %v1696 = vpop.permute.xlu0 %1695
      %1697 = vrot.lane.b32.xlu0 %v1147, 20
      %v1698 = vpop.permute.xlu0 %1697
      %1699 = vrot.lane.b32.xlu0 %v1150, 20
      %v1700 = vpop.permute.xlu0 %1699
      %1701 = vrot.lane.b32.xlu0 %v1156, 20
      %v1702 = vpop.permute.xlu0 %1701
      %1703 = vrot.lane.b32.xlu0 %v1159, 20
      %v1704 = vpop.permute.xlu0 %1703
      %1705 = vrot.lane.b32.xlu0 %v1165, 20
      %v1706 = vpop.permute.xlu0 %1705
      %1707 = vrot.lane.b32.xlu0 %v1168, 20
      %v1708 = vpop.permute.xlu0 %1707
      %1709 = vrot.lane.b32.xlu0 %v1174, 20
      %v1710 = vpop.permute.xlu0 %1709
      %1711 = vrot.lane.b32.xlu0 %v1177, 20
      %v1712 = vpop.permute.xlu0 %1711
      %1713 = vrot.lane.b32.xlu0 %v1649, 20
      %v1714 = vpop.permute.xlu0 %1713
      %1715 = vrot.lane.b32.xlu0 %v1652, 20
      %v1716 = vpop.permute.xlu0 %1715
      %vm1749 = vcmask 191648
      %1750 = vst.msk [vmem:[#allocation2] sm:$0xf] %vm1749, %v1654
      %vm1751 = vcmask 191648
      %vm1752 = vmand %vm1751, %vm1040
      %v1753 = vld [vmem:[#allocation2 + $0x4] sm:$0xf]
      %v1754 = vsel %vm1752, %v1656, %v1753
      %1755 = vst [vmem:[#allocation2 + $0x4] sm:$0xf] %v1754
      %1756 = vst.msk [vmem:[#allocation2 + $0x8] sm:$0xf] %vm1749, %v1658
      %v1757 = vld [vmem:[#allocation2 + $0xc] sm:$0xf]
      %v1758 = vsel %vm1752, %v1660, %v1757
      %1759 = vst [vmem:[#allocation2 + $0xc] sm:$0xf] %v1758
      %1760 = vst.msk [vmem:[#allocation2 + $0x10] sm:$0xf] %vm1749, %v1662
      %v1761 = vld [vmem:[#allocation2 + $0x14] sm:$0xf]
      %v1762 = vsel %vm1752, %v1664, %v1761
      %1763 = vst [vmem:[#allocation2 + $0x14] sm:$0xf] %v1762
      %1764 = vst.msk [vmem:[#allocation2 + $0x18] sm:$0xf] %vm1749, %v1666
      %v1765 = vld [vmem:[#allocation2 + $0x1c] sm:$0xf]
      %v1766 = vsel %vm1752, %v1668, %v1765
      %1767 = vst [vmem:[#allocation2 + $0x1c] sm:$0xf] %v1766
      %1768 = vst.msk [vmem:[#allocation2 + $0x20] sm:$0xf] %vm1749, %v1670
      %v1769 = vld [vmem:[#allocation2 + $0x24] sm:$0xf]
      %v1770 = vsel %vm1752, %v1672, %v1769
      %1771 = vst [vmem:[#allocation2 + $0x24] sm:$0xf] %v1770
      %1772 = vst.msk [vmem:[#allocation2 + $0x28] sm:$0xf] %vm1749, %v1674
      %v1773 = vld [vmem:[#allocation2 + $0x2c] sm:$0xf]
      %v1774 = vsel %vm1752, %v1676, %v1773
      %1775 = vst [vmem:[#allocation2 + $0x2c] sm:$0xf] %v1774
      %1776 = vst.msk [vmem:[#allocation2 + $0x30] sm:$0xf] %vm1749, %v1678
      %v1777 = vld [vmem:[#allocation2 + $0x34] sm:$0xf]
      %v1778 = vsel %vm1752, %v1680, %v1777
      %1779 = vst [vmem:[#allocation2 + $0x34] sm:$0xf] %v1778
      %1780 = vst.msk [vmem:[#allocation2 + $0x38] sm:$0xf] %vm1749, %v1682
      %v1781 = vld [vmem:[#allocation2 + $0x3c] sm:$0xf]
      %v1782 = vsel %vm1752, %v1684, %v1781
      %1783 = vst [vmem:[#allocation2 + $0x3c] sm:$0xf] %v1782
      %1784 = vst.msk [vmem:[#allocation2 + $0x40] sm:$0xf] %vm1749, %v1686
      %v1785 = vld [vmem:[#allocation2 + $0x44] sm:$0xf]
      %v1786 = vsel %vm1752, %v1688, %v1785
      %1787 = vst [vmem:[#allocation2 + $0x44] sm:$0xf] %v1786
      %1788 = vst.msk [vmem:[#allocation2 + $0x48] sm:$0xf] %vm1749, %v1690
      %v1789 = vld [vmem:[#allocation2 + $0x4c] sm:$0xf]
      %v1790 = vsel %vm1752, %v1692, %v1789
      %1791 = vst [vmem:[#allocation2 + $0x4c] sm:$0xf] %v1790
      %1792 = vst.msk [vmem:[#allocation2 + $0x50] sm:$0xf] %vm1749, %v1694
      %v1793 = vld [vmem:[#allocation2 + $0x54] sm:$0xf]
      %v1794 = vsel %vm1752, %v1696, %v1793
      %1795 = vst [vmem:[#allocation2 + $0x54] sm:$0xf] %v1794
      %1796 = vst.msk [vmem:[#allocation2 + $0x58] sm:$0xf] %vm1749, %v1698
      %v1797 = vld [vmem:[#allocation2 + $0x5c] sm:$0xf]
      %v1798 = vsel %vm1752, %v1700, %v1797
      %1799 = vst [vmem:[#allocation2 + $0x5c] sm:$0xf] %v1798
      %1800 = vst.msk [vmem:[#allocation2 + $0x60] sm:$0xf] %vm1749, %v1702
      %v1801 = vld [vmem:[#allocation2 + $0x64] sm:$0xf]
      %v1802 = vsel %vm1752, %v1704, %v1801
      %1803 = vst [vmem:[#allocation2 + $0x64] sm:$0xf] %v1802
      %1804 = vst.msk [vmem:[#allocation2 + $0x68] sm:$0xf] %vm1749, %v1706
      %v1805 = vld [vmem:[#allocation2 + $0x6c] sm:$0xf]
      %v1806 = vsel %vm1752, %v1708, %v1805
      %1807 = vst [vmem:[#allocation2 + $0x6c] sm:$0xf] %v1806
      %1808 = vst.msk [vmem:[#allocation2 + $0x70] sm:$0xf] %vm1749, %v1710
      %v1809 = vld [vmem:[#allocation2 + $0x74] sm:$0xf]
      %v1810 = vsel %vm1752, %v1712, %v1809
      %1811 = vst [vmem:[#allocation2 + $0x74] sm:$0xf] %v1810
      %1812 = vst.msk [vmem:[#allocation2 + $0x78] sm:$0xf] %vm1749, %v1714
      %v1813 = vld [vmem:[#allocation2 + $0x7c] sm:$0xf]
      %v1814 = vsel %vm1752, %v1716, %v1813
      %1815 = vst [vmem:[#allocation2 + $0x7c] sm:$0xf] %v1814
      %1816 = vrot.lane.b32.xlu0 %v606, 24
      %v1817 = vpop.permute.xlu0 %1816
      %1818 = vrot.lane.b32.xlu0 %v615, 24
      %v1819 = vpop.permute.xlu0 %1818
      %1820 = vrot.lane.b32.xlu0 %v622, 24
      %v1821 = vpop.permute.xlu0 %1820
      %1822 = vrot.lane.b32.xlu0 %v631, 24
      %v1823 = vpop.permute.xlu0 %1822
      %1824 = vrot.lane.b32.xlu0 %v638, 24
      %v1825 = vpop.permute.xlu0 %1824
      %1826 = vrot.lane.b32.xlu0 %v647, 24
      %v1827 = vpop.permute.xlu0 %1826
      %1828 = vrot.lane.b32.xlu0 %v654, 24
      %v1829 = vpop.permute.xlu0 %1828
      %1830 = vrot.lane.b32.xlu0 %v663, 24
      %v1831 = vpop.permute.xlu0 %1830
      %1832 = vrot.lane.b32.xlu0 %v670, 24
      %v1833 = vpop.permute.xlu0 %1832
      %1834 = vrot.lane.b32.xlu0 %v679, 24
      %v1835 = vpop.permute.xlu0 %1834
      %1836 = vrot.lane.b32.xlu0 %v686, 24
      %v1837 = vpop.permute.xlu0 %1836
      %1838 = vrot.lane.b32.xlu0 %v695, 24
      %v1839 = vpop.permute.xlu0 %1838
      %1840 = vrot.lane.b32.xlu0 %v702, 24
      %v1841 = vpop.permute.xlu0 %1840
      %1842 = vrot.lane.b32.xlu0 %v711, 24
      %v1843 = vpop.permute.xlu0 %1842
      %1844 = vrot.lane.b32.xlu0 %v718, 24
      %v1845 = vpop.permute.xlu0 %1844
      %1846 = vrot.lane.b32.xlu0 %v727, 24
      %v1847 = vpop.permute.xlu0 %1846
      %1848 = vrot.lane.b32.xlu0 %v734, 24
      %v1849 = vpop.permute.xlu0 %1848
      %1850 = vrot.lane.b32.xlu0 %v743, 24
      %v1851 = vpop.permute.xlu0 %1850
      %1852 = vrot.lane.b32.xlu0 %v750, 24
      %v1853 = vpop.permute.xlu0 %1852
      %1854 = vrot.lane.b32.xlu0 %v759, 24
      %v1855 = vpop.permute.xlu0 %1854
      %1856 = vrot.lane.b32.xlu0 %v766, 24
      %v1857 = vpop.permute.xlu0 %1856
      %1858 = vrot.lane.b32.xlu0 %v775, 24
      %v1859 = vpop.permute.xlu0 %1858
      %1860 = vrot.lane.b32.xlu0 %v782, 24
      %v1861 = vpop.permute.xlu0 %1860
      %1862 = vrot.lane.b32.xlu0 %v791, 24
      %v1863 = vpop.permute.xlu0 %1862
      %1864 = vrot.lane.b32.xlu0 %v798, 24
      %v1865 = vpop.permute.xlu0 %1864
      %1866 = vrot.lane.b32.xlu0 %v807, 24
      %v1867 = vpop.permute.xlu0 %1866
      %1868 = vrot.lane.b32.xlu0 %v814, 24
      %v1869 = vpop.permute.xlu0 %1868
      %1870 = vrot.lane.b32.xlu0 %v823, 24
      %v1871 = vpop.permute.xlu0 %1870
      %1872 = vrot.lane.b32.xlu0 %v1342, 24
      %v1873 = vpop.permute.xlu0 %1872
      %1874 = vrot.lane.b32.xlu0 %v1351, 24
      %v1875 = vpop.permute.xlu0 %1874
      %vm1906 = vcmask 224448
      %vm1907 = vmand %vm1906, %vm856
      %v1908 = vld [vmem:[#allocation2] sm:$0xf]
      %v1909 = vsel %vm1907, %v1817, %v1908
      %1910 = vst [vmem:[#allocation2] sm:$0xf] %v1909
      %vm1911 = vcmask 224448
      %1912 = vst.msk [vmem:[#allocation2 + $0x4] sm:$0xf] %vm1911, %v1819
      %v1913 = vld [vmem:[#allocation2 + $0x8] sm:$0xf]
      %v1914 = vsel %vm1907, %v1821, %v1913
      %1915 = vst [vmem:[#allocation2 + $0x8] sm:$0xf] %v1914
      %1916 = vst.msk [vmem:[#allocation2 + $0xc] sm:$0xf] %vm1911, %v1823
      %v1917 = vld [vmem:[#allocation2 + $0x10] sm:$0xf]
      %v1918 = vsel %vm1907, %v1825, %v1917
      %1919 = vst [vmem:[#allocation2 + $0x10] sm:$0xf] %v1918
      %1920 = vst.msk [vmem:[#allocation2 + $0x14] sm:$0xf] %vm1911, %v1827
      %v1921 = vld [vmem:[#allocation2 + $0x18] sm:$0xf]
      %v1922 = vsel %vm1907, %v1829, %v1921
      %1923 = vst [vmem:[#allocation2 + $0x18] sm:$0xf] %v1922
      %1924 = vst.msk [vmem:[#allocation2 + $0x1c] sm:$0xf] %vm1911, %v1831
      %v1925 = vld [vmem:[#allocation2 + $0x20] sm:$0xf]
      %v1926 = vsel %vm1907, %v1833, %v1925
      %1927 = vst [vmem:[#allocation2 + $0x20] sm:$0xf] %v1926
      %1928 = vst.msk [vmem:[#allocation2 + $0x24] sm:$0xf] %vm1911, %v1835
      %v1929 = vld [vmem:[#allocation2 + $0x28] sm:$0xf]
      %v1930 = vsel %vm1907, %v1837, %v1929
      %1931 = vst [vmem:[#allocation2 + $0x28] sm:$0xf] %v1930
      %1932 = vst.msk [vmem:[#allocation2 + $0x2c] sm:$0xf] %vm1911, %v1839
      %v1933 = vld [vmem:[#allocation2 + $0x30] sm:$0xf]
      %v1934 = vsel %vm1907, %v1841, %v1933
      %1935 = vst [vmem:[#allocation2 + $0x30] sm:$0xf] %v1934
      %1936 = vst.msk [vmem:[#allocation2 + $0x34] sm:$0xf] %vm1911, %v1843
      %v1937 = vld [vmem:[#allocation2 + $0x38] sm:$0xf]
      %v1938 = vsel %vm1907, %v1845, %v1937
      %1939 = vst [vmem:[#allocation2 + $0x38] sm:$0xf] %v1938
      %1940 = vst.msk [vmem:[#allocation2 + $0x3c] sm:$0xf] %vm1911, %v1847
      %v1941 = vld [vmem:[#allocation2 + $0x40] sm:$0xf]
      %v1942 = vsel %vm1907, %v1849, %v1941
      %1943 = vst [vmem:[#allocation2 + $0x40] sm:$0xf] %v1942
      %1944 = vst.msk [vmem:[#allocation2 + $0x44] sm:$0xf] %vm1911, %v1851
      %v1945 = vld [vmem:[#allocation2 + $0x48] sm:$0xf]
      %v1946 = vsel %vm1907, %v1853, %v1945
      %1947 = vst [vmem:[#allocation2 + $0x48] sm:$0xf] %v1946
      %1948 = vst.msk [vmem:[#allocation2 + $0x4c] sm:$0xf] %vm1911, %v1855
      %v1949 = vld [vmem:[#allocation2 + $0x50] sm:$0xf]
      %v1950 = vsel %vm1907, %v1857, %v1949
      %1951 = vst [vmem:[#allocation2 + $0x50] sm:$0xf] %v1950
      %1952 = vst.msk [vmem:[#allocation2 + $0x54] sm:$0xf] %vm1911, %v1859
      %v1953 = vld [vmem:[#allocation2 + $0x58] sm:$0xf]
      %v1954 = vsel %vm1907, %v1861, %v1953
      %1955 = vst [vmem:[#allocation2 + $0x58] sm:$0xf] %v1954
      %1956 = vst.msk [vmem:[#allocation2 + $0x5c] sm:$0xf] %vm1911, %v1863
      %v1957 = vld [vmem:[#allocation2 + $0x60] sm:$0xf]
      %v1958 = vsel %vm1907, %v1865, %v1957
      %1959 = vst [vmem:[#allocation2 + $0x60] sm:$0xf] %v1958
      %1960 = vst.msk [vmem:[#allocation2 + $0x64] sm:$0xf] %vm1911, %v1867
      %v1961 = vld [vmem:[#allocation2 + $0x68] sm:$0xf]
      %v1962 = vsel %vm1907, %v1869, %v1961
      %1963 = vst [vmem:[#allocation2 + $0x68] sm:$0xf] %v1962
      %1964 = vst.msk [vmem:[#allocation2 + $0x6c] sm:$0xf] %vm1911, %v1871
      %v1965 = vld [vmem:[#allocation2 + $0x70] sm:$0xf]
      %v1966 = vsel %vm1907, %v1873, %v1965
      %1967 = vst [vmem:[#allocation2 + $0x70] sm:$0xf] %v1966
      %1968 = vst.msk [vmem:[#allocation2 + $0x74] sm:$0xf] %vm1911, %v1875
      %1969 = vrot.lane.b32.xlu0 %v553, 28
      %v1970 = vpop.permute.xlu0 %1969
      %1971 = vrot.lane.b32.xlu0 %v554, 28
      %v1972 = vpop.permute.xlu0 %1971
      %1973 = vrot.lane.b32.xlu0 %v555, 28
      %v1974 = vpop.permute.xlu0 %1973
      %1975 = vrot.lane.b32.xlu0 %v556, 28
      %v1976 = vpop.permute.xlu0 %1975
      %1977 = vrot.lane.b32.xlu0 %v557, 28
      %v1978 = vpop.permute.xlu0 %1977
      %1979 = vrot.lane.b32.xlu0 %v558, 28
      %v1980 = vpop.permute.xlu0 %1979
      %1981 = vrot.lane.b32.xlu0 %v559, 28
      %v1982 = vpop.permute.xlu0 %1981
      %1983 = vrot.lane.b32.xlu0 %v560, 28
      %v1984 = vpop.permute.xlu0 %1983
      %1985 = vrot.lane.b32.xlu0 %v561, 28
      %v1986 = vpop.permute.xlu0 %1985
      %1987 = vrot.lane.b32.xlu0 %v562, 28
      %v1988 = vpop.permute.xlu0 %1987
      %1989 = vrot.lane.b32.xlu0 %v563, 28
      %v1990 = vpop.permute.xlu0 %1989
      %1991 = vrot.lane.b32.xlu0 %v564, 28
      %v1992 = vpop.permute.xlu0 %1991
      %1993 = vrot.lane.b32.xlu0 %v565, 28
      %v1994 = vpop.permute.xlu0 %1993
      %1995 = vrot.lane.b32.xlu0 %v566, 28
      %v1996 = vpop.permute.xlu0 %1995
      %1997 = vrot.lane.b32.xlu0 %v567, 28
      %v1998 = vpop.permute.xlu0 %1997
      %1999 = vrot.lane.b32.xlu0 %v568, 28
      %v2000 = vpop.permute.xlu0 %1999
      %2001 = vrot.lane.b32.xlu0 %v569, 28
      %v2002 = vpop.permute.xlu0 %2001
      %2003 = vrot.lane.b32.xlu0 %v570, 28
      %v2004 = vpop.permute.xlu0 %2003
      %2005 = vrot.lane.b32.xlu0 %v571, 28
      %v2006 = vpop.permute.xlu0 %2005
      %2007 = vrot.lane.b32.xlu0 %v572, 28
      %v2008 = vpop.permute.xlu0 %2007
      %2009 = vrot.lane.b32.xlu0 %v573, 28
      %v2010 = vpop.permute.xlu0 %2009
      %2011 = vrot.lane.b32.xlu0 %v574, 28
      %v2012 = vpop.permute.xlu0 %2011
      %2013 = vrot.lane.b32.xlu0 %v575, 28
      %v2014 = vpop.permute.xlu0 %2013
      %2015 = vrot.lane.b32.xlu0 %v576, 28
      %v2016 = vpop.permute.xlu0 %2015
      %2017 = vrot.lane.b32.xlu0 %v577, 28
      %v2018 = vpop.permute.xlu0 %2017
      %2019 = vrot.lane.b32.xlu0 %v578, 28
      %v2020 = vpop.permute.xlu0 %2019
      %2021 = vrot.lane.b32.xlu0 %v579, 28
      %v2022 = vpop.permute.xlu0 %2021
      %2023 = vrot.lane.b32.xlu0 %v580, 28
      %v2024 = vpop.permute.xlu0 %2023
      %2025 = vrot.lane.b32.xlu0 %v1334, 28
      %v2026 = vpop.permute.xlu0 %2025
      %2027 = vrot.lane.b32.xlu0 %v1335, 28
      %v2028 = vpop.permute.xlu0 %2027
      %vm2059 = vcmask 257248
      %2060 = vst.msk [vmem:[#allocation2] sm:$0xf] %vm2059, %v1970
      %2061 = vst.msk [vmem:[#allocation2 + $0x4] sm:$0xf] %vm2059, %v1972
      %2062 = vst.msk [vmem:[#allocation2 + $0x8] sm:$0xf] %vm2059, %v1974
      %2063 = vst.msk [vmem:[#allocation2 + $0xc] sm:$0xf] %vm2059, %v1976
      %2064 = vst.msk [vmem:[#allocation2 + $0x10] sm:$0xf] %vm2059, %v1978
      %2065 = vst.msk [vmem:[#allocation2 + $0x14] sm:$0xf] %vm2059, %v1980
      %2066 = vst.msk [vmem:[#allocation2 + $0x18] sm:$0xf] %vm2059, %v1982
      %2067 = vst.msk [vmem:[#allocation2 + $0x1c] sm:$0xf] %vm2059, %v1984
      %2068 = vst.msk [vmem:[#allocation2 + $0x20] sm:$0xf] %vm2059, %v1986
      %2069 = vst.msk [vmem:[#allocation2 + $0x24] sm:$0xf] %vm2059, %v1988
      %2070 = vst.msk [vmem:[#allocation2 + $0x28] sm:$0xf] %vm2059, %v1990
      %2071 = vst.msk [vmem:[#allocation2 + $0x2c] sm:$0xf] %vm2059, %v1992
      %2072 = vst.msk [vmem:[#allocation2 + $0x30] sm:$0xf] %vm2059, %v1994
      %2073 = vst.msk [vmem:[#allocation2 + $0x34] sm:$0xf] %vm2059, %v1996
      %2074 = vst.msk [vmem:[#allocation2 + $0x38] sm:$0xf] %vm2059, %v1998
      %2075 = vst.msk [vmem:[#allocation2 + $0x3c] sm:$0xf] %vm2059, %v2000
      %2076 = vst.msk [vmem:[#allocation2 + $0x40] sm:$0xf] %vm2059, %v2002
      %2077 = vst.msk [vmem:[#allocation2 + $0x44] sm:$0xf] %vm2059, %v2004
      %2078 = vst.msk [vmem:[#allocation2 + $0x48] sm:$0xf] %vm2059, %v2006
      %2079 = vst.msk [vmem:[#allocation2 + $0x4c] sm:$0xf] %vm2059, %v2008
      %2080 = vst.msk [vmem:[#allocation2 + $0x50] sm:$0xf] %vm2059, %v2010
      %2081 = vst.msk [vmem:[#allocation2 + $0x54] sm:$0xf] %vm2059, %v2012
      %2082 = vst.msk [vmem:[#allocation2 + $0x58] sm:$0xf] %vm2059, %v2014
      %2083 = vst.msk [vmem:[#allocation2 + $0x5c] sm:$0xf] %vm2059, %v2016
      %2084 = vst.msk [vmem:[#allocation2 + $0x60] sm:$0xf] %vm2059, %v2018
      %2085 = vst.msk [vmem:[#allocation2 + $0x64] sm:$0xf] %vm2059, %v2020
      %2086 = vst.msk [vmem:[#allocation2 + $0x68] sm:$0xf] %vm2059, %v2022
      %2087 = vst.msk [vmem:[#allocation2 + $0x6c] sm:$0xf] %vm2059, %v2024
      %2088 = vst.msk [vmem:[#allocation2 + $0x70] sm:$0xf] %vm2059, %v2026
      %2089 = vst.msk [vmem:[#allocation2 + $0x74] sm:$0xf] %vm2059, %v2028
      %2090 = vrot.lane.b32.xlu0 %v1057, 32
      %v2091 = vpop.permute.xlu0 %2090
      %2092 = vrot.lane.b32.xlu0 %v1060, 32
      %v2093 = vpop.permute.xlu0 %2092
      %2094 = vrot.lane.b32.xlu0 %v1066, 32
      %v2095 = vpop.permute.xlu0 %2094
      %2096 = vrot.lane.b32.xlu0 %v1069, 32
      %v2097 = vpop.permute.xlu0 %2096
      %2098 = vrot.lane.b32.xlu0 %v1075, 32
      %v2099 = vpop.permute.xlu0 %2098
      %2100 = vrot.lane.b32.xlu0 %v1078, 32
      %v2101 = vpop.permute.xlu0 %2100
      %2102 = vrot.lane.b32.xlu0 %v1084, 32
      %v2103 = vpop.permute.xlu0 %2102
      %2104 = vrot.lane.b32.xlu0 %v1087, 32
      %v2105 = vpop.permute.xlu0 %2104
      %2106 = vrot.lane.b32.xlu0 %v1093, 32
      %v2107 = vpop.permute.xlu0 %2106
      %2108 = vrot.lane.b32.xlu0 %v1096, 32
      %v2109 = vpop.permute.xlu0 %2108
      %2110 = vrot.lane.b32.xlu0 %v1102, 32
      %v2111 = vpop.permute.xlu0 %2110
      %2112 = vrot.lane.b32.xlu0 %v1105, 32
      %v2113 = vpop.permute.xlu0 %2112
      %2114 = vrot.lane.b32.xlu0 %v1111, 32
      %v2115 = vpop.permute.xlu0 %2114
      %2116 = vrot.lane.b32.xlu0 %v1114, 32
      %v2117 = vpop.permute.xlu0 %2116
      %2118 = vrot.lane.b32.xlu0 %v1120, 32
      %v2119 = vpop.permute.xlu0 %2118
      %2120 = vrot.lane.b32.xlu0 %v1123, 32
      %v2121 = vpop.permute.xlu0 %2120
      %2122 = vrot.lane.b32.xlu0 %v1129, 32
      %v2123 = vpop.permute.xlu0 %2122
      %2124 = vrot.lane.b32.xlu0 %v1132, 32
      %v2125 = vpop.permute.xlu0 %2124
      %2126 = vrot.lane.b32.xlu0 %v1138, 32
      %v2127 = vpop.permute.xlu0 %2126
      %2128 = vrot.lane.b32.xlu0 %v1141, 32
      %v2129 = vpop.permute.xlu0 %2128
      %2130 = vrot.lane.b32.xlu0 %v1147, 32
      %v2131 = vpop.permute.xlu0 %2130
      %2132 = vrot.lane.b32.xlu0 %v1150, 32
      %v2133 = vpop.permute.xlu0 %2132
      %2134 = vrot.lane.b32.xlu0 %v1156, 32
      %v2135 = vpop.permute.xlu0 %2134
      %2136 = vrot.lane.b32.xlu0 %v1159, 32
      %v2137 = vpop.permute.xlu0 %2136
      %2138 = vrot.lane.b32.xlu0 %v1165, 32
      %v2139 = vpop.permute.xlu0 %2138
      %2140 = vrot.lane.b32.xlu0 %v1168, 32
      %v2141 = vpop.permute.xlu0 %2140
      %2142 = vrot.lane.b32.xlu0 %v1174, 32
      %v2143 = vpop.permute.xlu0 %2142
      %2144 = vrot.lane.b32.xlu0 %v1177, 32
      %v2145 = vpop.permute.xlu0 %2144
      %2146 = vrot.lane.b32.xlu0 %v1649, 32
      %v2147 = vpop.permute.xlu0 %2146
      %2148 = vrot.lane.b32.xlu0 %v1652, 32
      %v2149 = vpop.permute.xlu0 %2148
      %vm2180 = vcmask 290048
      %2181 = vst.msk [vmem:[#allocation2] sm:$0xf] %vm2180, %v2091
      %vm2182 = vcmask 290048
      %vm2183 = vmand %vm2182, %vm1040
      %v2184 = vld [vmem:[#allocation2 + $0x4] sm:$0xf]
      %v2185 = vsel %vm2183, %v2093, %v2184
      %2186 = vst [vmem:[#allocation2 + $0x4] sm:$0xf] %v2185
      %2187 = vst.msk [vmem:[#allocation2 + $0x8] sm:$0xf] %vm2180, %v2095
      %v2188 = vld [vmem:[#allocation2 + $0xc] sm:$0xf]
      %v2189 = vsel %vm2183, %v2097, %v2188
      %2190 = vst [vmem:[#allocation2 + $0xc] sm:$0xf] %v2189
      %2191 = vst.msk [vmem:[#allocation2 + $0x10] sm:$0xf] %vm2180, %v2099
      %v2192 = vld [vmem:[#allocation2 + $0x14] sm:$0xf]
      %v2193 = vsel %vm2183, %v2101, %v2192
      %2194 = vst [vmem:[#allocation2 + $0x14] sm:$0xf] %v2193
      %2195 = vst.msk [vmem:[#allocation2 + $0x18] sm:$0xf] %vm2180, %v2103
      %v2196 = vld [vmem:[#allocation2 + $0x1c] sm:$0xf]
      %v2197 = vsel %vm2183, %v2105, %v2196
      %2198 = vst [vmem:[#allocation2 + $0x1c] sm:$0xf] %v2197
      %2199 = vst.msk [vmem:[#allocation2 + $0x20] sm:$0xf] %vm2180, %v2107
      %v2200 = vld [vmem:[#allocation2 + $0x24] sm:$0xf]
      %v2201 = vsel %vm2183, %v2109, %v2200
      %2202 = vst [vmem:[#allocation2 + $0x24] sm:$0xf] %v2201
      %2203 = vst.msk [vmem:[#allocation2 + $0x28] sm:$0xf] %vm2180, %v2111
      %v2204 = vld [vmem:[#allocation2 + $0x2c] sm:$0xf]
      %v2205 = vsel %vm2183, %v2113, %v2204
      %2206 = vst [vmem:[#allocation2 + $0x2c] sm:$0xf] %v2205
      %2207 = vst.msk [vmem:[#allocation2 + $0x30] sm:$0xf] %vm2180, %v2115
      %v2208 = vld [vmem:[#allocation2 + $0x34] sm:$0xf]
      %v2209 = vsel %vm2183, %v2117, %v2208
      %2210 = vst [vmem:[#allocation2 + $0x34] sm:$0xf] %v2209
      %2211 = vst.msk [vmem:[#allocation2 + $0x38] sm:$0xf] %vm2180, %v2119
      %v2212 = vld [vmem:[#allocation2 + $0x3c] sm:$0xf]
      %v2213 = vsel %vm2183, %v2121, %v2212
      %2214 = vst [vmem:[#allocation2 + $0x3c] sm:$0xf] %v2213
      %2215 = vst.msk [vmem:[#allocation2 + $0x40] sm:$0xf] %vm2180, %v2123
      %v2216 = vld [vmem:[#allocation2 + $0x44] sm:$0xf]
      %v2217 = vsel %vm2183, %v2125, %v2216
      %2218 = vst [vmem:[#allocation2 + $0x44] sm:$0xf] %v2217
      %2219 = vst.msk [vmem:[#allocation2 + $0x48] sm:$0xf] %vm2180, %v2127
      %v2220 = vld [vmem:[#allocation2 + $0x4c] sm:$0xf]
      %v2221 = vsel %vm2183, %v2129, %v2220
      %2222 = vst [vmem:[#allocation2 + $0x4c] sm:$0xf] %v2221
      %2223 = vst.msk [vmem:[#allocation2 + $0x50] sm:$0xf] %vm2180, %v2131
      %v2224 = vld [vmem:[#allocation2 + $0x54] sm:$0xf]
      %v2225 = vsel %vm2183, %v2133, %v2224
      %2226 = vst [vmem:[#allocation2 + $0x54] sm:$0xf] %v2225
      %2227 = vst.msk [vmem:[#allocation2 + $0x58] sm:$0xf] %vm2180, %v2135
      %v2228 = vld [vmem:[#allocation2 + $0x5c] sm:$0xf]
      %v2229 = vsel %vm2183, %v2137, %v2228
      %2230 = vst [vmem:[#allocation2 + $0x5c] sm:$0xf] %v2229
      %2231 = vst.msk [vmem:[#allocation2 + $0x60] sm:$0xf] %vm2180, %v2139
      %v2232 = vld [vmem:[#allocation2 + $0x64] sm:$0xf]
      %v2233 = vsel %vm2183, %v2141, %v2232
      %2234 = vst [vmem:[#allocation2 + $0x64] sm:$0xf] %v2233
      %2235 = vst.msk [vmem:[#allocation2 + $0x68] sm:$0xf] %vm2180, %v2143
      %v2236 = vld [vmem:[#allocation2 + $0x6c] sm:$0xf]
      %v2237 = vsel %vm2183, %v2145, %v2236
      %2238 = vst [vmem:[#allocation2 + $0x6c] sm:$0xf] %v2237
      %2239 = vst.msk [vmem:[#allocation2 + $0x70] sm:$0xf] %vm2180, %v2147
      %v2240 = vld [vmem:[#allocation2 + $0x74] sm:$0xf]
      %v2241 = vsel %vm2183, %v2149, %v2240
      %2242 = vst [vmem:[#allocation2 + $0x74] sm:$0xf] %v2241
      %v2243 = vld [vmem:[#allocation2] sm:$0xf]
      %v2244 = vld [vmem:[#allocation2 + $0x4] sm:$0xf]
      %v2245 = vld [vmem:[#allocation2 + $0x8] sm:$0xf]
      %v2246 = vld [vmem:[#allocation2 + $0xc] sm:$0xf]
      %v2247 = vld [vmem:[#allocation2 + $0x10] sm:$0xf]
      %v2248 = vld [vmem:[#allocation2 + $0x14] sm:$0xf]
      %v2249 = vld [vmem:[#allocation2 + $0x18] sm:$0xf]
      %v2250 = vld [vmem:[#allocation2 + $0x1c] sm:$0xf]
      %v2251 = vld [vmem:[#allocation2 + $0x20] sm:$0xf]
      %v2252 = vld [vmem:[#allocation2 + $0x24] sm:$0xf]
      %v2253 = vld [vmem:[#allocation2 + $0x28] sm:$0xf]
      %v2254 = vld [vmem:[#allocation2 + $0x2c] sm:$0xf]
      %v2255 = vld [vmem:[#allocation2 + $0x30] sm:$0xf]
      %v2256 = vld [vmem:[#allocation2 + $0x34] sm:$0xf]
      %v2257 = vld [vmem:[#allocation2 + $0x38] sm:$0xf]
      %v2258 = vld [vmem:[#allocation2 + $0x3c] sm:$0xf]
      %v2259 = vld [vmem:[#allocation2 + $0x40] sm:$0xf]
      %v2260 = vld [vmem:[#allocation2 + $0x44] sm:$0xf]
      %v2261 = vld [vmem:[#allocation2 + $0x48] sm:$0xf]
      %v2262 = vld [vmem:[#allocation2 + $0x4c] sm:$0xf]
      %v2263 = vld [vmem:[#allocation2 + $0x50] sm:$0xf]
      %v2264 = vld [vmem:[#allocation2 + $0x54] sm:$0xf]
      %v2265 = vld [vmem:[#allocation2 + $0x58] sm:$0xf]
      %v2266 = vld [vmem:[#allocation2 + $0x5c] sm:$0xf]
      %v2267 = vld [vmem:[#allocation2 + $0x60] sm:$0xf]
      %v2268 = vld [vmem:[#allocation2 + $0x64] sm:$0xf]
      %v2269 = vld [vmem:[#allocation2 + $0x68] sm:$0xf]
      %v2270 = vld [vmem:[#allocation2 + $0x6c] sm:$0xf]
      %v2271 = vld [vmem:[#allocation2 + $0x70] sm:$0xf]
      %v2272 = vld [vmem:[#allocation2 + $0x74] sm:$0xf]
      %v2273 = vld [vmem:[#allocation2 + $0x78] sm:$0xf]
      %v2274 = vld [vmem:[#allocation2 + $0x7c] sm:$0xf]
      %v2275 = vld [vmem:[%s3] sm:$0xf]
      %v2276 = vld [vmem:[%s3 + $0x4] sm:$0xf]
      %v2277 = vld [vmem:[%s3 + $0x8] sm:$0xf]
      %v2278 = vld [vmem:[%s3 + $0xc] sm:$0xf]
      %v2279 = vld [vmem:[%s3 + $0x10] sm:$0xf]
      %v2280 = vld [vmem:[%s3 + $0x14] sm:$0xf]
      %v2281 = vld [vmem:[%s3 + $0x18] sm:$0xf]
      %v2282 = vld [vmem:[%s3 + $0x1c] sm:$0xf]
      %v2283 = vld [vmem:[%s3 + $0x20] sm:$0xf]
      %v2284 = vld [vmem:[%s3 + $0x24] sm:$0xf]
      %v2285 = vld [vmem:[%s3 + $0x28] sm:$0xf]
      %v2286 = vld [vmem:[%s3 + $0x2c] sm:$0xf]
      %v2287 = vld [vmem:[%s3 + $0x30] sm:$0xf]
      %v2288 = vld [vmem:[%s3 + $0x34] sm:$0xf]
      %v2289 = vld [vmem:[%s3 + $0x38] sm:$0xf]
      %v2290 = vld [vmem:[%s3 + $0x3c] sm:$0xf]
      %v2323 = vunpack.c.l.b16 %v2243
      %v2324 = vunpack.c.l.b16 %v2244
      %v2325 = vunpack.c.l.b16 %v2245
      %v2326 = vunpack.c.l.b16 %v2246
      %v2327 = vunpack.c.l.b16 %v2247
      %v2328 = vunpack.c.l.b16 %v2248
      %v2329 = vunpack.c.l.b16 %v2249
      %v2330 = vunpack.c.l.b16 %v2250
      %v2331 = vunpack.c.l.b16 %v2251
      %v2332 = vunpack.c.l.b16 %v2252
      %v2333 = vunpack.c.l.b16 %v2253
      %v2334 = vunpack.c.l.b16 %v2254
      %v2335 = vunpack.c.l.b16 %v2255
      %v2336 = vunpack.c.l.b16 %v2256
      %v2337 = vunpack.c.l.b16 %v2257
      %v2338 = vunpack.c.l.b16 %v2258
      %v2339 = vunpack.c.l.b16 %v2259
      %v2340 = vunpack.c.l.b16 %v2260
      %v2341 = vunpack.c.l.b16 %v2261
      %v2342 = vunpack.c.l.b16 %v2262
      %v2343 = vunpack.c.l.b16 %v2263
      %v2344 = vunpack.c.l.b16 %v2264
      %v2345 = vunpack.c.l.b16 %v2265
      %v2346 = vunpack.c.l.b16 %v2266
      %v2347 = vunpack.c.l.b16 %v2267
      %v2348 = vunpack.c.l.b16 %v2268
      %v2349 = vunpack.c.l.b16 %v2269
      %v2350 = vunpack.c.l.b16 %v2270
      %v2351 = vunpack.c.l.b16 %v2271
      %v2352 = vunpack.c.l.b16 %v2272
      %v2353 = vunpack.c.l.b16 %v2273
      %v2354 = vunpack.c.l.b16 %v2274
      %v2355 = vpack.c.b16 %v2324, %v2323
      %v2356 = vpack.c.b16 %v2326, %v2325
      %v2357 = vpack.c.b16 %v2328, %v2327
      %v2358 = vpack.c.b16 %v2330, %v2329
      %v2359 = vpack.c.b16 %v2332, %v2331
      %v2360 = vpack.c.b16 %v2334, %v2333
      %v2361 = vpack.c.b16 %v2336, %v2335
      %v2362 = vpack.c.b16 %v2338, %v2337
      %v2363 = vpack.c.b16 %v2340, %v2339
      %v2364 = vpack.c.b16 %v2342, %v2341
      %v2365 = vpack.c.b16 %v2344, %v2343
      %v2366 = vpack.c.b16 %v2346, %v2345
      %v2367 = vpack.c.b16 %v2348, %v2347
      %v2368 = vpack.c.b16 %v2350, %v2349
      %v2369 = vpack.c.b16 %v2352, %v2351
      %v2370 = vpack.c.b16 %v2354, %v2353
      %v2403 = vunpack.c.l.b16 %v2275
      %v2404 = vunpack.c.l.b16 %v2276
      %v2405 = vunpack.c.l.b16 %v2277
      %v2406 = vunpack.c.l.b16 %v2278
      %v2407 = vunpack.c.l.b16 %v2279
      %v2408 = vunpack.c.l.b16 %v2280
      %v2409 = vunpack.c.l.b16 %v2281
      %v2410 = vunpack.c.l.b16 %v2282
      %v2411 = vunpack.c.l.b16 %v2283
      %v2412 = vunpack.c.l.b16 %v2284
      %v2413 = vunpack.c.l.b16 %v2285
      %v2414 = vunpack.c.l.b16 %v2286
      %v2415 = vunpack.c.l.b16 %v2287
      %v2416 = vunpack.c.l.b16 %v2288
      %v2417 = vunpack.c.l.b16 %v2289
      %v2418 = vunpack.c.l.b16 %v2290
      %v2419 = vpack.c.b16 %v2404, %v2403
      %v2420 = vpack.c.b16 %v2406, %v2405
      %v2421 = vpack.c.b16 %v2408, %v2407
      %v2422 = vpack.c.b16 %v2410, %v2409
      %v2423 = vpack.c.b16 %v2412, %v2411
      %v2424 = vpack.c.b16 %v2414, %v2413
      %v2425 = vpack.c.b16 %v2416, %v2415
      %v2426 = vpack.c.b16 %v2418, %v2417
      %2435 = vmatprep.subr.bf16.mxu0 0
      %2436 = vmatpush1.bf16.msra.mxu0 %v2426
      %2437 = vmatprep.subr.bf16.mxu0 0
      %2438 = vmatpush1.bf16.msra.mxu0 %v2425
      %2439 = vmatprep.subr.bf16.mxu0 0
      %2440 = vmatpush1.bf16.msra.mxu0 %v2424
      %2441 = vmatprep.subr.bf16.mxu0 0
      %2442 = vmatpush1.bf16.msra.mxu0 %v2423
      %2443 = vmatprep.subr.bf16.mxu0 0
      %2444 = vmatpush1.bf16.msra.mxu0 %v2422
      %2445 = vmatprep.subr.bf16.mxu0 0
      %2446 = vmatpush1.bf16.msra.mxu0 %v2421
      %2447 = vmatprep.subr.bf16.mxu0 0
      %2448 = vmatpush1.bf16.msra.mxu0 %v2420
      %2449 = vmatprep.subr.bf16.mxu0 0
      %2450 = vmatpush1.bf16.msra.mxu0 %v2419
      %2451 = vmatprep.subr.bf16.mxu0 0
      %2452 = vmatpush2.bf16.msra.mxu0 0
      %2453 = vmatprep.subr.bf16.mxu0 0
      %2454 = vmatpush2.bf16.msra.mxu0 0
      %2455 = vmatprep.subr.bf16.mxu0 0
      %2456 = vmatpush2.bf16.msra.mxu0 0
      %2457 = vmatprep.subr.bf16.mxu0 0
      %2458 = vmatpush2.bf16.msra.mxu0 0
      %2459 = vmatprep.subr.bf16.mxu0 0
      %2460 = vmatpush2.bf16.msra.mxu0 0
      %2461 = vmatprep.subr.bf16.mxu0 0
      %2462 = vmatpush2.bf16.msra.mxu0 0
      %2463 = vmatprep.subr.bf16.mxu0 0
      %2464 = vmatpush2.bf16.msra.mxu0 0
      %2465 = vmatprep.subr.bf16.mxu0 0
      %2466 = vmatpush2.bf16.msra.mxu0 0
      %2467 = vmatprep.mubr.bf16.mxu0 0
      %2468 = vmatmul.mubr.bf16.gmra.mxu0 %v2355
      %v2469 = vpop.f32.mrf.mxu0
      %v2470 = vadd.f32 0.0, %v2469
      %v2471 = vpop.f32.mrf.mxu0
      %v2472 = vpop.f32.mrf.mxu0
      %v2473 = vadd.f32 0.0, %v2472
      %v2474 = vpop.f32.mrf.mxu0
      %2475 = vmatprep.mubr.bf16.mxu0 0
      %2476 = vmatmul.mubr.bf16.gmra.mxu0 %v2356
      %v2477 = vpop.f32.mrf.mxu0
      %v2478 = vadd.f32 0.0, %v2477
      %v2479 = vpop.f32.mrf.mxu0
      %v2480 = vpop.f32.mrf.mxu0
      %v2481 = vadd.f32 0.0, %v2480
      %v2482 = vpop.f32.mrf.mxu0
      %2483 = vmatprep.mubr.bf16.mxu0 0
      %2484 = vmatmul.mubr.bf16.gmra.mxu0 %v2357
      %v2485 = vpop.f32.mrf.mxu0
      %v2486 = vadd.f32 0.0, %v2485
      %v2487 = vpop.f32.mrf.mxu0
      %v2488 = vpop.f32.mrf.mxu0
      %v2489 = vadd.f32 0.0, %v2488
      %v2490 = vpop.f32.mrf.mxu0
      %2491 = vmatprep.mubr.bf16.mxu0 0
      %2492 = vmatmul.mubr.bf16.gmra.mxu0 %v2358
      %v2493 = vpop.f32.mrf.mxu0
      %v2494 = vadd.f32 0.0, %v2493
      %v2495 = vpop.f32.mrf.mxu0
      %v2496 = vpop.f32.mrf.mxu0
      %v2497 = vadd.f32 0.0, %v2496
      %v2498 = vpop.f32.mrf.mxu0
      %2499 = vmatprep.mubr.bf16.mxu0 0
      %2500 = vmatmul.mubr.bf16.gmra.mxu0 %v2359
      %v2501 = vpop.f32.mrf.mxu0
      %v2502 = vadd.f32 0.0, %v2501
      %v2503 = vpop.f32.mrf.mxu0
      %v2504 = vpop.f32.mrf.mxu0
      %v2505 = vadd.f32 0.0, %v2504
      %v2506 = vpop.f32.mrf.mxu0
      %2507 = vmatprep.mubr.bf16.mxu0 0
      %2508 = vmatmul.mubr.bf16.gmra.mxu0 %v2360
      %v2509 = vpop.f32.mrf.mxu0
      %v2510 = vadd.f32 0.0, %v2509
      %v2511 = vpop.f32.mrf.mxu0
      %v2512 = vpop.f32.mrf.mxu0
      %v2513 = vadd.f32 0.0, %v2512
      %v2514 = vpop.f32.mrf.mxu0
      %2515 = vmatprep.mubr.bf16.mxu0 0
      %2516 = vmatmul.mubr.bf16.gmra.mxu0 %v2361
      %v2517 = vpop.f32.mrf.mxu0
      %v2518 = vadd.f32 0.0, %v2517
      %v2519 = vpop.f32.mrf.mxu0
      %v2520 = vpop.f32.mrf.mxu0
      %v2521 = vadd.f32 0.0, %v2520
      %v2522 = vpop.f32.mrf.mxu0
      %2523 = vmatprep.mubr.bf16.mxu0 0
      %2524 = vmatmul.mubr.bf16.gmra.mxu0 %v2362
      %v2525 = vpop.f32.mrf.mxu0
      %v2526 = vadd.f32 0.0, %v2525
      %v2527 = vpop.f32.mrf.mxu0
      %v2528 = vpop.f32.mrf.mxu0
      %v2529 = vadd.f32 0.0, %v2528
      %v2530 = vpop.f32.mrf.mxu0
      %2531 = vmatprep.mubr.bf16.mxu0 0
      %2532 = vmatmul.mubr.bf16.gmra.mxu0 %v2363
      %v2533 = vpop.f32.mrf.mxu0
      %v2534 = vadd.f32 0.0, %v2533
      %v2535 = vpop.f32.mrf.mxu0
      %v2536 = vpop.f32.mrf.mxu0
      %v2537 = vadd.f32 0.0, %v2536
      %v2538 = vpop.f32.mrf.mxu0
      %2539 = vmatprep.mubr.bf16.mxu0 0
      %2540 = vmatmul.mubr.bf16.gmra.mxu0 %v2364
      %v2541 = vpop.f32.mrf.mxu0
      %v2542 = vadd.f32 0.0, %v2541
      %v2543 = vpop.f32.mrf.mxu0
      %v2544 = vpop.f32.mrf.mxu0
      %v2545 = vadd.f32 0.0, %v2544
      %v2546 = vpop.f32.mrf.mxu0
      %2547 = vmatprep.mubr.bf16.mxu0 0
      %2548 = vmatmul.mubr.bf16.gmra.mxu0 %v2365
      %v2549 = vpop.f32.mrf.mxu0
      %v2550 = vadd.f32 0.0, %v2549
      %v2551 = vpop.f32.mrf.mxu0
      %v2552 = vpop.f32.mrf.mxu0
      %v2553 = vadd.f32 0.0, %v2552
      %v2554 = vpop.f32.mrf.mxu0
      %2555 = vmatprep.mubr.bf16.mxu0 0
      %2556 = vmatmul.mubr.bf16.gmra.mxu0 %v2366
      %v2557 = vpop.f32.mrf.mxu0
      %v2558 = vadd.f32 0.0, %v2557
      %v2559 = vpop.f32.mrf.mxu0
      %v2560 = vpop.f32.mrf.mxu0
      %v2561 = vadd.f32 0.0, %v2560
      %v2562 = vpop.f32.mrf.mxu0
      %2563 = vmatprep.mubr.bf16.mxu0 0
      %2564 = vmatmul.mubr.bf16.gmra.mxu0 %v2367
      %v2565 = vpop.f32.mrf.mxu0
      %v2566 = vadd.f32 0.0, %v2565
      %v2567 = vpop.f32.mrf.mxu0
      %v2568 = vpop.f32.mrf.mxu0
      %v2569 = vadd.f32 0.0, %v2568
      %v2570 = vpop.f32.mrf.mxu0
      %2571 = vmatprep.mubr.bf16.mxu0 0
      %2572 = vmatmul.mubr.bf16.gmra.mxu0 %v2368
      %v2573 = vpop.f32.mrf.mxu0
      %v2574 = vadd.f32 0.0, %v2573
      %v2575 = vpop.f32.mrf.mxu0
      %v2576 = vpop.f32.mrf.mxu0
      %v2577 = vadd.f32 0.0, %v2576
      %v2578 = vpop.f32.mrf.mxu0
      %2579 = vmatprep.mubr.bf16.mxu0 0
      %2580 = vmatmul.mubr.bf16.gmra.mxu0 %v2369
      %v2581 = vpop.f32.mrf.mxu0
      %v2582 = vadd.f32 0.0, %v2581
      %v2583 = vpop.f32.mrf.mxu0
      %v2584 = vpop.f32.mrf.mxu0
      %v2585 = vadd.f32 0.0, %v2584
      %v2586 = vpop.f32.mrf.mxu0
      %2587 = vmatprep.mubr.bf16.mxu0 0
      %2588 = vmatmul.mubr.bf16.gmra.mxu0 %v2370
      %v2589 = vpop.f32.mrf.mxu0
      %v2590 = vadd.f32 0.0, %v2589
      %v2591 = vpop.f32.mrf.mxu0
      %v2592 = vpop.f32.mrf.mxu0
      %v2593 = vadd.f32 0.0, %v2592
      %v2594 = vpop.f32.mrf.mxu0
      %2595 = vdwg.mxu0
      %v2596 = vld [vmem:[%s4] sm:$0x1]
      %v2598 = vlaneseq
      %v2599 = vshrl.u32 %v2598, 7
      %v2600 = vsub.s32 0, %v2599
      %v2601 = vrot.slane %v2596, %v2600
      %v2603 = vmul.f32 %v2470, %v2601
      %v2604 = vmul.f32 %v2473, %v2601
      %v2605 = vmul.f32 %v2478, %v2601
      %v2606 = vmul.f32 %v2481, %v2601
      %v2607 = vmul.f32 %v2486, %v2601
      %v2608 = vmul.f32 %v2489, %v2601
      %v2609 = vmul.f32 %v2494, %v2601
      %v2610 = vmul.f32 %v2497, %v2601
      %v2611 = vmul.f32 %v2502, %v2601
      %v2612 = vmul.f32 %v2505, %v2601
      %v2613 = vmul.f32 %v2510, %v2601
      %v2614 = vmul.f32 %v2513, %v2601
      %v2615 = vmul.f32 %v2518, %v2601
      %v2616 = vmul.f32 %v2521, %v2601
      %v2617 = vmul.f32 %v2526, %v2601
      %v2618 = vmul.f32 %v2529, %v2601
      %v2619 = vmul.f32 %v2534, %v2601
      %v2620 = vmul.f32 %v2537, %v2601
      %v2621 = vmul.f32 %v2542, %v2601
      %v2622 = vmul.f32 %v2545, %v2601
      %v2623 = vmul.f32 %v2550, %v2601
      %v2624 = vmul.f32 %v2553, %v2601
      %v2625 = vmul.f32 %v2558, %v2601
      %v2626 = vmul.f32 %v2561, %v2601
      %v2627 = vmul.f32 %v2566, %v2601
      %v2628 = vmul.f32 %v2569, %v2601
      %v2629 = vmul.f32 %v2574, %v2601
      %v2630 = vmul.f32 %v2577, %v2601
      %v2631 = vmul.f32 %v2582, %v2601
      %v2632 = vmul.f32 %v2585, %v2601
      %v2633 = vmul.f32 %v2590, %v2601
      %v2634 = vmul.f32 %v2593, %v2601
      %v2635 = vld [vmem:[%s5] sm:$0x1]
      %v2637 = vlaneseq
      %v2638 = vshrl.u32 %v2637, 7
      %v2639 = vsub.s32 0, %v2638
      %v2640 = vrot.slane %v2635, %v2639
      %v2642 = vadd.f32 %v2603, %v2640
      %v2643 = vadd.f32 %v2604, %v2640
      %v2644 = vadd.f32 %v2605, %v2640
      %v2645 = vadd.f32 %v2606, %v2640
      %v2646 = vadd.f32 %v2607, %v2640
      %v2647 = vadd.f32 %v2608, %v2640
      %v2648 = vadd.f32 %v2609, %v2640
      %v2649 = vadd.f32 %v2610, %v2640
      %v2650 = vadd.f32 %v2611, %v2640
      %v2651 = vadd.f32 %v2612, %v2640
      %v2652 = vadd.f32 %v2613, %v2640
      %v2653 = vadd.f32 %v2614, %v2640
      %v2654 = vadd.f32 %v2615, %v2640
      %v2655 = vadd.f32 %v2616, %v2640
      %v2656 = vadd.f32 %v2617, %v2640
      %v2657 = vadd.f32 %v2618, %v2640
      %v2658 = vadd.f32 %v2619, %v2640
      %v2659 = vadd.f32 %v2620, %v2640
      %v2660 = vadd.f32 %v2621, %v2640
      %v2661 = vadd.f32 %v2622, %v2640
      %v2662 = vadd.f32 %v2623, %v2640
      %v2663 = vadd.f32 %v2624, %v2640
      %v2664 = vadd.f32 %v2625, %v2640
      %v2665 = vadd.f32 %v2626, %v2640
      %v2666 = vadd.f32 %v2627, %v2640
      %v2667 = vadd.f32 %v2628, %v2640
      %v2668 = vadd.f32 %v2629, %v2640
      %v2669 = vadd.f32 %v2630, %v2640
      %v2670 = vadd.f32 %v2631, %v2640
      %v2671 = vadd.f32 %v2632, %v2640
      %v2672 = vadd.f32 %v2633, %v2640
      %v2673 = vadd.f32 %v2634, %v2640
      %v2674 = vmax.f32 %v2642, 0.0
      %v2675 = vmax.f32 %v2643, 0.0
      %v2676 = vmax.f32 %v2644, 0.0
      %v2677 = vmax.f32 %v2645, 0.0
      %v2678 = vmax.f32 %v2646, 0.0
      %v2679 = vmax.f32 %v2647, 0.0
      %v2680 = vmax.f32 %v2648, 0.0
      %v2681 = vmax.f32 %v2649, 0.0
      %v2682 = vmax.f32 %v2650, 0.0
      %v2683 = vmax.f32 %v2651, 0.0
      %v2684 = vmax.f32 %v2652, 0.0
      %v2685 = vmax.f32 %v2653, 0.0
      %v2686 = vmax.f32 %v2654, 0.0
      %v2687 = vmax.f32 %v2655, 0.0
      %v2688 = vmax.f32 %v2656, 0.0
      %v2689 = vmax.f32 %v2657, 0.0
      %v2690 = vmax.f32 %v2658, 0.0
      %v2691 = vmax.f32 %v2659, 0.0
      %v2692 = vmax.f32 %v2660, 0.0
      %v2693 = vmax.f32 %v2661, 0.0
      %v2694 = vmax.f32 %v2662, 0.0
      %v2695 = vmax.f32 %v2663, 0.0
      %v2696 = vmax.f32 %v2664, 0.0
      %v2697 = vmax.f32 %v2665, 0.0
      %v2698 = vmax.f32 %v2666, 0.0
      %v2699 = vmax.f32 %v2667, 0.0
      %v2700 = vmax.f32 %v2668, 0.0
      %v2701 = vmax.f32 %v2669, 0.0
      %v2702 = vmax.f32 %v2670, 0.0
      %v2703 = vmax.f32 %v2671, 0.0
      %v2704 = vmax.f32 %v2672, 0.0
      %v2705 = vmax.f32 %v2673, 0.0
      %v2706 = vpack.c.bf16 %v2675, %v2674
      %v2707 = vpack.c.bf16 %v2677, %v2676
      %v2708 = vpack.c.bf16 %v2679, %v2678
      %v2709 = vpack.c.bf16 %v2681, %v2680
      %v2710 = vpack.c.bf16 %v2683, %v2682
      %v2711 = vpack.c.bf16 %v2685, %v2684
      %v2712 = vpack.c.bf16 %v2687, %v2686
      %v2713 = vpack.c.bf16 %v2689, %v2688
      %v2714 = vpack.c.bf16 %v2691, %v2690
      %v2715 = vpack.c.bf16 %v2693, %v2692
      %v2716 = vpack.c.bf16 %v2695, %v2694
      %v2717 = vpack.c.bf16 %v2697, %v2696
      %v2718 = vpack.c.bf16 %v2699, %v2698
      %v2719 = vpack.c.bf16 %v2701, %v2700
      %v2720 = vpack.c.bf16 %v2703, %v2702
      %v2721 = vpack.c.bf16 %v2705, %v2704
      %v2737 = vunpack.c.l.b16 %v2706
      %v2738 = vunpack.c.h.b16 %v2706
      %v2739 = vunpack.c.l.b16 %v2707
      %v2740 = vunpack.c.h.b16 %v2707
      %v2741 = vunpack.c.l.b16 %v2708
      %v2742 = vunpack.c.h.b16 %v2708
      %v2743 = vunpack.c.l.b16 %v2709
      %v2744 = vunpack.c.h.b16 %v2709
      %v2745 = vunpack.c.l.b16 %v2710
      %v2746 = vunpack.c.h.b16 %v2710
      %v2747 = vunpack.c.l.b16 %v2711
      %v2748 = vunpack.c.h.b16 %v2711
      %v2749 = vunpack.c.l.b16 %v2712
      %v2750 = vunpack.c.h.b16 %v2712
      %v2751 = vunpack.c.l.b16 %v2713
      %v2752 = vunpack.c.h.b16 %v2713
      %v2753 = vunpack.c.l.b16 %v2714
      %v2754 = vunpack.c.h.b16 %v2714
      %v2755 = vunpack.c.l.b16 %v2715
      %v2756 = vunpack.c.h.b16 %v2715
      %v2757 = vunpack.c.l.b16 %v2716
      %v2758 = vunpack.c.h.b16 %v2716
      %v2759 = vunpack.c.l.b16 %v2717
      %v2760 = vunpack.c.h.b16 %v2717
      %v2761 = vunpack.c.l.b16 %v2718
      %v2762 = vunpack.c.h.b16 %v2718
      %v2763 = vunpack.c.l.b16 %v2719
      %v2764 = vunpack.c.h.b16 %v2719
      %v2765 = vunpack.c.l.b16 %v2720
      %v2766 = vunpack.c.h.b16 %v2720
      %v2767 = vpack.c.b16 %v2737, %v2737
      %v2768 = vpack.c.b16 %v2738, %v2738
      %v2769 = vpack.c.b16 %v2739, %v2739
      %v2770 = vpack.c.b16 %v2740, %v2740
      %v2771 = vpack.c.b16 %v2741, %v2741
      %v2772 = vpack.c.b16 %v2742, %v2742
      %v2773 = vpack.c.b16 %v2743, %v2743
      %v2774 = vpack.c.b16 %v2744, %v2744
      %v2775 = vpack.c.b16 %v2745, %v2745
      %v2776 = vpack.c.b16 %v2746, %v2746
      %v2777 = vpack.c.b16 %v2747, %v2747
      %v2778 = vpack.c.b16 %v2748, %v2748
      %v2779 = vpack.c.b16 %v2749, %v2749
      %v2780 = vpack.c.b16 %v2750, %v2750
      %v2781 = vpack.c.b16 %v2751, %v2751
      %v2782 = vpack.c.b16 %v2752, %v2752
      %v2783 = vpack.c.b16 %v2753, %v2753
      %v2784 = vpack.c.b16 %v2754, %v2754
      %v2785 = vpack.c.b16 %v2755, %v2755
      %v2786 = vpack.c.b16 %v2756, %v2756
      %v2787 = vpack.c.b16 %v2757, %v2757
      %v2788 = vpack.c.b16 %v2758, %v2758
      %v2789 = vpack.c.b16 %v2759, %v2759
      %v2790 = vpack.c.b16 %v2760, %v2760
      %v2791 = vpack.c.b16 %v2761, %v2761
      %v2792 = vpack.c.b16 %v2762, %v2762
      %v2793 = vpack.c.b16 %v2763, %v2763
      %v2794 = vpack.c.b16 %v2764, %v2764
      %v2795 = vpack.c.b16 %v2765, %v2765
      %v2796 = vpack.c.b16 %v2766, %v2766
      %v2798 = vshrl.u32 %v2767, 16
      %v2800 = vrot.slane %v2798, 7
      %v2801 = vshll.u32 %v2767, 16
      %v2803 = vor.u32 %v2800, %v2801
      %v2804 = vrot.slane %v2800, 4
      %v2806 = vshrl.u32 %v2768, 16
      %v2808 = vrot.slane %v2806, 7
      %v2809 = vshll.u32 %v2768, 16
      %v2811 = vor.u32 %v2808, %v2809
      %v2812 = vsel %vm583, %v2804, %v2811
      %v2814 = vshrl.u32 %v2769, 16
      %v2816 = vrot.slane %v2814, 7
      %v2817 = vshll.u32 %v2769, 16
      %v2819 = vor.u32 %v2816, %v2817
      %v2820 = vrot.slane %v2816, 4
      %v2822 = vshrl.u32 %v2770, 16
      %v2824 = vrot.slane %v2822, 7
      %v2825 = vshll.u32 %v2770, 16
      %v2827 = vor.u32 %v2824, %v2825
      %v2828 = vsel %vm583, %v2820, %v2827
      %v2830 = vshrl.u32 %v2771, 16
      %v2832 = vrot.slane %v2830, 7
      %v2833 = vshll.u32 %v2771, 16
      %v2835 = vor.u32 %v2832, %v2833
      %v2836 = vrot.slane %v2832, 4
      %v2838 = vshrl.u32 %v2772, 16
      %v2840 = vrot.slane %v2838, 7
      %v2841 = vshll.u32 %v2772, 16
      %v2843 = vor.u32 %v2840, %v2841
      %v2844 = vsel %vm583, %v2836, %v2843
      %v2846 = vshrl.u32 %v2773, 16
      %v2848 = vrot.slane %v2846, 7
      %v2849 = vshll.u32 %v2773, 16
      %v2851 = vor.u32 %v2848, %v2849
      %v2852 = vrot.slane %v2848, 4
      %v2854 = vshrl.u32 %v2774, 16
      %v2856 = vrot.slane %v2854, 7
      %v2857 = vshll.u32 %v2774, 16
      %v2859 = vor.u32 %v2856, %v2857
      %v2860 = vsel %vm583, %v2852, %v2859
      %v2862 = vshrl.u32 %v2775, 16
      %v2864 = vrot.slane %v2862, 7
      %v2865 = vshll.u32 %v2775, 16
      %v2867 = vor.u32 %v2864, %v2865
      %v2868 = vrot.slane %v2864, 4
      %v2870 = vshrl.u32 %v2776, 16
      %v2872 = vrot.slane %v2870, 7
      %v2873 = vshll.u32 %v2776, 16
      %v2875 = vor.u32 %v2872, %v2873
      %v2876 = vsel %vm583, %v2868, %v2875
      %v2878 = vshrl.u32 %v2777, 16
      %v2880 = vrot.slane %v2878, 7
      %v2881 = vshll.u32 %v2777, 16
      %v2883 = vor.u32 %v2880, %v2881
      %v2884 = vrot.slane %v2880, 4
      %v2886 = vshrl.u32 %v2778, 16
      %v2888 = vrot.slane %v2886, 7
      %v2889 = vshll.u32 %v2778, 16
      %v2891 = vor.u32 %v2888, %v2889
      %v2892 = vsel %vm583, %v2884, %v2891
      %v2894 = vshrl.u32 %v2779, 16
      %v2896 = vrot.slane %v2894, 7
      %v2897 = vshll.u32 %v2779, 16
      %v2899 = vor.u32 %v2896, %v2897
      %v2900 = vrot.slane %v2896, 4
      %v2902 = vshrl.u32 %v2780, 16
      %v2904 = vrot.slane %v2902, 7
      %v2905 = vshll.u32 %v2780, 16
      %v2907 = vor.u32 %v2904, %v2905
      %v2908 = vsel %vm583, %v2900, %v2907
      %v2910 = vshrl.u32 %v2781, 16
      %v2912 = vrot.slane %v2910, 7
      %v2913 = vshll.u32 %v2781, 16
      %v2915 = vor.u32 %v2912, %v2913
      %v2916 = vrot.slane %v2912, 4
      %v2918 = vshrl.u32 %v2782, 16
      %v2920 = vrot.slane %v2918, 7
      %v2921 = vshll.u32 %v2782, 16
      %v2923 = vor.u32 %v2920, %v2921
      %v2924 = vsel %vm583, %v2916, %v2923
      %v2926 = vshrl.u32 %v2783, 16
      %v2928 = vrot.slane %v2926, 7
      %v2929 = vshll.u32 %v2783, 16
      %v2931 = vor.u32 %v2928, %v2929
      %v2932 = vrot.slane %v2928, 4
      %v2934 = vshrl.u32 %v2784, 16
      %v2936 = vrot.slane %v2934, 7
      %v2937 = vshll.u32 %v2784, 16
      %v2939 = vor.u32 %v2936, %v2937
      %v2940 = vsel %vm583, %v2932, %v2939
      %v2942 = vshrl.u32 %v2785, 16
      %v2944 = vrot.slane %v2942, 7
      %v2945 = vshll.u32 %v2785, 16
      %v2947 = vor.u32 %v2944, %v2945
      %v2948 = vrot.slane %v2944, 4
      %v2950 = vshrl.u32 %v2786, 16
      %v2952 = vrot.slane %v2950, 7
      %v2953 = vshll.u32 %v2786, 16
      %v2955 = vor.u32 %v2952, %v2953
      %v2956 = vsel %vm583, %v2948, %v2955
      %v2958 = vshrl.u32 %v2787, 16
      %v2960 = vrot.slane %v2958, 7
      %v2961 = vshll.u32 %v2787, 16
      %v2963 = vor.u32 %v2960, %v2961
      %v2964 = vrot.slane %v2960, 4
      %v2966 = vshrl.u32 %v2788, 16
      %v2968 = vrot.slane %v2966, 7
      %v2969 = vshll.u32 %v2788, 16
      %v2971 = vor.u32 %v2968, %v2969
      %v2972 = vsel %vm583, %v2964, %v2971
      %v2974 = vshrl.u32 %v2789, 16
      %v2976 = vrot.slane %v2974, 7
      %v2977 = vshll.u32 %v2789, 16
      %v2979 = vor.u32 %v2976, %v2977
      %v2980 = vrot.slane %v2976, 4
      %v2982 = vshrl.u32 %v2790, 16
      %v2984 = vrot.slane %v2982, 7
      %v2985 = vshll.u32 %v2790, 16
      %v2987 = vor.u32 %v2984, %v2985
      %v2988 = vsel %vm583, %v2980, %v2987
      %v2990 = vshrl.u32 %v2791, 16
      %v2992 = vrot.slane %v2990, 7
      %v2993 = vshll.u32 %v2791, 16
      %v2995 = vor.u32 %v2992, %v2993
      %v2996 = vrot.slane %v2992, 4
      %v2998 = vshrl.u32 %v2792, 16
      %v3000 = vrot.slane %v2998, 7
      %v3001 = vshll.u32 %v2792, 16
      %v3003 = vor.u32 %v3000, %v3001
      %v3004 = vsel %vm583, %v2996, %v3003
      %v3006 = vshrl.u32 %v2793, 16
      %v3008 = vrot.slane %v3006, 7
      %v3009 = vshll.u32 %v2793, 16
      %v3011 = vor.u32 %v3008, %v3009
      %v3012 = vrot.slane %v3008, 4
      %v3014 = vshrl.u32 %v2794, 16
      %v3016 = vrot.slane %v3014, 7
      %v3017 = vshll.u32 %v2794, 16
      %v3019 = vor.u32 %v3016, %v3017
      %v3020 = vsel %vm583, %v3012, %v3019
      %v3022 = vshrl.u32 %v2795, 16
      %v3024 = vrot.slane %v3022, 7
      %v3025 = vshll.u32 %v2795, 16
      %v3027 = vor.u32 %v3024, %v3025
      %v3028 = vrot.slane %v3024, 4
      %v3030 = vshrl.u32 %v2796, 16
      %v3032 = vrot.slane %v3030, 7
      %v3033 = vshll.u32 %v2796, 16
      %v3035 = vor.u32 %v3032, %v3033
      %v3036 = vsel %vm583, %v3028, %v3035
      %s3067 = scalar_lea.vmem [#allocation3], 8
      %vm3068 = vcmask 60416
      %vm3069 = vmand %vm3068, %vm856
      %v3070 = vld [vmem:[%s3067] sm:$0xf]
      %v3071 = vsel %vm3069, %v2803, %v3070
      %3072 = vst [vmem:[%s3067] sm:$0xf] %v3071
      %vm3073 = vcmask 60416
      %3074 = vst.msk [vmem:[%s3067 + $0x4] sm:$0xf] %vm3073, %v2812
      %v3075 = vld [vmem:[%s3067 + $0x8] sm:$0xf]
      %v3076 = vsel %vm3069, %v2819, %v3075
      %3077 = vst [vmem:[%s3067 + $0x8] sm:$0xf] %v3076
      %3078 = vst.msk [vmem:[%s3067 + $0xc] sm:$0xf] %vm3073, %v2828
      %v3079 = vld [vmem:[%s3067 + $0x10] sm:$0xf]
      %v3080 = vsel %vm3069, %v2835, %v3079
      %3081 = vst [vmem:[%s3067 + $0x10] sm:$0xf] %v3080
      %3082 = vst.msk [vmem:[%s3067 + $0x14] sm:$0xf] %vm3073, %v2844
      %v3083 = vld [vmem:[%s3067 + $0x18] sm:$0xf]
      %v3084 = vsel %vm3069, %v2851, %v3083
      %3085 = vst [vmem:[%s3067 + $0x18] sm:$0xf] %v3084
      %3086 = vst.msk [vmem:[%s3067 + $0x1c] sm:$0xf] %vm3073, %v2860
      %v3087 = vld [vmem:[%s3067 + $0x20] sm:$0xf]
      %v3088 = vsel %vm3069, %v2867, %v3087
      %3089 = vst [vmem:[%s3067 + $0x20] sm:$0xf] %v3088
      %3090 = vst.msk [vmem:[%s3067 + $0x24] sm:$0xf] %vm3073, %v2876
      %v3091 = vld [vmem:[%s3067 + $0x28] sm:$0xf]
      %v3092 = vsel %vm3069, %v2883, %v3091
      %3093 = vst [vmem:[%s3067 + $0x28] sm:$0xf] %v3092
      %3094 = vst.msk [vmem:[%s3067 + $0x2c] sm:$0xf] %vm3073, %v2892
      %v3095 = vld [vmem:[%s3067 + $0x30] sm:$0xf]
      %v3096 = vsel %vm3069, %v2899, %v3095
      %3097 = vst [vmem:[%s3067 + $0x30] sm:$0xf] %v3096
      %3098 = vst.msk [vmem:[%s3067 + $0x34] sm:$0xf] %vm3073, %v2908
      %v3099 = vld [vmem:[%s3067 + $0x38] sm:$0xf]
      %v3100 = vsel %vm3069, %v2915, %v3099
      %3101 = vst [vmem:[%s3067 + $0x38] sm:$0xf] %v3100
      %3102 = vst.msk [vmem:[%s3067 + $0x3c] sm:$0xf] %vm3073, %v2924
      %v3103 = vld [vmem:[%s3067 + $0x40] sm:$0xf]
      %v3104 = vsel %vm3069, %v2931, %v3103
      %3105 = vst [vmem:[%s3067 + $0x40] sm:$0xf] %v3104
      %3106 = vst.msk [vmem:[%s3067 + $0x44] sm:$0xf] %vm3073, %v2940
      %v3107 = vld [vmem:[%s3067 + $0x48] sm:$0xf]
      %v3108 = vsel %vm3069, %v2947, %v3107
      %3109 = vst [vmem:[%s3067 + $0x48] sm:$0xf] %v3108
      %3110 = vst.msk [vmem:[%s3067 + $0x4c] sm:$0xf] %vm3073, %v2956
      %v3111 = vld [vmem:[%s3067 + $0x50] sm:$0xf]
      %v3112 = vsel %vm3069, %v2963, %v3111
      %3113 = vst [vmem:[%s3067 + $0x50] sm:$0xf] %v3112
      %3114 = vst.msk [vmem:[%s3067 + $0x54] sm:$0xf] %vm3073, %v2972
      %v3115 = vld [vmem:[%s3067 + $0x58] sm:$0xf]
      %v3116 = vsel %vm3069, %v2979, %v3115
      %3117 = vst [vmem:[%s3067 + $0x58] sm:$0xf] %v3116
      %3118 = vst.msk [vmem:[%s3067 + $0x5c] sm:$0xf] %vm3073, %v2988
      %v3119 = vld [vmem:[%s3067 + $0x60] sm:$0xf]
      %v3120 = vsel %vm3069, %v2995, %v3119
      %3121 = vst [vmem:[%s3067 + $0x60] sm:$0xf] %v3120
      %3122 = vst.msk [vmem:[%s3067 + $0x64] sm:$0xf] %vm3073, %v3004
      %v3123 = vld [vmem:[%s3067 + $0x68] sm:$0xf]
      %v3124 = vsel %vm3069, %v3011, %v3123
      %3125 = vst [vmem:[%s3067 + $0x68] sm:$0xf] %v3124
      %3126 = vst.msk [vmem:[%s3067 + $0x6c] sm:$0xf] %vm3073, %v3020
      %v3127 = vld [vmem:[%s3067 + $0x70] sm:$0xf]
      %v3128 = vsel %vm3069, %v3027, %v3127
      %3129 = vst [vmem:[%s3067 + $0x70] sm:$0xf] %v3128
      %3130 = vst.msk [vmem:[%s3067 + $0x74] sm:$0xf] %vm3073, %v3036
      %3131 = vrot.lane.b32.xlu0 %v2767, 8
      %v3132 = vpop.permute.xlu0 %3131
      %3133 = vrot.lane.b32.xlu0 %v2768, 8
      %v3134 = vpop.permute.xlu0 %3133
      %3135 = vrot.lane.b32.xlu0 %v2769, 8
      %v3136 = vpop.permute.xlu0 %3135
      %3137 = vrot.lane.b32.xlu0 %v2770, 8
      %v3138 = vpop.permute.xlu0 %3137
      %3139 = vrot.lane.b32.xlu0 %v2771, 8
      %v3140 = vpop.permute.xlu0 %3139
      %3141 = vrot.lane.b32.xlu0 %v2772, 8
      %v3142 = vpop.permute.xlu0 %3141
      %3143 = vrot.lane.b32.xlu0 %v2773, 8
      %v3144 = vpop.permute.xlu0 %3143
      %3145 = vrot.lane.b32.xlu0 %v2774, 8
      %v3146 = vpop.permute.xlu0 %3145
      %3147 = vrot.lane.b32.xlu0 %v2775, 8
      %v3148 = vpop.permute.xlu0 %3147
      %3149 = vrot.lane.b32.xlu0 %v2776, 8
      %v3150 = vpop.permute.xlu0 %3149
      %3151 = vrot.lane.b32.xlu0 %v2777, 8
      %v3152 = vpop.permute.xlu0 %3151
      %3153 = vrot.lane.b32.xlu0 %v2778, 8
      %v3154 = vpop.permute.xlu0 %3153
      %3155 = vrot.lane.b32.xlu0 %v2779, 8
      %v3156 = vpop.permute.xlu0 %3155
      %3157 = vrot.lane.b32.xlu0 %v2780, 8
      %v3158 = vpop.permute.xlu0 %3157
      %3159 = vrot.lane.b32.xlu0 %v2781, 8
      %v3160 = vpop.permute.xlu0 %3159
      %3161 = vrot.lane.b32.xlu0 %v2782, 8
      %v3162 = vpop.permute.xlu0 %3161
      %3163 = vrot.lane.b32.xlu0 %v2783, 8
      %v3164 = vpop.permute.xlu0 %3163
      %3165 = vrot.lane.b32.xlu0 %v2784, 8
      %v3166 = vpop.permute.xlu0 %3165
      %3167 = vrot.lane.b32.xlu0 %v2785, 8
      %v3168 = vpop.permute.xlu0 %3167
      %3169 = vrot.lane.b32.xlu0 %v2786, 8
      %v3170 = vpop.permute.xlu0 %3169
      %3171 = vrot.lane.b32.xlu0 %v2787, 8
      %v3172 = vpop.permute.xlu0 %3171
      %3173 = vrot.lane.b32.xlu0 %v2788, 8
      %v3174 = vpop.permute.xlu0 %3173
      %3175 = vrot.lane.b32.xlu0 %v2789, 8
      %v3176 = vpop.permute.xlu0 %3175
      %3177 = vrot.lane.b32.xlu0 %v2790, 8
      %v3178 = vpop.permute.xlu0 %3177
      %3179 = vrot.lane.b32.xlu0 %v2791, 8
      %v3180 = vpop.permute.xlu0 %3179
      %3181 = vrot.lane.b32.xlu0 %v2792, 8
      %v3182 = vpop.permute.xlu0 %3181
      %3183 = vrot.lane.b32.xlu0 %v2793, 8
      %v3184 = vpop.permute.xlu0 %3183
      %3185 = vrot.lane.b32.xlu0 %v2794, 8
      %v3186 = vpop.permute.xlu0 %3185
      %3187 = vrot.lane.b32.xlu0 %v2795, 8
      %v3188 = vpop.permute.xlu0 %3187
      %3189 = vrot.lane.b32.xlu0 %v2796, 8
      %v3190 = vpop.permute.xlu0 %3189
      %vm3221 = vcmask 126016
      %3222 = vst.msk [vmem:[%s3067] sm:$0xf] %vm3221, %v3132
      %3223 = vst.msk [vmem:[%s3067 + $0x4] sm:$0xf] %vm3221, %v3134
      %3224 = vst.msk [vmem:[%s3067 + $0x8] sm:$0xf] %vm3221, %v3136
      %3225 = vst.msk [vmem:[%s3067 + $0xc] sm:$0xf] %vm3221, %v3138
      %3226 = vst.msk [vmem:[%s3067 + $0x10] sm:$0xf] %vm3221, %v3140
      %3227 = vst.msk [vmem:[%s3067 + $0x14] sm:$0xf] %vm3221, %v3142
      %3228 = vst.msk [vmem:[%s3067 + $0x18] sm:$0xf] %vm3221, %v3144
      %3229 = vst.msk [vmem:[%s3067 + $0x1c] sm:$0xf] %vm3221, %v3146
      %3230 = vst.msk [vmem:[%s3067 + $0x20] sm:$0xf] %vm3221, %v3148
      %3231 = vst.msk [vmem:[%s3067 + $0x24] sm:$0xf] %vm3221, %v3150
      %3232 = vst.msk [vmem:[%s3067 + $0x28] sm:$0xf] %vm3221, %v3152
      %3233 = vst.msk [vmem:[%s3067 + $0x2c] sm:$0xf] %vm3221, %v3154
      %3234 = vst.msk [vmem:[%s3067 + $0x30] sm:$0xf] %vm3221, %v3156
      %3235 = vst.msk [vmem:[%s3067 + $0x34] sm:$0xf] %vm3221, %v3158
      %3236 = vst.msk [vmem:[%s3067 + $0x38] sm:$0xf] %vm3221, %v3160
      %3237 = vst.msk [vmem:[%s3067 + $0x3c] sm:$0xf] %vm3221, %v3162
      %3238 = vst.msk [vmem:[%s3067 + $0x40] sm:$0xf] %vm3221, %v3164
      %3239 = vst.msk [vmem:[%s3067 + $0x44] sm:$0xf] %vm3221, %v3166
      %3240 = vst.msk [vmem:[%s3067 + $0x48] sm:$0xf] %vm3221, %v3168
      %3241 = vst.msk [vmem:[%s3067 + $0x4c] sm:$0xf] %vm3221, %v3170
      %3242 = vst.msk [vmem:[%s3067 + $0x50] sm:$0xf] %vm3221, %v3172
      %3243 = vst.msk [vmem:[%s3067 + $0x54] sm:$0xf] %vm3221, %v3174
      %3244 = vst.msk [vmem:[%s3067 + $0x58] sm:$0xf] %vm3221, %v3176
      %3245 = vst.msk [vmem:[%s3067 + $0x5c] sm:$0xf] %vm3221, %v3178
      %3246 = vst.msk [vmem:[%s3067 + $0x60] sm:$0xf] %vm3221, %v3180
      %3247 = vst.msk [vmem:[%s3067 + $0x64] sm:$0xf] %vm3221, %v3182
      %3248 = vst.msk [vmem:[%s3067 + $0x68] sm:$0xf] %vm3221, %v3184
      %3249 = vst.msk [vmem:[%s3067 + $0x6c] sm:$0xf] %vm3221, %v3186
      %3250 = vst.msk [vmem:[%s3067 + $0x70] sm:$0xf] %vm3221, %v3188
      %3251 = vst.msk [vmem:[%s3067 + $0x74] sm:$0xf] %vm3221, %v3190
      %v3252 = vrot.slane %v2798, 4
      %v3253 = vrot.slane %v2801, 5
      %v3254 = vor.u32 %v3252, %v3253
      %v3255 = vrot.slane %v3254, 4
      %v3256 = vrot.slane %v2809, 5
      %v3257 = vsel %vm1042, %v3255, %v3256
      %v3258 = vrot.slane %v2806, 4
      %v3259 = vor.u32 %v3258, %v3256
      %v3260 = vrot.slane %v3259, 4
      %v3261 = vrot.slane %v2814, 4
      %v3262 = vrot.slane %v2817, 5
      %v3263 = vor.u32 %v3261, %v3262
      %v3264 = vrot.slane %v3263, 4
      %v3265 = vrot.slane %v2825, 5
      %v3266 = vsel %vm1042, %v3264, %v3265
      %v3267 = vrot.slane %v2822, 4
      %v3268 = vor.u32 %v3267, %v3265
      %v3269 = vrot.slane %v3268, 4
      %v3270 = vrot.slane %v2830, 4
      %v3271 = vrot.slane %v2833, 5
      %v3272 = vor.u32 %v3270, %v3271
      %v3273 = vrot.slane %v3272, 4
      %v3274 = vrot.slane %v2841, 5
      %v3275 = vsel %vm1042, %v3273, %v3274
      %v3276 = vrot.slane %v2838, 4
      %v3277 = vor.u32 %v3276, %v3274
      %v3278 = vrot.slane %v3277, 4
      %v3279 = vrot.slane %v2846, 4
      %v3280 = vrot.slane %v2849, 5
      %v3281 = vor.u32 %v3279, %v3280
      %v3282 = vrot.slane %v3281, 4
      %v3283 = vrot.slane %v2857, 5
      %v3284 = vsel %vm1042, %v3282, %v3283
      %v3285 = vrot.slane %v2854, 4
      %v3286 = vor.u32 %v3285, %v3283
      %v3287 = vrot.slane %v3286, 4
      %v3288 = vrot.slane %v2862, 4
      %v3289 = vrot.slane %v2865, 5
      %v3290 = vor.u32 %v3288, %v3289
      %v3291 = vrot.slane %v3290, 4
      %v3292 = vrot.slane %v2873, 5
      %v3293 = vsel %vm1042, %v3291, %v3292
      %v3294 = vrot.slane %v2870, 4
      %v3295 = vor.u32 %v3294, %v3292
      %v3296 = vrot.slane %v3295, 4
      %v3297 = vrot.slane %v2878, 4
      %v3298 = vrot.slane %v2881, 5
      %v3299 = vor.u32 %v3297, %v3298
      %v3300 = vrot.slane %v3299, 4
      %v3301 = vrot.slane %v2889, 5
      %v3302 = vsel %vm1042, %v3300, %v3301
      %v3303 = vrot.slane %v2886, 4
      %v3304 = vor.u32 %v3303, %v3301
      %v3305 = vrot.slane %v3304, 4
      %v3306 = vrot.slane %v2894, 4
      %v3307 = vrot.slane %v2897, 5
      %v3308 = vor.u32 %v3306, %v3307
      %v3309 = vrot.slane %v3308, 4
      %v3310 = vrot.slane %v2905, 5
      %v3311 = vsel %vm1042, %v3309, %v3310
      %v3312 = vrot.slane %v2902, 4
      %v3313 = vor.u32 %v3312, %v3310
      %v3314 = vrot.slane %v3313, 4
      %v3315 = vrot.slane %v2910, 4
      %v3316 = vrot.slane %v2913, 5
      %v3317 = vor.u32 %v3315, %v3316
      %v3318 = vrot.slane %v3317, 4
      %v3319 = vrot.slane %v2921, 5
      %v3320 = vsel %vm1042, %v3318, %v3319
      %v3321 = vrot.slane %v2918, 4
      %v3322 = vor.u32 %v3321, %v3319
      %v3323 = vrot.slane %v3322, 4
      %v3324 = vrot.slane %v2926, 4
      %v3325 = vrot.slane %v2929, 5
      %v3326 = vor.u32 %v3324, %v3325
      %v3327 = vrot.slane %v3326, 4
      %v3328 = vrot.slane %v2937, 5
      %v3329 = vsel %vm1042, %v3327, %v3328
      %v3330 = vrot.slane %v2934, 4
      %v3331 = vor.u32 %v3330, %v3328
      %v3332 = vrot.slane %v3331, 4
      %v3333 = vrot.slane %v2942, 4
      %v3334 = vrot.slane %v2945, 5
      %v3335 = vor.u32 %v3333, %v3334
      %v3336 = vrot.slane %v3335, 4
      %v3337 = vrot.slane %v2953, 5
      %v3338 = vsel %vm1042, %v3336, %v3337
      %v3339 = vrot.slane %v2950, 4
      %v3340 = vor.u32 %v3339, %v3337
      %v3341 = vrot.slane %v3340, 4
      %v3342 = vrot.slane %v2958, 4
      %v3343 = vrot.slane %v2961, 5
      %v3344 = vor.u32 %v3342, %v3343
      %v3345 = vrot.slane %v3344, 4
      %v3346 = vrot.slane %v2969, 5
      %v3347 = vsel %vm1042, %v3345, %v3346
      %v3348 = vrot.slane %v2966, 4
      %v3349 = vor.u32 %v3348, %v3346
      %v3350 = vrot.slane %v3349, 4
      %v3351 = vrot.slane %v2974, 4
      %v3352 = vrot.slane %v2977, 5
      %v3353 = vor.u32 %v3351, %v3352
      %v3354 = vrot.slane %v3353, 4
      %v3355 = vrot.slane %v2985, 5
      %v3356 = vsel %vm1042, %v3354, %v3355
      %v3357 = vrot.slane %v2982, 4
      %v3358 = vor.u32 %v3357, %v3355
      %v3359 = vrot.slane %v3358, 4
      %v3360 = vrot.slane %v2990, 4
      %v3361 = vrot.slane %v2993, 5
      %v3362 = vor.u32 %v3360, %v3361
      %v3363 = vrot.slane %v3362, 4
      %v3364 = vrot.slane %v3001, 5
      %v3365 = vsel %vm1042, %v3363, %v3364
      %v3366 = vrot.slane %v2998, 4
      %v3367 = vor.u32 %v3366, %v3364
      %v3368 = vrot.slane %v3367, 4
      %v3369 = vrot.slane %v3006, 4
      %v3370 = vrot.slane %v3009, 5
      %v3371 = vor.u32 %v3369, %v3370
      %v3372 = vrot.slane %v3371, 4
      %v3373 = vrot.slane %v3017, 5
      %v3374 = vsel %vm1042, %v3372, %v3373
      %v3375 = vrot.slane %v3014, 4
      %v3376 = vor.u32 %v3375, %v3373
      %v3377 = vrot.slane %v3376, 4
      %v3378 = vrot.slane %v3022, 4
      %v3379 = vrot.slane %v3025, 5
      %v3380 = vor.u32 %v3378, %v3379
      %v3381 = vrot.slane %v3380, 4
      %v3382 = vrot.slane %v3033, 5
      %v3383 = vsel %vm1042, %v3381, %v3382
      %v3384 = vrot.slane %v3030, 4
      %v3385 = vor.u32 %v3384, %v3382
      %v3386 = vrot.slane %v3385, 4
      %3387 = vrot.lane.b32.xlu0 %v3257, 16
      %v3388 = vpop.permute.xlu0 %3387
      %3389 = vrot.lane.b32.xlu0 %v3260, 16
      %v3390 = vpop.permute.xlu0 %3389
      %3391 = vrot.lane.b32.xlu0 %v3266, 16
      %v3392 = vpop.permute.xlu0 %3391
      %3393 = vrot.lane.b32.xlu0 %v3269, 16
      %v3394 = vpop.permute.xlu0 %3393
      %3395 = vrot.lane.b32.xlu0 %v3275, 16
      %v3396 = vpop.permute.xlu0 %3395
      %3397 = vrot.lane.b32.xlu0 %v3278, 16
      %v3398 = vpop.permute.xlu0 %3397
      %3399 = vrot.lane.b32.xlu0 %v3284, 16
      %v3400 = vpop.permute.xlu0 %3399
      %3401 = vrot.lane.b32.xlu0 %v3287, 16
      %v3402 = vpop.permute.xlu0 %3401
      %3403 = vrot.lane.b32.xlu0 %v3293, 16
      %v3404 = vpop.permute.xlu0 %3403
      %3405 = vrot.lane.b32.xlu0 %v3296, 16
      %v3406 = vpop.permute.xlu0 %3405
      %3407 = vrot.lane.b32.xlu0 %v3302, 16
      %v3408 = vpop.permute.xlu0 %3407
      %3409 = vrot.lane.b32.xlu0 %v3305, 16
      %v3410 = vpop.permute.xlu0 %3409
      %3411 = vrot.lane.b32.xlu0 %v3311, 16
      %v3412 = vpop.permute.xlu0 %3411
      %3413 = vrot.lane.b32.xlu0 %v3314, 16
      %v3414 = vpop.permute.xlu0 %3413
      %3415 = vrot.lane.b32.xlu0 %v3320, 16
      %v3416 = vpop.permute.xlu0 %3415
      %3417 = vrot.lane.b32.xlu0 %v3323, 16
      %v3418 = vpop.permute.xlu0 %3417
      %3419 = vrot.lane.b32.xlu0 %v3329, 16
      %v3420 = vpop.permute.xlu0 %3419
      %3421 = vrot.lane.b32.xlu0 %v3332, 16
      %v3422 = vpop.permute.xlu0 %3421
      %3423 = vrot.lane.b32.xlu0 %v3338, 16
      %v3424 = vpop.permute.xlu0 %3423
      %3425 = vrot.lane.b32.xlu0 %v3341, 16
      %v3426 = vpop.permute.xlu0 %3425
      %3427 = vrot.lane.b32.xlu0 %v3347, 16
      %v3428 = vpop.permute.xlu0 %3427
      %3429 = vrot.lane.b32.xlu0 %v3350, 16
      %v3430 = vpop.permute.xlu0 %3429
      %3431 = vrot.lane.b32.xlu0 %v3356, 16
      %v3432 = vpop.permute.xlu0 %3431
      %3433 = vrot.lane.b32.xlu0 %v3359, 16
      %v3434 = vpop.permute.xlu0 %3433
      %3435 = vrot.lane.b32.xlu0 %v3365, 16
      %v3436 = vpop.permute.xlu0 %3435
      %3437 = vrot.lane.b32.xlu0 %v3368, 16
      %v3438 = vpop.permute.xlu0 %3437
      %3439 = vrot.lane.b32.xlu0 %v3374, 16
      %v3440 = vpop.permute.xlu0 %3439
      %3441 = vrot.lane.b32.xlu0 %v3377, 16
      %v3442 = vpop.permute.xlu0 %3441
      %3443 = vrot.lane.b32.xlu0 %v3383, 16
      %v3444 = vpop.permute.xlu0 %3443
      %3445 = vrot.lane.b32.xlu0 %v3386, 16
      %v3446 = vpop.permute.xlu0 %3445
      %vm3477 = vcmask 191616
      %3478 = vst.msk [vmem:[%s3067] sm:$0xf] %vm3477, %v3388
      %vm3479 = vcmask 191616
      %vm3480 = vmand %vm3479, %vm1040
      %v3481 = vld [vmem:[%s3067 + $0x4] sm:$0xf]
      %v3482 = vsel %vm3480, %v3390, %v3481
      %3483 = vst [vmem:[%s3067 + $0x4] sm:$0xf] %v3482
      %3484 = vst.msk [vmem:[%s3067 + $0x8] sm:$0xf] %vm3477, %v3392
      %v3485 = vld [vmem:[%s3067 + $0xc] sm:$0xf]
      %v3486 = vsel %vm3480, %v3394, %v3485
      %3487 = vst [vmem:[%s3067 + $0xc] sm:$0xf] %v3486
      %3488 = vst.msk [vmem:[%s3067 + $0x10] sm:$0xf] %vm3477, %v3396
      %v3489 = vld [vmem:[%s3067 + $0x14] sm:$0xf]
      %v3490 = vsel %vm3480, %v3398, %v3489
      %3491 = vst [vmem:[%s3067 + $0x14] sm:$0xf] %v3490
      %3492 = vst.msk [vmem:[%s3067 + $0x18] sm:$0xf] %vm3477, %v3400
      %v3493 = vld [vmem:[%s3067 + $0x1c] sm:$0xf]
      %v3494 = vsel %vm3480, %v3402, %v3493
      %3495 = vst [vmem:[%s3067 + $0x1c] sm:$0xf] %v3494
      %3496 = vst.msk [vmem:[%s3067 + $0x20] sm:$0xf] %vm3477, %v3404
      %v3497 = vld [vmem:[%s3067 + $0x24] sm:$0xf]
      %v3498 = vsel %vm3480, %v3406, %v3497
      %3499 = vst [vmem:[%s3067 + $0x24] sm:$0xf] %v3498
      %3500 = vst.msk [vmem:[%s3067 + $0x28] sm:$0xf] %vm3477, %v3408
      %v3501 = vld [vmem:[%s3067 + $0x2c] sm:$0xf]
      %v3502 = vsel %vm3480, %v3410, %v3501
      %3503 = vst [vmem:[%s3067 + $0x2c] sm:$0xf] %v3502
      %3504 = vst.msk [vmem:[%s3067 + $0x30] sm:$0xf] %vm3477, %v3412
      %v3505 = vld [vmem:[%s3067 + $0x34] sm:$0xf]
      %v3506 = vsel %vm3480, %v3414, %v3505
      %3507 = vst [vmem:[%s3067 + $0x34] sm:$0xf] %v3506
      %3508 = vst.msk [vmem:[%s3067 + $0x38] sm:$0xf] %vm3477, %v3416
      %v3509 = vld [vmem:[%s3067 + $0x3c] sm:$0xf]
      %v3510 = vsel %vm3480, %v3418, %v3509
      %3511 = vst [vmem:[%s3067 + $0x3c] sm:$0xf] %v3510
      %3512 = vst.msk [vmem:[%s3067 + $0x40] sm:$0xf] %vm3477, %v3420
      %v3513 = vld [vmem:[%s3067 + $0x44] sm:$0xf]
      %v3514 = vsel %vm3480, %v3422, %v3513
      %3515 = vst [vmem:[%s3067 + $0x44] sm:$0xf] %v3514
      %3516 = vst.msk [vmem:[%s3067 + $0x48] sm:$0xf] %vm3477, %v3424
      %v3517 = vld [vmem:[%s3067 + $0x4c] sm:$0xf]
      %v3518 = vsel %vm3480, %v3426, %v3517
      %3519 = vst [vmem:[%s3067 + $0x4c] sm:$0xf] %v3518
      %3520 = vst.msk [vmem:[%s3067 + $0x50] sm:$0xf] %vm3477, %v3428
      %v3521 = vld [vmem:[%s3067 + $0x54] sm:$0xf]
      %v3522 = vsel %vm3480, %v3430, %v3521
      %3523 = vst [vmem:[%s3067 + $0x54] sm:$0xf] %v3522
      %3524 = vst.msk [vmem:[%s3067 + $0x58] sm:$0xf] %vm3477, %v3432
      %v3525 = vld [vmem:[%s3067 + $0x5c] sm:$0xf]
      %v3526 = vsel %vm3480, %v3434, %v3525
      %3527 = vst [vmem:[%s3067 + $0x5c] sm:$0xf] %v3526
      %3528 = vst.msk [vmem:[%s3067 + $0x60] sm:$0xf] %vm3477, %v3436
      %v3529 = vld [vmem:[%s3067 + $0x64] sm:$0xf]
      %v3530 = vsel %vm3480, %v3438, %v3529
      %3531 = vst [vmem:[%s3067 + $0x64] sm:$0xf] %v3530
      %3532 = vst.msk [vmem:[%s3067 + $0x68] sm:$0xf] %vm3477, %v3440
      %v3533 = vld [vmem:[%s3067 + $0x6c] sm:$0xf]
      %v3534 = vsel %vm3480, %v3442, %v3533
      %3535 = vst [vmem:[%s3067 + $0x6c] sm:$0xf] %v3534
      %3536 = vst.msk [vmem:[%s3067 + $0x70] sm:$0xf] %vm3477, %v3444
      %v3537 = vld [vmem:[%s3067 + $0x74] sm:$0xf]
      %v3538 = vsel %vm3480, %v3446, %v3537
      %3539 = vst [vmem:[%s3067 + $0x74] sm:$0xf] %v3538
      %v3541 = vunpack.c.l.b16 %v2721
      %v3542 = vunpack.c.h.b16 %v2721
      %v3543 = vpack.c.b16 %v3541, %v3541
      %v3544 = vpack.c.b16 %v3542, %v3542
      %v3546 = vshrl.u32 %v3543, 16
      %v3548 = vrot.slane %v3546, 7
      %v3549 = vshll.u32 %v3543, 16
      %v3551 = vor.u32 %v3548, %v3549
      %v3552 = vrot.slane %v3548, 4
      %v3554 = vshrl.u32 %v3544, 16
      %v3556 = vrot.slane %v3554, 7
      %v3557 = vshll.u32 %v3544, 16
      %v3559 = vor.u32 %v3556, %v3557
      %v3560 = vsel %vm583, %v3552, %v3559
      %3561 = vrot.lane.b32.xlu0 %v2803, 24
      %v3562 = vpop.permute.xlu0 %3561
      %3563 = vrot.lane.b32.xlu0 %v2812, 24
      %v3564 = vpop.permute.xlu0 %3563
      %3565 = vrot.lane.b32.xlu0 %v2819, 24
      %v3566 = vpop.permute.xlu0 %3565
      %3567 = vrot.lane.b32.xlu0 %v2828, 24
      %v3568 = vpop.permute.xlu0 %3567
      %3569 = vrot.lane.b32.xlu0 %v2835, 24
      %v3570 = vpop.permute.xlu0 %3569
      %3571 = vrot.lane.b32.xlu0 %v2844, 24
      %v3572 = vpop.permute.xlu0 %3571
      %3573 = vrot.lane.b32.xlu0 %v2851, 24
      %v3574 = vpop.permute.xlu0 %3573
      %3575 = vrot.lane.b32.xlu0 %v2860, 24
      %v3576 = vpop.permute.xlu0 %3575
      %3577 = vrot.lane.b32.xlu0 %v2867, 24
      %v3578 = vpop.permute.xlu0 %3577
      %3579 = vrot.lane.b32.xlu0 %v2876, 24
      %v3580 = vpop.permute.xlu0 %3579
      %3581 = vrot.lane.b32.xlu0 %v2883, 24
      %v3582 = vpop.permute.xlu0 %3581
      %3583 = vrot.lane.b32.xlu0 %v2892, 24
      %v3584 = vpop.permute.xlu0 %3583
      %3585 = vrot.lane.b32.xlu0 %v2899, 24
      %v3586 = vpop.permute.xlu0 %3585
      %3587 = vrot.lane.b32.xlu0 %v2908, 24
      %v3588 = vpop.permute.xlu0 %3587
      %3589 = vrot.lane.b32.xlu0 %v2915, 24
      %v3590 = vpop.permute.xlu0 %3589
      %3591 = vrot.lane.b32.xlu0 %v2924, 24
      %v3592 = vpop.permute.xlu0 %3591
      %3593 = vrot.lane.b32.xlu0 %v2931, 24
      %v3594 = vpop.permute.xlu0 %3593
      %3595 = vrot.lane.b32.xlu0 %v2940, 24
      %v3596 = vpop.permute.xlu0 %3595
      %3597 = vrot.lane.b32.xlu0 %v2947, 24
      %v3598 = vpop.permute.xlu0 %3597
      %3599 = vrot.lane.b32.xlu0 %v2956, 24
      %v3600 = vpop.permute.xlu0 %3599
      %3601 = vrot.lane.b32.xlu0 %v2963, 24
      %v3602 = vpop.permute.xlu0 %3601
      %3603 = vrot.lane.b32.xlu0 %v2972, 24
      %v3604 = vpop.permute.xlu0 %3603
      %3605 = vrot.lane.b32.xlu0 %v2979, 24
      %v3606 = vpop.permute.xlu0 %3605
      %3607 = vrot.lane.b32.xlu0 %v2988, 24
      %v3608 = vpop.permute.xlu0 %3607
      %3609 = vrot.lane.b32.xlu0 %v2995, 24
      %v3610 = vpop.permute.xlu0 %3609
      %3611 = vrot.lane.b32.xlu0 %v3004, 24
      %v3612 = vpop.permute.xlu0 %3611
      %3613 = vrot.lane.b32.xlu0 %v3011, 24
      %v3614 = vpop.permute.xlu0 %3613
      %3615 = vrot.lane.b32.xlu0 %v3020, 24
      %v3616 = vpop.permute.xlu0 %3615
      %3617 = vrot.lane.b32.xlu0 %v3027, 24
      %v3618 = vpop.permute.xlu0 %3617
      %3619 = vrot.lane.b32.xlu0 %v3036, 24
      %v3620 = vpop.permute.xlu0 %3619
      %3621 = vrot.lane.b32.xlu0 %v3551, 24
      %v3622 = vpop.permute.xlu0 %3621
      %3623 = vrot.lane.b32.xlu0 %v3560, 24
      %v3624 = vpop.permute.xlu0 %3623
      %vm3657 = vcmask 257216
      %vm3658 = vmand %vm3657, %vm856
      %v3659 = vld [vmem:[#allocation3] sm:$0xf]
      %v3660 = vsel %vm3658, %v3562, %v3659
      %3661 = vst [vmem:[#allocation3] sm:$0xf] %v3660
      %vm3662 = vcmask 257216
      %3663 = vst.msk [vmem:[#allocation3 + $0x4] sm:$0xf] %vm3662, %v3564
      %v3664 = vld [vmem:[#allocation3 + $0x8] sm:$0xf]
      %v3665 = vsel %vm3658, %v3566, %v3664
      %3666 = vst [vmem:[#allocation3 + $0x8] sm:$0xf] %v3665
      %3667 = vst.msk [vmem:[#allocation3 + $0xc] sm:$0xf] %vm3662, %v3568
      %v3668 = vld [vmem:[#allocation3 + $0x10] sm:$0xf]
      %v3669 = vsel %vm3658, %v3570, %v3668
      %3670 = vst [vmem:[#allocation3 + $0x10] sm:$0xf] %v3669
      %3671 = vst.msk [vmem:[#allocation3 + $0x14] sm:$0xf] %vm3662, %v3572
      %v3672 = vld [vmem:[#allocation3 + $0x18] sm:$0xf]
      %v3673 = vsel %vm3658, %v3574, %v3672
      %3674 = vst [vmem:[#allocation3 + $0x18] sm:$0xf] %v3673
      %3675 = vst.msk [vmem:[#allocation3 + $0x1c] sm:$0xf] %vm3662, %v3576
      %v3676 = vld [vmem:[#allocation3 + $0x20] sm:$0xf]
      %v3677 = vsel %vm3658, %v3578, %v3676
      %3678 = vst [vmem:[#allocation3 + $0x20] sm:$0xf] %v3677
      %3679 = vst.msk [vmem:[#allocation3 + $0x24] sm:$0xf] %vm3662, %v3580
      %v3680 = vld [vmem:[#allocation3 + $0x28] sm:$0xf]
      %v3681 = vsel %vm3658, %v3582, %v3680
      %3682 = vst [vmem:[#allocation3 + $0x28] sm:$0xf] %v3681
      %3683 = vst.msk [vmem:[#allocation3 + $0x2c] sm:$0xf] %vm3662, %v3584
      %v3684 = vld [vmem:[#allocation3 + $0x30] sm:$0xf]
      %v3685 = vsel %vm3658, %v3586, %v3684
      %3686 = vst [vmem:[#allocation3 + $0x30] sm:$0xf] %v3685
      %3687 = vst.msk [vmem:[#allocation3 + $0x34] sm:$0xf] %vm3662, %v3588
      %v3688 = vld [vmem:[#allocation3 + $0x38] sm:$0xf]
      %v3689 = vsel %vm3658, %v3590, %v3688
      %3690 = vst [vmem:[#allocation3 + $0x38] sm:$0xf] %v3689
      %3691 = vst.msk [vmem:[#allocation3 + $0x3c] sm:$0xf] %vm3662, %v3592
      %v3692 = vld [vmem:[#allocation3 + $0x40] sm:$0xf]
      %v3693 = vsel %vm3658, %v3594, %v3692
      %3694 = vst [vmem:[#allocation3 + $0x40] sm:$0xf] %v3693
      %3695 = vst.msk [vmem:[#allocation3 + $0x44] sm:$0xf] %vm3662, %v3596
      %v3696 = vld [vmem:[#allocation3 + $0x48] sm:$0xf]
      %v3697 = vsel %vm3658, %v3598, %v3696
      %3698 = vst [vmem:[#allocation3 + $0x48] sm:$0xf] %v3697
      %3699 = vst.msk [vmem:[#allocation3 + $0x4c] sm:$0xf] %vm3662, %v3600
      %v3700 = vld [vmem:[#allocation3 + $0x50] sm:$0xf]
      %v3701 = vsel %vm3658, %v3602, %v3700
      %3702 = vst [vmem:[#allocation3 + $0x50] sm:$0xf] %v3701
      %3703 = vst.msk [vmem:[#allocation3 + $0x54] sm:$0xf] %vm3662, %v3604
      %v3704 = vld [vmem:[#allocation3 + $0x58] sm:$0xf]
      %v3705 = vsel %vm3658, %v3606, %v3704
      %3706 = vst [vmem:[#allocation3 + $0x58] sm:$0xf] %v3705
      %3707 = vst.msk [vmem:[#allocation3 + $0x5c] sm:$0xf] %vm3662, %v3608
      %v3708 = vld [vmem:[#allocation3 + $0x60] sm:$0xf]
      %v3709 = vsel %vm3658, %v3610, %v3708
      %3710 = vst [vmem:[#allocation3 + $0x60] sm:$0xf] %v3709
      %3711 = vst.msk [vmem:[#allocation3 + $0x64] sm:$0xf] %vm3662, %v3612
      %v3712 = vld [vmem:[#allocation3 + $0x68] sm:$0xf]
      %v3713 = vsel %vm3658, %v3614, %v3712
      %3714 = vst [vmem:[#allocation3 + $0x68] sm:$0xf] %v3713
      %3715 = vst.msk [vmem:[#allocation3 + $0x6c] sm:$0xf] %vm3662, %v3616
      %v3716 = vld [vmem:[#allocation3 + $0x70] sm:$0xf]
      %v3717 = vsel %vm3658, %v3618, %v3716
      %3718 = vst [vmem:[#allocation3 + $0x70] sm:$0xf] %v3717
      %3719 = vst.msk [vmem:[#allocation3 + $0x74] sm:$0xf] %vm3662, %v3620
      %v3720 = vld [vmem:[#allocation3 + $0x78] sm:$0xf]
      %v3721 = vsel %vm3658, %v3622, %v3720
      %3722 = vst [vmem:[#allocation3 + $0x78] sm:$0xf] %v3721
      %3723 = vst.msk [vmem:[#allocation3 + $0x7c] sm:$0xf] %vm3662, %v3624
      %3724 = vrot.lane.b32.xlu0 %v2767, 32
      %v3725 = vpop.permute.xlu0 %3724
      %3726 = vrot.lane.b32.xlu0 %v2768, 32
      %v3727 = vpop.permute.xlu0 %3726
      %3728 = vrot.lane.b32.xlu0 %v2769, 32
      %v3729 = vpop.permute.xlu0 %3728
      %3730 = vrot.lane.b32.xlu0 %v2770, 32
      %v3731 = vpop.permute.xlu0 %3730
      %3732 = vrot.lane.b32.xlu0 %v2771, 32
      %v3733 = vpop.permute.xlu0 %3732
      %3734 = vrot.lane.b32.xlu0 %v2772, 32
      %v3735 = vpop.permute.xlu0 %3734
      %3736 = vrot.lane.b32.xlu0 %v2773, 32
      %v3737 = vpop.permute.xlu0 %3736
      %3738 = vrot.lane.b32.xlu0 %v2774, 32
      %v3739 = vpop.permute.xlu0 %3738
      %3740 = vrot.lane.b32.xlu0 %v2775, 32
      %v3741 = vpop.permute.xlu0 %3740
      %3742 = vrot.lane.b32.xlu0 %v2776, 32
      %v3743 = vpop.permute.xlu0 %3742
      %3744 = vrot.lane.b32.xlu0 %v2777, 32
      %v3745 = vpop.permute.xlu0 %3744
      %3746 = vrot.lane.b32.xlu0 %v2778, 32
      %v3747 = vpop.permute.xlu0 %3746
      %3748 = vrot.lane.b32.xlu0 %v2779, 32
      %v3749 = vpop.permute.xlu0 %3748
      %3750 = vrot.lane.b32.xlu0 %v2780, 32
      %v3751 = vpop.permute.xlu0 %3750
      %3752 = vrot.lane.b32.xlu0 %v2781, 32
      %v3753 = vpop.permute.xlu0 %3752
      %3754 = vrot.lane.b32.xlu0 %v2782, 32
      %v3755 = vpop.permute.xlu0 %3754
      %3756 = vrot.lane.b32.xlu0 %v2783, 32
      %v3757 = vpop.permute.xlu0 %3756
      %3758 = vrot.lane.b32.xlu0 %v2784, 32
      %v3759 = vpop.permute.xlu0 %3758
      %3760 = vrot.lane.b32.xlu0 %v2785, 32
      %v3761 = vpop.permute.xlu0 %3760
      %3762 = vrot.lane.b32.xlu0 %v2786, 32
      %v3763 = vpop.permute.xlu0 %3762
      %3764 = vrot.lane.b32.xlu0 %v2787, 32
      %v3765 = vpop.permute.xlu0 %3764
      %3766 = vrot.lane.b32.xlu0 %v2788, 32
      %v3767 = vpop.permute.xlu0 %3766
      %3768 = vrot.lane.b32.xlu0 %v2789, 32
      %v3769 = vpop.permute.xlu0 %3768
      %3770 = vrot.lane.b32.xlu0 %v2790, 32
      %v3771 = vpop.permute.xlu0 %3770
      %3772 = vrot.lane.b32.xlu0 %v2791, 32
      %v3773 = vpop.permute.xlu0 %3772
      %3774 = vrot.lane.b32.xlu0 %v2792, 32
      %v3775 = vpop.permute.xlu0 %3774
      %3776 = vrot.lane.b32.xlu0 %v2793, 32
      %v3777 = vpop.permute.xlu0 %3776
      %3778 = vrot.lane.b32.xlu0 %v2794, 32
      %v3779 = vpop.permute.xlu0 %3778
      %3780 = vrot.lane.b32.xlu0 %v2795, 32
      %v3781 = vpop.permute.xlu0 %3780
      %3782 = vrot.lane.b32.xlu0 %v2796, 32
      %v3783 = vpop.permute.xlu0 %3782
      %3784 = vrot.lane.b32.xlu0 %v3543, 32
      %v3785 = vpop.permute.xlu0 %3784
      %3786 = vrot.lane.b32.xlu0 %v3544, 32
      %v3787 = vpop.permute.xlu0 %3786
      %vm3820 = vcmask 322816
      %3821 = vst.msk [vmem:[#allocation3] sm:$0xf] %vm3820, %v3725
      %3822 = vst.msk [vmem:[#allocation3 + $0x4] sm:$0xf] %vm3820, %v3727
      %3823 = vst.msk [vmem:[#allocation3 + $0x8] sm:$0xf] %vm3820, %v3729
      %3824 = vst.msk [vmem:[#allocation3 + $0xc] sm:$0xf] %vm3820, %v3731
      %3825 = vst.msk [vmem:[#allocation3 + $0x10] sm:$0xf] %vm3820, %v3733
      %3826 = vst.msk [vmem:[#allocation3 + $0x14] sm:$0xf] %vm3820, %v3735
      %3827 = vst.msk [vmem:[#allocation3 + $0x18] sm:$0xf] %vm3820, %v3737
      %3828 = vst.msk [vmem:[#allocation3 + $0x1c] sm:$0xf] %vm3820, %v3739
      %3829 = vst.msk [vmem:[#allocation3 + $0x20] sm:$0xf] %vm3820, %v3741
      %3830 = vst.msk [vmem:[#allocation3 + $0x24] sm:$0xf] %vm3820, %v3743
      %3831 = vst.msk [vmem:[#allocation3 + $0x28] sm:$0xf] %vm3820, %v3745
      %3832 = vst.msk [vmem:[#allocation3 + $0x2c] sm:$0xf] %vm3820, %v3747
      %3833 = vst.msk [vmem:[#allocation3 + $0x30] sm:$0xf] %vm3820, %v3749
      %3834 = vst.msk [vmem:[#allocation3 + $0x34] sm:$0xf] %vm3820, %v3751
      %3835 = vst.msk [vmem:[#allocation3 + $0x38] sm:$0xf] %vm3820, %v3753
      %3836 = vst.msk [vmem:[#allocation3 + $0x3c] sm:$0xf] %vm3820, %v3755
      %3837 = vst.msk [vmem:[#allocation3 + $0x40] sm:$0xf] %vm3820, %v3757
      %3838 = vst.msk [vmem:[#allocation3 + $0x44] sm:$0xf] %vm3820, %v3759
      %3839 = vst.msk [vmem:[#allocation3 + $0x48] sm:$0xf] %vm3820, %v3761
      %3840 = vst.msk [vmem:[#allocation3 + $0x4c] sm:$0xf] %vm3820, %v3763
      %3841 = vst.msk [vmem:[#allocation3 + $0x50] sm:$0xf] %vm3820, %v3765
      %3842 = vst.msk [vmem:[#allocation3 + $0x54] sm:$0xf] %vm3820, %v3767
      %3843 = vst.msk [vmem:[#allocation3 + $0x58] sm:$0xf] %vm3820, %v3769
      %3844 = vst.msk [vmem:[#allocation3 + $0x5c] sm:$0xf] %vm3820, %v3771
      %3845 = vst.msk [vmem:[#allocation3 + $0x60] sm:$0xf] %vm3820, %v3773
      %3846 = vst.msk [vmem:[#allocation3 + $0x64] sm:$0xf] %vm3820, %v3775
      %3847 = vst.msk [vmem:[#allocation3 + $0x68] sm:$0xf] %vm3820, %v3777
      %3848 = vst.msk [vmem:[#allocation3 + $0x6c] sm:$0xf] %vm3820, %v3779
      %3849 = vst.msk [vmem:[#allocation3 + $0x70] sm:$0xf] %vm3820, %v3781
      %3850 = vst.msk [vmem:[#allocation3 + $0x74] sm:$0xf] %vm3820, %v3783
      %3851 = vst.msk [vmem:[#allocation3 + $0x78] sm:$0xf] %vm3820, %v3785
      %3852 = vst.msk [vmem:[#allocation3 + $0x7c] sm:$0xf] %vm3820, %v3787
      %v3853 = vrot.slane %v3546, 4
      %v3854 = vrot.slane %v3549, 5
      %v3855 = vor.u32 %v3853, %v3854
      %v3856 = vrot.slane %v3855, 4
      %v3857 = vrot.slane %v3557, 5
      %v3858 = vsel %vm1042, %v3856, %v3857
      %v3859 = vrot.slane %v3554, 4
      %v3860 = vor.u32 %v3859, %v3857
      %v3861 = vrot.slane %v3860, 4
      %3862 = vrot.lane.b32.xlu0 %v3257, 40
      %v3863 = vpop.permute.xlu0 %3862
      %3864 = vrot.lane.b32.xlu0 %v3260, 40
      %v3865 = vpop.permute.xlu0 %3864
      %3866 = vrot.lane.b32.xlu0 %v3266, 40
      %v3867 = vpop.permute.xlu0 %3866
      %3868 = vrot.lane.b32.xlu0 %v3269, 40
      %v3869 = vpop.permute.xlu0 %3868
      %3870 = vrot.lane.b32.xlu0 %v3275, 40
      %v3871 = vpop.permute.xlu0 %3870
      %3872 = vrot.lane.b32.xlu0 %v3278, 40
      %v3873 = vpop.permute.xlu0 %3872
      %3874 = vrot.lane.b32.xlu0 %v3284, 40
      %v3875 = vpop.permute.xlu0 %3874
      %3876 = vrot.lane.b32.xlu0 %v3287, 40
      %v3877 = vpop.permute.xlu0 %3876
      %3878 = vrot.lane.b32.xlu0 %v3293, 40
      %v3879 = vpop.permute.xlu0 %3878
      %3880 = vrot.lane.b32.xlu0 %v3296, 40
      %v3881 = vpop.permute.xlu0 %3880
      %3882 = vrot.lane.b32.xlu0 %v3302, 40
      %v3883 = vpop.permute.xlu0 %3882
      %3884 = vrot.lane.b32.xlu0 %v3305, 40
      %v3885 = vpop.permute.xlu0 %3884
      %3886 = vrot.lane.b32.xlu0 %v3311, 40
      %v3887 = vpop.permute.xlu0 %3886
      %3888 = vrot.lane.b32.xlu0 %v3314, 40
      %v3889 = vpop.permute.xlu0 %3888
      %3890 = vrot.lane.b32.xlu0 %v3320, 40
      %v3891 = vpop.permute.xlu0 %3890
      %3892 = vrot.lane.b32.xlu0 %v3323, 40
      %v3893 = vpop.permute.xlu0 %3892
      %3894 = vrot.lane.b32.xlu0 %v3329, 40
      %v3895 = vpop.permute.xlu0 %3894
      %3896 = vrot.lane.b32.xlu0 %v3332, 40
      %v3897 = vpop.permute.xlu0 %3896
      %3898 = vrot.lane.b32.xlu0 %v3338, 40
      %v3899 = vpop.permute.xlu0 %3898
      %3900 = vrot.lane.b32.xlu0 %v3341, 40
      %v3901 = vpop.permute.xlu0 %3900
      %3902 = vrot.lane.b32.xlu0 %v3347, 40
      %v3903 = vpop.permute.xlu0 %3902
      %3904 = vrot.lane.b32.xlu0 %v3350, 40
      %v3905 = vpop.permute.xlu0 %3904
      %3906 = vrot.lane.b32.xlu0 %v3356, 40
      %v3907 = vpop.permute.xlu0 %3906
      %3908 = vrot.lane.b32.xlu0 %v3359, 40
      %v3909 = vpop.permute.xlu0 %3908
      %3910 = vrot.lane.b32.xlu0 %v3365, 40
      %v3911 = vpop.permute.xlu0 %3910
      %3912 = vrot.lane.b32.xlu0 %v3368, 40
      %v3913 = vpop.permute.xlu0 %3912
      %3914 = vrot.lane.b32.xlu0 %v3374, 40
      %v3915 = vpop.permute.xlu0 %3914
      %3916 = vrot.lane.b32.xlu0 %v3377, 40
      %v3917 = vpop.permute.xlu0 %3916
      %3918 = vrot.lane.b32.xlu0 %v3383, 40
      %v3919 = vpop.permute.xlu0 %3918
      %3920 = vrot.lane.b32.xlu0 %v3386, 40
      %v3921 = vpop.permute.xlu0 %3920
      %3922 = vrot.lane.b32.xlu0 %v3858, 40
      %v3923 = vpop.permute.xlu0 %3922
      %3924 = vrot.lane.b32.xlu0 %v3861, 40
      %v3925 = vpop.permute.xlu0 %3924
      %vm3958 = vcmask 388416
      %3959 = vst.msk [vmem:[#allocation3] sm:$0xf] %vm3958, %v3863
      %vm3960 = vcmask 388416
      %vm3961 = vmand %vm3960, %vm1040
      %v3962 = vld [vmem:[#allocation3 + $0x4] sm:$0xf]
      %v3963 = vsel %vm3961, %v3865, %v3962
      %3964 = vst [vmem:[#allocation3 + $0x4] sm:$0xf] %v3963
      %3965 = vst.msk [vmem:[#allocation3 + $0x8] sm:$0xf] %vm3958, %v3867
      %v3966 = vld [vmem:[#allocation3 + $0xc] sm:$0xf]
      %v3967 = vsel %vm3961, %v3869, %v3966
      %3968 = vst [vmem:[#allocation3 + $0xc] sm:$0xf] %v3967
      %3969 = vst.msk [vmem:[#allocation3 + $0x10] sm:$0xf] %vm3958, %v3871
      %v3970 = vld [vmem:[#allocation3 + $0x14] sm:$0xf]
      %v3971 = vsel %vm3961, %v3873, %v3970
      %3972 = vst [vmem:[#allocation3 + $0x14] sm:$0xf] %v3971
      %3973 = vst.msk [vmem:[#allocation3 + $0x18] sm:$0xf] %vm3958, %v3875
      %v3974 = vld [vmem:[#allocation3 + $0x1c] sm:$0xf]
      %v3975 = vsel %vm3961, %v3877, %v3974
      %3976 = vst [vmem:[#allocation3 + $0x1c] sm:$0xf] %v3975
      %3977 = vst.msk [vmem:[#allocation3 + $0x20] sm:$0xf] %vm3958, %v3879
      %v3978 = vld [vmem:[#allocation3 + $0x24] sm:$0xf]
      %v3979 = vsel %vm3961, %v3881, %v3978
      %3980 = vst [vmem:[#allocation3 + $0x24] sm:$0xf] %v3979
      %3981 = vst.msk [vmem:[#allocation3 + $0x28] sm:$0xf] %vm3958, %v3883
      %v3982 = vld [vmem:[#allocation3 + $0x2c] sm:$0xf]
      %v3983 = vsel %vm3961, %v3885, %v3982
      %3984 = vst [vmem:[#allocation3 + $0x2c] sm:$0xf] %v3983
      %3985 = vst.msk [vmem:[#allocation3 + $0x30] sm:$0xf] %vm3958, %v3887
      %v3986 = vld [vmem:[#allocation3 + $0x34] sm:$0xf]
      %v3987 = vsel %vm3961, %v3889, %v3986
      %3988 = vst [vmem:[#allocation3 + $0x34] sm:$0xf] %v3987
      %3989 = vst.msk [vmem:[#allocation3 + $0x38] sm:$0xf] %vm3958, %v3891
      %v3990 = vld [vmem:[#allocation3 + $0x3c] sm:$0xf]
      %v3991 = vsel %vm3961, %v3893, %v3990
      %3992 = vst [vmem:[#allocation3 + $0x3c] sm:$0xf] %v3991
      %3993 = vst.msk [vmem:[#allocation3 + $0x40] sm:$0xf] %vm3958, %v3895
      %v3994 = vld [vmem:[#allocation3 + $0x44] sm:$0xf]
      %v3995 = vsel %vm3961, %v3897, %v3994
      %3996 = vst [vmem:[#allocation3 + $0x44] sm:$0xf] %v3995
      %3997 = vst.msk [vmem:[#allocation3 + $0x48] sm:$0xf] %vm3958, %v3899
      %v3998 = vld [vmem:[#allocation3 + $0x4c] sm:$0xf]
      %v3999 = vsel %vm3961, %v3901, %v3998
      %4000 = vst [vmem:[#allocation3 + $0x4c] sm:$0xf] %v3999
      %4001 = vst.msk [vmem:[#allocation3 + $0x50] sm:$0xf] %vm3958, %v3903
      %v4002 = vld [vmem:[#allocation3 + $0x54] sm:$0xf]
      %v4003 = vsel %vm3961, %v3905, %v4002
      %4004 = vst [vmem:[#allocation3 + $0x54] sm:$0xf] %v4003
      %4005 = vst.msk [vmem:[#allocation3 + $0x58] sm:$0xf] %vm3958, %v3907
      %v4006 = vld [vmem:[#allocation3 + $0x5c] sm:$0xf]
      %v4007 = vsel %vm3961, %v3909, %v4006
      %4008 = vst [vmem:[#allocation3 + $0x5c] sm:$0xf] %v4007
      %4009 = vst.msk [vmem:[#allocation3 + $0x60] sm:$0xf] %vm3958, %v3911
      %v4010 = vld [vmem:[#allocation3 + $0x64] sm:$0xf]
      %v4011 = vsel %vm3961, %v3913, %v4010
      %4012 = vst [vmem:[#allocation3 + $0x64] sm:$0xf] %v4011
      %4013 = vst.msk [vmem:[#allocation3 + $0x68] sm:$0xf] %vm3958, %v3915
      %v4014 = vld [vmem:[#allocation3 + $0x6c] sm:$0xf]
      %v4015 = vsel %vm3961, %v3917, %v4014
      %4016 = vst [vmem:[#allocation3 + $0x6c] sm:$0xf] %v4015
      %4017 = vst.msk [vmem:[#allocation3 + $0x70] sm:$0xf] %vm3958, %v3919
      %v4018 = vld [vmem:[#allocation3 + $0x74] sm:$0xf]
      %v4019 = vsel %vm3961, %v3921, %v4018
      %4020 = vst [vmem:[#allocation3 + $0x74] sm:$0xf] %v4019
      %4021 = vst.msk [vmem:[#allocation3 + $0x78] sm:$0xf] %vm3958, %v3923
      %v4022 = vld [vmem:[#allocation3 + $0x7c] sm:$0xf]
      %v4023 = vsel %vm3961, %v3925, %v4022
      %4024 = vst [vmem:[#allocation3 + $0x7c] sm:$0xf] %v4023
      %4025 = vrot.lane.b32.xlu0 %v2819, 48
      %v4026 = vpop.permute.xlu0 %4025
      %4027 = vrot.lane.b32.xlu0 %v2828, 48
      %v4028 = vpop.permute.xlu0 %4027
      %4029 = vrot.lane.b32.xlu0 %v2835, 48
      %v4030 = vpop.permute.xlu0 %4029
      %4031 = vrot.lane.b32.xlu0 %v2844, 48
      %v4032 = vpop.permute.xlu0 %4031
      %4033 = vrot.lane.b32.xlu0 %v2851, 48
      %v4034 = vpop.permute.xlu0 %4033
      %4035 = vrot.lane.b32.xlu0 %v2860, 48
      %v4036 = vpop.permute.xlu0 %4035
      %4037 = vrot.lane.b32.xlu0 %v2867, 48
      %v4038 = vpop.permute.xlu0 %4037
      %4039 = vrot.lane.b32.xlu0 %v2876, 48
      %v4040 = vpop.permute.xlu0 %4039
      %4041 = vrot.lane.b32.xlu0 %v2883, 48
      %v4042 = vpop.permute.xlu0 %4041
      %4043 = vrot.lane.b32.xlu0 %v2892, 48
      %v4044 = vpop.permute.xlu0 %4043
      %4045 = vrot.lane.b32.xlu0 %v2899, 48
      %v4046 = vpop.permute.xlu0 %4045
      %4047 = vrot.lane.b32.xlu0 %v2908, 48
      %v4048 = vpop.permute.xlu0 %4047
      %4049 = vrot.lane.b32.xlu0 %v2915, 48
      %v4050 = vpop.permute.xlu0 %4049
      %4051 = vrot.lane.b32.xlu0 %v2924, 48
      %v4052 = vpop.permute.xlu0 %4051
      %4053 = vrot.lane.b32.xlu0 %v2931, 48
      %v4054 = vpop.permute.xlu0 %4053
      %4055 = vrot.lane.b32.xlu0 %v2940, 48
      %v4056 = vpop.permute.xlu0 %4055
      %4057 = vrot.lane.b32.xlu0 %v2947, 48
      %v4058 = vpop.permute.xlu0 %4057
      %4059 = vrot.lane.b32.xlu0 %v2956, 48
      %v4060 = vpop.permute.xlu0 %4059
      %4061 = vrot.lane.b32.xlu0 %v2963, 48
      %v4062 = vpop.permute.xlu0 %4061
      %4063 = vrot.lane.b32.xlu0 %v2972, 48
      %v4064 = vpop.permute.xlu0 %4063
      %4065 = vrot.lane.b32.xlu0 %v2979, 48
      %v4066 = vpop.permute.xlu0 %4065
      %4067 = vrot.lane.b32.xlu0 %v2988, 48
      %v4068 = vpop.permute.xlu0 %4067
      %4069 = vrot.lane.b32.xlu0 %v2995, 48
      %v4070 = vpop.permute.xlu0 %4069
      %4071 = vrot.lane.b32.xlu0 %v3004, 48
      %v4072 = vpop.permute.xlu0 %4071
      %4073 = vrot.lane.b32.xlu0 %v3011, 48
      %v4074 = vpop.permute.xlu0 %4073
      %4075 = vrot.lane.b32.xlu0 %v3020, 48
      %v4076 = vpop.permute.xlu0 %4075
      %4077 = vrot.lane.b32.xlu0 %v3027, 48
      %v4078 = vpop.permute.xlu0 %4077
      %4079 = vrot.lane.b32.xlu0 %v3036, 48
      %v4080 = vpop.permute.xlu0 %4079
      %4081 = vrot.lane.b32.xlu0 %v3551, 48
      %v4082 = vpop.permute.xlu0 %4081
      %4083 = vrot.lane.b32.xlu0 %v3560, 48
      %v4084 = vpop.permute.xlu0 %4083
      %vm4115 = vcmask 454016
      %vm4116 = vmand %vm4115, %vm856
      %v4117 = vld [vmem:[#allocation3] sm:$0xf]
      %v4118 = vsel %vm4116, %v4026, %v4117
      %4119 = vst [vmem:[#allocation3] sm:$0xf] %v4118
      %vm4120 = vcmask 454016
      %4121 = vst.msk [vmem:[#allocation3 + $0x4] sm:$0xf] %vm4120, %v4028
      %v4122 = vld [vmem:[#allocation3 + $0x8] sm:$0xf]
      %v4123 = vsel %vm4116, %v4030, %v4122
      %4124 = vst [vmem:[#allocation3 + $0x8] sm:$0xf] %v4123
      %4125 = vst.msk [vmem:[#allocation3 + $0xc] sm:$0xf] %vm4120, %v4032
      %v4126 = vld [vmem:[#allocation3 + $0x10] sm:$0xf]
      %v4127 = vsel %vm4116, %v4034, %v4126
      %4128 = vst [vmem:[#allocation3 + $0x10] sm:$0xf] %v4127
      %4129 = vst.msk [vmem:[#allocation3 + $0x14] sm:$0xf] %vm4120, %v4036
      %v4130 = vld [vmem:[#allocation3 + $0x18] sm:$0xf]
      %v4131 = vsel %vm4116, %v4038, %v4130
      %4132 = vst [vmem:[#allocation3 + $0x18] sm:$0xf] %v4131
      %4133 = vst.msk [vmem:[#allocation3 + $0x1c] sm:$0xf] %vm4120, %v4040
      %v4134 = vld [vmem:[#allocation3 + $0x20] sm:$0xf]
      %v4135 = vsel %vm4116, %v4042, %v4134
      %4136 = vst [vmem:[#allocation3 + $0x20] sm:$0xf] %v4135
      %4137 = vst.msk [vmem:[#allocation3 + $0x24] sm:$0xf] %vm4120, %v4044
      %v4138 = vld [vmem:[#allocation3 + $0x28] sm:$0xf]
      %v4139 = vsel %vm4116, %v4046, %v4138
      %4140 = vst [vmem:[#allocation3 + $0x28] sm:$0xf] %v4139
      %4141 = vst.msk [vmem:[#allocation3 + $0x2c] sm:$0xf] %vm4120, %v4048
      %v4142 = vld [vmem:[#allocation3 + $0x30] sm:$0xf]
      %v4143 = vsel %vm4116, %v4050, %v4142
      %4144 = vst [vmem:[#allocation3 + $0x30] sm:$0xf] %v4143
      %4145 = vst.msk [vmem:[#allocation3 + $0x34] sm:$0xf] %vm4120, %v4052
      %v4146 = vld [vmem:[#allocation3 + $0x38] sm:$0xf]
      %v4147 = vsel %vm4116, %v4054, %v4146
      %4148 = vst [vmem:[#allocation3 + $0x38] sm:$0xf] %v4147
      %4149 = vst.msk [vmem:[#allocation3 + $0x3c] sm:$0xf] %vm4120, %v4056
      %v4150 = vld [vmem:[#allocation3 + $0x40] sm:$0xf]
      %v4151 = vsel %vm4116, %v4058, %v4150
      %4152 = vst [vmem:[#allocation3 + $0x40] sm:$0xf] %v4151
      %4153 = vst.msk [vmem:[#allocation3 + $0x44] sm:$0xf] %vm4120, %v4060
      %v4154 = vld [vmem:[#allocation3 + $0x48] sm:$0xf]
      %v4155 = vsel %vm4116, %v4062, %v4154
      %4156 = vst [vmem:[#allocation3 + $0x48] sm:$0xf] %v4155
      %4157 = vst.msk [vmem:[#allocation3 + $0x4c] sm:$0xf] %vm4120, %v4064
      %v4158 = vld [vmem:[#allocation3 + $0x50] sm:$0xf]
      %v4159 = vsel %vm4116, %v4066, %v4158
      %4160 = vst [vmem:[#allocation3 + $0x50] sm:$0xf] %v4159
      %4161 = vst.msk [vmem:[#allocation3 + $0x54] sm:$0xf] %vm4120, %v4068
      %v4162 = vld [vmem:[#allocation3 + $0x58] sm:$0xf]
      %v4163 = vsel %vm4116, %v4070, %v4162
      %4164 = vst [vmem:[#allocation3 + $0x58] sm:$0xf] %v4163
      %4165 = vst.msk [vmem:[#allocation3 + $0x5c] sm:$0xf] %vm4120, %v4072
      %v4166 = vld [vmem:[#allocation3 + $0x60] sm:$0xf]
      %v4167 = vsel %vm4116, %v4074, %v4166
      %4168 = vst [vmem:[#allocation3 + $0x60] sm:$0xf] %v4167
      %4169 = vst.msk [vmem:[#allocation3 + $0x64] sm:$0xf] %vm4120, %v4076
      %v4170 = vld [vmem:[#allocation3 + $0x68] sm:$0xf]
      %v4171 = vsel %vm4116, %v4078, %v4170
      %4172 = vst [vmem:[#allocation3 + $0x68] sm:$0xf] %v4171
      %4173 = vst.msk [vmem:[#allocation3 + $0x6c] sm:$0xf] %vm4120, %v4080
      %v4174 = vld [vmem:[#allocation3 + $0x70] sm:$0xf]
      %v4175 = vsel %vm4116, %v4082, %v4174
      %4176 = vst [vmem:[#allocation3 + $0x70] sm:$0xf] %v4175
      %4177 = vst.msk [vmem:[#allocation3 + $0x74] sm:$0xf] %vm4120, %v4084
      %4178 = vrot.lane.b32.xlu0 %v2769, 56
      %v4179 = vpop.permute.xlu0 %4178
      %4180 = vrot.lane.b32.xlu0 %v2770, 56
      %v4181 = vpop.permute.xlu0 %4180
      %4182 = vrot.lane.b32.xlu0 %v2771, 56
      %v4183 = vpop.permute.xlu0 %4182
      %4184 = vrot.lane.b32.xlu0 %v2772, 56
      %v4185 = vpop.permute.xlu0 %4184
      %4186 = vrot.lane.b32.xlu0 %v2773, 56
      %v4187 = vpop.permute.xlu0 %4186
      %4188 = vrot.lane.b32.xlu0 %v2774, 56
      %v4189 = vpop.permute.xlu0 %4188
      %4190 = vrot.lane.b32.xlu0 %v2775, 56
      %v4191 = vpop.permute.xlu0 %4190
      %4192 = vrot.lane.b32.xlu0 %v2776, 56
      %v4193 = vpop.permute.xlu0 %4192
      %4194 = vrot.lane.b32.xlu0 %v2777, 56
      %v4195 = vpop.permute.xlu0 %4194
      %4196 = vrot.lane.b32.xlu0 %v2778, 56
      %v4197 = vpop.permute.xlu0 %4196
      %4198 = vrot.lane.b32.xlu0 %v2779, 56
      %v4199 = vpop.permute.xlu0 %4198
      %4200 = vrot.lane.b32.xlu0 %v2780, 56
      %v4201 = vpop.permute.xlu0 %4200
      %4202 = vrot.lane.b32.xlu0 %v2781, 56
      %v4203 = vpop.permute.xlu0 %4202
      %4204 = vrot.lane.b32.xlu0 %v2782, 56
      %v4205 = vpop.permute.xlu0 %4204
      %4206 = vrot.lane.b32.xlu0 %v2783, 56
      %v4207 = vpop.permute.xlu0 %4206
      %4208 = vrot.lane.b32.xlu0 %v2784, 56
      %v4209 = vpop.permute.xlu0 %4208
      %4210 = vrot.lane.b32.xlu0 %v2785, 56
      %v4211 = vpop.permute.xlu0 %4210
      %4212 = vrot.lane.b32.xlu0 %v2786, 56
      %v4213 = vpop.permute.xlu0 %4212
      %4214 = vrot.lane.b32.xlu0 %v2787, 56
      %v4215 = vpop.permute.xlu0 %4214
      %4216 = vrot.lane.b32.xlu0 %v2788, 56
      %v4217 = vpop.permute.xlu0 %4216
      %4218 = vrot.lane.b32.xlu0 %v2789, 56
      %v4219 = vpop.permute.xlu0 %4218
      %4220 = vrot.lane.b32.xlu0 %v2790, 56
      %v4221 = vpop.permute.xlu0 %4220
      %4222 = vrot.lane.b32.xlu0 %v2791, 56
      %v4223 = vpop.permute.xlu0 %4222
      %4224 = vrot.lane.b32.xlu0 %v2792, 56
      %v4225 = vpop.permute.xlu0 %4224
      %4226 = vrot.lane.b32.xlu0 %v2793, 56
      %v4227 = vpop.permute.xlu0 %4226
      %4228 = vrot.lane.b32.xlu0 %v2794, 56
      %v4229 = vpop.permute.xlu0 %4228
      %4230 = vrot.lane.b32.xlu0 %v2795, 56
      %v4231 = vpop.permute.xlu0 %4230
      %4232 = vrot.lane.b32.xlu0 %v2796, 56
      %v4233 = vpop.permute.xlu0 %4232
      %4234 = vrot.lane.b32.xlu0 %v3543, 56
      %v4235 = vpop.permute.xlu0 %4234
      %4236 = vrot.lane.b32.xlu0 %v3544, 56
      %v4237 = vpop.permute.xlu0 %4236
      %vm4268 = vcmask 519616
      %4269 = vst.msk [vmem:[#allocation3] sm:$0xf] %vm4268, %v4179
      %4270 = vst.msk [vmem:[#allocation3 + $0x4] sm:$0xf] %vm4268, %v4181
      %4271 = vst.msk [vmem:[#allocation3 + $0x8] sm:$0xf] %vm4268, %v4183
      %4272 = vst.msk [vmem:[#allocation3 + $0xc] sm:$0xf] %vm4268, %v4185
      %4273 = vst.msk [vmem:[#allocation3 + $0x10] sm:$0xf] %vm4268, %v4187
      %4274 = vst.msk [vmem:[#allocation3 + $0x14] sm:$0xf] %vm4268, %v4189
      %4275 = vst.msk [vmem:[#allocation3 + $0x18] sm:$0xf] %vm4268, %v4191
      %4276 = vst.msk [vmem:[#allocation3 + $0x1c] sm:$0xf] %vm4268, %v4193
      %4277 = vst.msk [vmem:[#allocation3 + $0x20] sm:$0xf] %vm4268, %v4195
      %4278 = vst.msk [vmem:[#allocation3 + $0x24] sm:$0xf] %vm4268, %v4197
      %4279 = vst.msk [vmem:[#allocation3 + $0x28] sm:$0xf] %vm4268, %v4199
      %4280 = vst.msk [vmem:[#allocation3 + $0x2c] sm:$0xf] %vm4268, %v4201
      %4281 = vst.msk [vmem:[#allocation3 + $0x30] sm:$0xf] %vm4268, %v4203
      %4282 = vst.msk [vmem:[#allocation3 + $0x34] sm:$0xf] %vm4268, %v4205
      %4283 = vst.msk [vmem:[#allocation3 + $0x38] sm:$0xf] %vm4268, %v4207
      %4284 = vst.msk [vmem:[#allocation3 + $0x3c] sm:$0xf] %vm4268, %v4209
      %4285 = vst.msk [vmem:[#allocation3 + $0x40] sm:$0xf] %vm4268, %v4211
      %4286 = vst.msk [vmem:[#allocation3 + $0x44] sm:$0xf] %vm4268, %v4213
      %4287 = vst.msk [vmem:[#allocation3 + $0x48] sm:$0xf] %vm4268, %v4215
      %4288 = vst.msk [vmem:[#allocation3 + $0x4c] sm:$0xf] %vm4268, %v4217
      %4289 = vst.msk [vmem:[#allocation3 + $0x50] sm:$0xf] %vm4268, %v4219
      %4290 = vst.msk [vmem:[#allocation3 + $0x54] sm:$0xf] %vm4268, %v4221
      %4291 = vst.msk [vmem:[#allocation3 + $0x58] sm:$0xf] %vm4268, %v4223
      %4292 = vst.msk [vmem:[#allocation3 + $0x5c] sm:$0xf] %vm4268, %v4225
      %4293 = vst.msk [vmem:[#allocation3 + $0x60] sm:$0xf] %vm4268, %v4227
      %4294 = vst.msk [vmem:[#allocation3 + $0x64] sm:$0xf] %vm4268, %v4229
      %4295 = vst.msk [vmem:[#allocation3 + $0x68] sm:$0xf] %vm4268, %v4231
      %4296 = vst.msk [vmem:[#allocation3 + $0x6c] sm:$0xf] %vm4268, %v4233
      %4297 = vst.msk [vmem:[#allocation3 + $0x70] sm:$0xf] %vm4268, %v4235
      %4298 = vst.msk [vmem:[#allocation3 + $0x74] sm:$0xf] %vm4268, %v4237
      %4299 = vrot.lane.b32.xlu0 %v3266, 64
      %v4300 = vpop.permute.xlu0 %4299
      %4301 = vrot.lane.b32.xlu0 %v3269, 64
      %v4302 = vpop.permute.xlu0 %4301
      %4303 = vrot.lane.b32.xlu0 %v3275, 64
      %v4304 = vpop.permute.xlu0 %4303
      %4305 = vrot.lane.b32.xlu0 %v3278, 64
      %v4306 = vpop.permute.xlu0 %4305
      %4307 = vrot.lane.b32.xlu0 %v3284, 64
      %v4308 = vpop.permute.xlu0 %4307
      %4309 = vrot.lane.b32.xlu0 %v3287, 64
      %v4310 = vpop.permute.xlu0 %4309
      %4311 = vrot.lane.b32.xlu0 %v3293, 64
      %v4312 = vpop.permute.xlu0 %4311
      %4313 = vrot.lane.b32.xlu0 %v3296, 64
      %v4314 = vpop.permute.xlu0 %4313
      %4315 = vrot.lane.b32.xlu0 %v3302, 64
      %v4316 = vpop.permute.xlu0 %4315
      %4317 = vrot.lane.b32.xlu0 %v3305, 64
      %v4318 = vpop.permute.xlu0 %4317
      %4319 = vrot.lane.b32.xlu0 %v3311, 64
      %v4320 = vpop.permute.xlu0 %4319
      %4321 = vrot.lane.b32.xlu0 %v3314, 64
      %v4322 = vpop.permute.xlu0 %4321
      %4323 = vrot.lane.b32.xlu0 %v3320, 64
      %v4324 = vpop.permute.xlu0 %4323
      %4325 = vrot.lane.b32.xlu0 %v3323, 64
      %v4326 = vpop.permute.xlu0 %4325
      %4327 = vrot.lane.b32.xlu0 %v3329, 64
      %v4328 = vpop.permute.xlu0 %4327
      %4329 = vrot.lane.b32.xlu0 %v3332, 64
      %v4330 = vpop.permute.xlu0 %4329
      %4331 = vrot.lane.b32.xlu0 %v3338, 64
      %v4332 = vpop.permute.xlu0 %4331
      %4333 = vrot.lane.b32.xlu0 %v3341, 64
      %v4334 = vpop.permute.xlu0 %4333
      %4335 = vrot.lane.b32.xlu0 %v3347, 64
      %v4336 = vpop.permute.xlu0 %4335
      %4337 = vrot.lane.b32.xlu0 %v3350, 64
      %v4338 = vpop.permute.xlu0 %4337
      %4339 = vrot.lane.b32.xlu0 %v3356, 64
      %v4340 = vpop.permute.xlu0 %4339
      %4341 = vrot.lane.b32.xlu0 %v3359, 64
      %v4342 = vpop.permute.xlu0 %4341
      %4343 = vrot.lane.b32.xlu0 %v3365, 64
      %v4344 = vpop.permute.xlu0 %4343
      %4345 = vrot.lane.b32.xlu0 %v3368, 64
      %v4346 = vpop.permute.xlu0 %4345
      %4347 = vrot.lane.b32.xlu0 %v3374, 64
      %v4348 = vpop.permute.xlu0 %4347
      %4349 = vrot.lane.b32.xlu0 %v3377, 64
      %v4350 = vpop.permute.xlu0 %4349
      %4351 = vrot.lane.b32.xlu0 %v3383, 64
      %v4352 = vpop.permute.xlu0 %4351
      %4353 = vrot.lane.b32.xlu0 %v3386, 64
      %v4354 = vpop.permute.xlu0 %4353
      %4355 = vrot.lane.b32.xlu0 %v3858, 64
      %v4356 = vpop.permute.xlu0 %4355
      %4357 = vrot.lane.b32.xlu0 %v3861, 64
      %v4358 = vpop.permute.xlu0 %4357
      %vm4389 = vcmask 585216
      %4390 = vst.msk [vmem:[#allocation3] sm:$0xf] %vm4389, %v4300
      %vm4391 = vcmask 585216
      %vm4392 = vmand %vm4391, %vm1040
      %v4393 = vld [vmem:[#allocation3 + $0x4] sm:$0xf]
      %v4394 = vsel %vm4392, %v4302, %v4393
      %4395 = vst [vmem:[#allocation3 + $0x4] sm:$0xf] %v4394
      %4396 = vst.msk [vmem:[#allocation3 + $0x8] sm:$0xf] %vm4389, %v4304
      %v4397 = vld [vmem:[#allocation3 + $0xc] sm:$0xf]
      %v4398 = vsel %vm4392, %v4306, %v4397
      %4399 = vst [vmem:[#allocation3 + $0xc] sm:$0xf] %v4398
      %4400 = vst.msk [vmem:[#allocation3 + $0x10] sm:$0xf] %vm4389, %v4308
      %v4401 = vld [vmem:[#allocation3 + $0x14] sm:$0xf]
      %v4402 = vsel %vm4392, %v4310, %v4401
      %4403 = vst [vmem:[#allocation3 + $0x14] sm:$0xf] %v4402
      %4404 = vst.msk [vmem:[#allocation3 + $0x18] sm:$0xf] %vm4389, %v4312
      %v4405 = vld [vmem:[#allocation3 + $0x1c] sm:$0xf]
      %v4406 = vsel %vm4392, %v4314, %v4405
      %4407 = vst [vmem:[#allocation3 + $0x1c] sm:$0xf] %v4406
      %4408 = vst.msk [vmem:[#allocation3 + $0x20] sm:$0xf] %vm4389, %v4316
      %v4409 = vld [vmem:[#allocation3 + $0x24] sm:$0xf]
      %v4410 = vsel %vm4392, %v4318, %v4409
      %4411 = vst [vmem:[#allocation3 + $0x24] sm:$0xf] %v4410
      %4412 = vst.msk [vmem:[#allocation3 + $0x28] sm:$0xf] %vm4389, %v4320
      %v4413 = vld [vmem:[#allocation3 + $0x2c] sm:$0xf]
      %v4414 = vsel %vm4392, %v4322, %v4413
      %4415 = vst [vmem:[#allocation3 + $0x2c] sm:$0xf] %v4414
      %4416 = vst.msk [vmem:[#allocation3 + $0x30] sm:$0xf] %vm4389, %v4324
      %v4417 = vld [vmem:[#allocation3 + $0x34] sm:$0xf]
      %v4418 = vsel %vm4392, %v4326, %v4417
      %4419 = vst [vmem:[#allocation3 + $0x34] sm:$0xf] %v4418
      %4420 = vst.msk [vmem:[#allocation3 + $0x38] sm:$0xf] %vm4389, %v4328
      %v4421 = vld [vmem:[#allocation3 + $0x3c] sm:$0xf]
      %v4422 = vsel %vm4392, %v4330, %v4421
      %4423 = vst [vmem:[#allocation3 + $0x3c] sm:$0xf] %v4422
      %4424 = vst.msk [vmem:[#allocation3 + $0x40] sm:$0xf] %vm4389, %v4332
      %v4425 = vld [vmem:[#allocation3 + $0x44] sm:$0xf]
      %v4426 = vsel %vm4392, %v4334, %v4425
      %4427 = vst [vmem:[#allocation3 + $0x44] sm:$0xf] %v4426
      %4428 = vst.msk [vmem:[#allocation3 + $0x48] sm:$0xf] %vm4389, %v4336
      %v4429 = vld [vmem:[#allocation3 + $0x4c] sm:$0xf]
      %v4430 = vsel %vm4392, %v4338, %v4429
      %4431 = vst [vmem:[#allocation3 + $0x4c] sm:$0xf] %v4430
      %4432 = vst.msk [vmem:[#allocation3 + $0x50] sm:$0xf] %vm4389, %v4340
      %v4433 = vld [vmem:[#allocation3 + $0x54] sm:$0xf]
      %v4434 = vsel %vm4392, %v4342, %v4433
      %4435 = vst [vmem:[#allocation3 + $0x54] sm:$0xf] %v4434
      %4436 = vst.msk [vmem:[#allocation3 + $0x58] sm:$0xf] %vm4389, %v4344
      %v4437 = vld [vmem:[#allocation3 + $0x5c] sm:$0xf]
      %v4438 = vsel %vm4392, %v4346, %v4437
      %4439 = vst [vmem:[#allocation3 + $0x5c] sm:$0xf] %v4438
      %4440 = vst.msk [vmem:[#allocation3 + $0x60] sm:$0xf] %vm4389, %v4348
      %v4441 = vld [vmem:[#allocation3 + $0x64] sm:$0xf]
      %v4442 = vsel %vm4392, %v4350, %v4441
      %4443 = vst [vmem:[#allocation3 + $0x64] sm:$0xf] %v4442
      %4444 = vst.msk [vmem:[#allocation3 + $0x68] sm:$0xf] %vm4389, %v4352
      %v4445 = vld [vmem:[#allocation3 + $0x6c] sm:$0xf]
      %v4446 = vsel %vm4392, %v4354, %v4445
      %4447 = vst [vmem:[#allocation3 + $0x6c] sm:$0xf] %v4446
      %4448 = vst.msk [vmem:[#allocation3 + $0x70] sm:$0xf] %vm4389, %v4356
      %v4449 = vld [vmem:[#allocation3 + $0x74] sm:$0xf]
      %v4450 = vsel %vm4392, %v4358, %v4449
      %4451 = vst [vmem:[#allocation3 + $0x74] sm:$0xf] %v4450
      %v4452 = vld [vmem:[#allocation3] sm:$0xf]
      %v4453 = vld [vmem:[#allocation3 + $0x4] sm:$0xf]
      %v4454 = vld [vmem:[#allocation3 + $0x8] sm:$0xf]
      %v4455 = vld [vmem:[#allocation3 + $0xc] sm:$0xf]
      %v4456 = vld [vmem:[#allocation3 + $0x10] sm:$0xf]
      %v4457 = vld [vmem:[#allocation3 + $0x14] sm:$0xf]
      %v4458 = vld [vmem:[#allocation3 + $0x18] sm:$0xf]
      %v4459 = vld [vmem:[#allocation3 + $0x1c] sm:$0xf]
      %v4460 = vld [vmem:[#allocation3 + $0x20] sm:$0xf]
      %v4461 = vld [vmem:[#allocation3 + $0x24] sm:$0xf]
      %v4462 = vld [vmem:[#allocation3 + $0x28] sm:$0xf]
      %v4463 = vld [vmem:[#allocation3 + $0x2c] sm:$0xf]
      %v4464 = vld [vmem:[#allocation3 + $0x30] sm:$0xf]
      %v4465 = vld [vmem:[#allocation3 + $0x34] sm:$0xf]
      %v4466 = vld [vmem:[#allocation3 + $0x38] sm:$0xf]
      %v4467 = vld [vmem:[#allocation3 + $0x3c] sm:$0xf]
      %v4468 = vld [vmem:[#allocation3 + $0x40] sm:$0xf]
      %v4469 = vld [vmem:[#allocation3 + $0x44] sm:$0xf]
      %v4470 = vld [vmem:[#allocation3 + $0x48] sm:$0xf]
      %v4471 = vld [vmem:[#allocation3 + $0x4c] sm:$0xf]
      %v4472 = vld [vmem:[#allocation3 + $0x50] sm:$0xf]
      %v4473 = vld [vmem:[#allocation3 + $0x54] sm:$0xf]
      %v4474 = vld [vmem:[#allocation3 + $0x58] sm:$0xf]
      %v4475 = vld [vmem:[#allocation3 + $0x5c] sm:$0xf]
      %v4476 = vld [vmem:[#allocation3 + $0x60] sm:$0xf]
      %v4477 = vld [vmem:[#allocation3 + $0x64] sm:$0xf]
      %v4478 = vld [vmem:[#allocation3 + $0x68] sm:$0xf]
      %v4479 = vld [vmem:[#allocation3 + $0x6c] sm:$0xf]
      %v4480 = vld [vmem:[#allocation3 + $0x70] sm:$0xf]
      %v4481 = vld [vmem:[#allocation3 + $0x74] sm:$0xf]
      %v4482 = vld [vmem:[#allocation3 + $0x78] sm:$0xf]
      %v4483 = vld [vmem:[#allocation3 + $0x7c] sm:$0xf]
      %v4484 = vld [vmem:[%s6] sm:$0xf]
      %v4485 = vld [vmem:[%s6 + $0x4] sm:$0xf]
      %v4486 = vld [vmem:[%s6 + $0x8] sm:$0xf]
      %v4487 = vld [vmem:[%s6 + $0xc] sm:$0xf]
      %v4488 = vld [vmem:[%s6 + $0x10] sm:$0xf]
      %v4489 = vld [vmem:[%s6 + $0x14] sm:$0xf]
      %v4490 = vld [vmem:[%s6 + $0x18] sm:$0xf]
      %v4491 = vld [vmem:[%s6 + $0x1c] sm:$0xf]
      %v4492 = vld [vmem:[%s6 + $0x20] sm:$0xf]
      %v4493 = vld [vmem:[%s6 + $0x24] sm:$0xf]
      %v4494 = vld [vmem:[%s6 + $0x28] sm:$0xf]
      %v4495 = vld [vmem:[%s6 + $0x2c] sm:$0xf]
      %v4496 = vld [vmem:[%s6 + $0x30] sm:$0xf]
      %v4497 = vld [vmem:[%s6 + $0x34] sm:$0xf]
      %v4498 = vld [vmem:[%s6 + $0x38] sm:$0xf]
      %v4499 = vld [vmem:[%s6 + $0x3c] sm:$0xf]
      %v4532 = vunpack.c.l.b16 %v4452
      %v4533 = vunpack.c.l.b16 %v4453
      %v4534 = vunpack.c.l.b16 %v4454
      %v4535 = vunpack.c.l.b16 %v4455
      %v4536 = vunpack.c.l.b16 %v4456
      %v4537 = vunpack.c.l.b16 %v4457
      %v4538 = vunpack.c.l.b16 %v4458
      %v4539 = vunpack.c.l.b16 %v4459
      %v4540 = vunpack.c.l.b16 %v4460
      %v4541 = vunpack.c.l.b16 %v4461
      %v4542 = vunpack.c.l.b16 %v4462
      %v4543 = vunpack.c.l.b16 %v4463
      %v4544 = vunpack.c.l.b16 %v4464
      %v4545 = vunpack.c.l.b16 %v4465
      %v4546 = vunpack.c.l.b16 %v4466
      %v4547 = vunpack.c.l.b16 %v4467
      %v4548 = vunpack.c.l.b16 %v4468
      %v4549 = vunpack.c.l.b16 %v4469
      %v4550 = vunpack.c.l.b16 %v4470
      %v4551 = vunpack.c.l.b16 %v4471
      %v4552 = vunpack.c.l.b16 %v4472
      %v4553 = vunpack.c.l.b16 %v4473
      %v4554 = vunpack.c.l.b16 %v4474
      %v4555 = vunpack.c.l.b16 %v4475
      %v4556 = vunpack.c.l.b16 %v4476
      %v4557 = vunpack.c.l.b16 %v4477
      %v4558 = vunpack.c.l.b16 %v4478
      %v4559 = vunpack.c.l.b16 %v4479
      %v4560 = vunpack.c.l.b16 %v4480
      %v4561 = vunpack.c.l.b16 %v4481
      %v4562 = vunpack.c.l.b16 %v4482
      %v4563 = vunpack.c.l.b16 %v4483
      %v4564 = vpack.c.b16 %v4533, %v4532
      %v4565 = vpack.c.b16 %v4535, %v4534
      %v4566 = vpack.c.b16 %v4537, %v4536
      %v4567 = vpack.c.b16 %v4539, %v4538
      %v4568 = vpack.c.b16 %v4541, %v4540
      %v4569 = vpack.c.b16 %v4543, %v4542
      %v4570 = vpack.c.b16 %v4545, %v4544
      %v4571 = vpack.c.b16 %v4547, %v4546
      %v4572 = vpack.c.b16 %v4549, %v4548
      %v4573 = vpack.c.b16 %v4551, %v4550
      %v4574 = vpack.c.b16 %v4553, %v4552
      %v4575 = vpack.c.b16 %v4555, %v4554
      %v4576 = vpack.c.b16 %v4557, %v4556
      %v4577 = vpack.c.b16 %v4559, %v4558
      %v4578 = vpack.c.b16 %v4561, %v4560
      %v4579 = vpack.c.b16 %v4563, %v4562
      %v4612 = vunpack.c.l.b16 %v4484
      %v4613 = vunpack.c.l.b16 %v4485
      %v4614 = vunpack.c.l.b16 %v4486
      %v4615 = vunpack.c.l.b16 %v4487
      %v4616 = vunpack.c.l.b16 %v4488
      %v4617 = vunpack.c.l.b16 %v4489
      %v4618 = vunpack.c.l.b16 %v4490
      %v4619 = vunpack.c.l.b16 %v4491
      %v4620 = vunpack.c.l.b16 %v4492
      %v4621 = vunpack.c.l.b16 %v4493
      %v4622 = vunpack.c.l.b16 %v4494
      %v4623 = vunpack.c.l.b16 %v4495
      %v4624 = vunpack.c.l.b16 %v4496
      %v4625 = vunpack.c.l.b16 %v4497
      %v4626 = vunpack.c.l.b16 %v4498
      %v4627 = vunpack.c.l.b16 %v4499
      %v4628 = vpack.c.b16 %v4613, %v4612
      %v4629 = vpack.c.b16 %v4615, %v4614
      %v4630 = vpack.c.b16 %v4617, %v4616
      %v4631 = vpack.c.b16 %v4619, %v4618
      %v4632 = vpack.c.b16 %v4621, %v4620
      %v4633 = vpack.c.b16 %v4623, %v4622
      %v4634 = vpack.c.b16 %v4625, %v4624
      %v4635 = vpack.c.b16 %v4627, %v4626
      %4644 = vmatprep.subr.bf16.mxu0 0
      %4645 = vmatpush1.bf16.msra.mxu0 %v4635
      %4646 = vmatprep.subr.bf16.mxu0 0
      %4647 = vmatpush1.bf16.msra.mxu0 %v4634
      %4648 = vmatprep.subr.bf16.mxu0 0
      %4649 = vmatpush1.bf16.msra.mxu0 %v4633
      %4650 = vmatprep.subr.bf16.mxu0 0
      %4651 = vmatpush1.bf16.msra.mxu0 %v4632
      %4652 = vmatprep.subr.bf16.mxu0 0
      %4653 = vmatpush1.bf16.msra.mxu0 %v4631
      %4654 = vmatprep.subr.bf16.mxu0 0
      %4655 = vmatpush1.bf16.msra.mxu0 %v4630
      %4656 = vmatprep.subr.bf16.mxu0 0
      %4657 = vmatpush1.bf16.msra.mxu0 %v4629
      %4658 = vmatprep.subr.bf16.mxu0 0
      %4659 = vmatpush1.bf16.msra.mxu0 %v4628
      %4660 = vmatprep.subr.bf16.mxu0 0
      %4661 = vmatpush2.bf16.msra.mxu0 0
      %4662 = vmatprep.subr.bf16.mxu0 0
      %4663 = vmatpush2.bf16.msra.mxu0 0
      %4664 = vmatprep.subr.bf16.mxu0 0
      %4665 = vmatpush2.bf16.msra.mxu0 0
      %4666 = vmatprep.subr.bf16.mxu0 0
      %4667 = vmatpush2.bf16.msra.mxu0 0
      %4668 = vmatprep.subr.bf16.mxu0 0
      %4669 = vmatpush2.bf16.msra.mxu0 0
      %4670 = vmatprep.subr.bf16.mxu0 0
      %4671 = vmatpush2.bf16.msra.mxu0 0
      %4672 = vmatprep.subr.bf16.mxu0 0
      %4673 = vmatpush2.bf16.msra.mxu0 0
      %4674 = vmatprep.subr.bf16.mxu0 0
      %4675 = vmatpush2.bf16.msra.mxu0 0
      %4676 = vmatprep.mubr.bf16.mxu0 0
      %4677 = vmatmul.mubr.bf16.gmra.mxu0 %v4564
      %v4678 = vpop.f32.mrf.mxu0
      %v4679 = vadd.f32 0.0, %v4678
      %v4680 = vpop.f32.mrf.mxu0
      %v4681 = vpop.f32.mrf.mxu0
      %v4682 = vadd.f32 0.0, %v4681
      %v4683 = vpop.f32.mrf.mxu0
      %4684 = vmatprep.mubr.bf16.mxu0 0
      %4685 = vmatmul.mubr.bf16.gmra.mxu0 %v4565
      %v4686 = vpop.f32.mrf.mxu0
      %v4687 = vadd.f32 0.0, %v4686
      %v4688 = vpop.f32.mrf.mxu0
      %v4689 = vpop.f32.mrf.mxu0
      %v4690 = vadd.f32 0.0, %v4689
      %v4691 = vpop.f32.mrf.mxu0
      %4692 = vmatprep.mubr.bf16.mxu0 0
      %4693 = vmatmul.mubr.bf16.gmra.mxu0 %v4566
      %v4694 = vpop.f32.mrf.mxu0
      %v4695 = vadd.f32 0.0, %v4694
      %v4696 = vpop.f32.mrf.mxu0
      %v4697 = vpop.f32.mrf.mxu0
      %v4698 = vadd.f32 0.0, %v4697
      %v4699 = vpop.f32.mrf.mxu0
      %4700 = vmatprep.mubr.bf16.mxu0 0
      %4701 = vmatmul.mubr.bf16.gmra.mxu0 %v4567
      %v4702 = vpop.f32.mrf.mxu0
      %v4703 = vadd.f32 0.0, %v4702
      %v4704 = vpop.f32.mrf.mxu0
      %v4705 = vpop.f32.mrf.mxu0
      %v4706 = vadd.f32 0.0, %v4705
      %v4707 = vpop.f32.mrf.mxu0
      %4708 = vmatprep.mubr.bf16.mxu0 0
      %4709 = vmatmul.mubr.bf16.gmra.mxu0 %v4568
      %v4710 = vpop.f32.mrf.mxu0
      %v4711 = vadd.f32 0.0, %v4710
      %v4712 = vpop.f32.mrf.mxu0
      %v4713 = vpop.f32.mrf.mxu0
      %v4714 = vadd.f32 0.0, %v4713
      %v4715 = vpop.f32.mrf.mxu0
      %4716 = vmatprep.mubr.bf16.mxu0 0
      %4717 = vmatmul.mubr.bf16.gmra.mxu0 %v4569
      %v4718 = vpop.f32.mrf.mxu0
      %v4719 = vadd.f32 0.0, %v4718
      %v4720 = vpop.f32.mrf.mxu0
      %v4721 = vpop.f32.mrf.mxu0
      %v4722 = vadd.f32 0.0, %v4721
      %v4723 = vpop.f32.mrf.mxu0
      %4724 = vmatprep.mubr.bf16.mxu0 0
      %4725 = vmatmul.mubr.bf16.gmra.mxu0 %v4570
      %v4726 = vpop.f32.mrf.mxu0
      %v4727 = vadd.f32 0.0, %v4726
      %v4728 = vpop.f32.mrf.mxu0
      %v4729 = vpop.f32.mrf.mxu0
      %v4730 = vadd.f32 0.0, %v4729
      %v4731 = vpop.f32.mrf.mxu0
      %4732 = vmatprep.mubr.bf16.mxu0 0
      %4733 = vmatmul.mubr.bf16.gmra.mxu0 %v4571
      %v4734 = vpop.f32.mrf.mxu0
      %v4735 = vadd.f32 0.0, %v4734
      %v4736 = vpop.f32.mrf.mxu0
      %v4737 = vpop.f32.mrf.mxu0
      %v4738 = vadd.f32 0.0, %v4737
      %v4739 = vpop.f32.mrf.mxu0
      %4740 = vmatprep.mubr.bf16.mxu0 0
      %4741 = vmatmul.mubr.bf16.gmra.mxu0 %v4572
      %v4742 = vpop.f32.mrf.mxu0
      %v4743 = vadd.f32 0.0, %v4742
      %v4744 = vpop.f32.mrf.mxu0
      %v4745 = vpop.f32.mrf.mxu0
      %v4746 = vadd.f32 0.0, %v4745
      %v4747 = vpop.f32.mrf.mxu0
      %4748 = vmatprep.mubr.bf16.mxu0 0
      %4749 = vmatmul.mubr.bf16.gmra.mxu0 %v4573
      %v4750 = vpop.f32.mrf.mxu0
      %v4751 = vadd.f32 0.0, %v4750
      %v4752 = vpop.f32.mrf.mxu0
      %v4753 = vpop.f32.mrf.mxu0
      %v4754 = vadd.f32 0.0, %v4753
      %v4755 = vpop.f32.mrf.mxu0
      %4756 = vmatprep.mubr.bf16.mxu0 0
      %4757 = vmatmul.mubr.bf16.gmra.mxu0 %v4574
      %v4758 = vpop.f32.mrf.mxu0
      %v4759 = vadd.f32 0.0, %v4758
      %v4760 = vpop.f32.mrf.mxu0
      %v4761 = vpop.f32.mrf.mxu0
      %v4762 = vadd.f32 0.0, %v4761
      %v4763 = vpop.f32.mrf.mxu0
      %4764 = vmatprep.mubr.bf16.mxu0 0
      %4765 = vmatmul.mubr.bf16.gmra.mxu0 %v4575
      %v4766 = vpop.f32.mrf.mxu0
      %v4767 = vadd.f32 0.0, %v4766
      %v4768 = vpop.f32.mrf.mxu0
      %v4769 = vpop.f32.mrf.mxu0
      %v4770 = vadd.f32 0.0, %v4769
      %v4771 = vpop.f32.mrf.mxu0
      %4772 = vmatprep.mubr.bf16.mxu0 0
      %4773 = vmatmul.mubr.bf16.gmra.mxu0 %v4576
      %v4774 = vpop.f32.mrf.mxu0
      %v4775 = vadd.f32 0.0, %v4774
      %v4776 = vpop.f32.mrf.mxu0
      %v4777 = vpop.f32.mrf.mxu0
      %v4778 = vadd.f32 0.0, %v4777
      %v4779 = vpop.f32.mrf.mxu0
      %4780 = vmatprep.mubr.bf16.mxu0 0
      %4781 = vmatmul.mubr.bf16.gmra.mxu0 %v4577
      %v4782 = vpop.f32.mrf.mxu0
      %v4783 = vadd.f32 0.0, %v4782
      %v4784 = vpop.f32.mrf.mxu0
      %v4785 = vpop.f32.mrf.mxu0
      %v4786 = vadd.f32 0.0, %v4785
      %v4787 = vpop.f32.mrf.mxu0
      %4788 = vmatprep.mubr.bf16.mxu0 0
      %4789 = vmatmul.mubr.bf16.gmra.mxu0 %v4578
      %v4790 = vpop.f32.mrf.mxu0
      %v4791 = vadd.f32 0.0, %v4790
      %v4792 = vpop.f32.mrf.mxu0
      %v4793 = vpop.f32.mrf.mxu0
      %v4794 = vadd.f32 0.0, %v4793
      %v4795 = vpop.f32.mrf.mxu0
      %4796 = vmatprep.mubr.bf16.mxu0 0
      %4797 = vmatmul.mubr.bf16.gmra.mxu0 %v4579
      %v4798 = vpop.f32.mrf.mxu0
      %v4799 = vadd.f32 0.0, %v4798
      %v4800 = vpop.f32.mrf.mxu0
      %v4801 = vpop.f32.mrf.mxu0
      %v4802 = vadd.f32 0.0, %v4801
      %v4803 = vpop.f32.mrf.mxu0
      %4804 = vdwg.mxu0
      %vm4805 = vcmask 64512
      %4806 = vst.msk [vmem:[%s278] sm:$0xff] %vm4805, %v4679
      %4807 = vst.msk [vmem:[%s278 + $0x8] sm:$0xff] %vm4805, %v4682
      %4808 = vst.msk [vmem:[%s278 + $0x10] sm:$0xff] %vm4805, %v4687
      %4809 = vst.msk [vmem:[%s278 + $0x18] sm:$0xff] %vm4805, %v4690
      %4810 = vst.msk [vmem:[%s278 + $0x20] sm:$0xff] %vm4805, %v4695
      %4811 = vst.msk [vmem:[%s278 + $0x28] sm:$0xff] %vm4805, %v4698
      %4812 = vst.msk [vmem:[%s278 + $0x30] sm:$0xff] %vm4805, %v4703
      %4813 = vst.msk [vmem:[%s278 + $0x38] sm:$0xff] %vm4805, %v4706
      %4814 = vst.msk [vmem:[%s278 + $0x40] sm:$0xff] %vm4805, %v4711
      %4815 = vst.msk [vmem:[%s278 + $0x48] sm:$0xff] %vm4805, %v4714
      %4816 = vst.msk [vmem:[%s278 + $0x50] sm:$0xff] %vm4805, %v4719
      %4817 = vst.msk [vmem:[%s278 + $0x58] sm:$0xff] %vm4805, %v4722
      %4818 = vst.msk [vmem:[%s278 + $0x60] sm:$0xff] %vm4805, %v4727
      %4819 = vst.msk [vmem:[%s278 + $0x68] sm:$0xff] %vm4805, %v4730
      %4820 = vst.msk [vmem:[%s278 + $0x70] sm:$0xff] %vm4805, %v4735
      %4821 = vst.msk [vmem:[%s278 + $0x78] sm:$0xff] %vm4805, %v4738
      %4822 = vst.msk [vmem:[%s278 + $0x80] sm:$0xff] %vm4805, %v4743
      %4823 = vst.msk [vmem:[%s278 + $0x88] sm:$0xff] %vm4805, %v4746
      %4824 = vst.msk [vmem:[%s278 + $0x90] sm:$0xff] %vm4805, %v4751
      %4825 = vst.msk [vmem:[%s278 + $0x98] sm:$0xff] %vm4805, %v4754
      %4826 = vst.msk [vmem:[%s278 + $0xa0] sm:$0xff] %vm4805, %v4759
      %4827 = vst.msk [vmem:[%s278 + $0xa8] sm:$0xff] %vm4805, %v4762
      %4828 = vst.msk [vmem:[%s278 + $0xb0] sm:$0xff] %vm4805, %v4767
      %4829 = vst.msk [vmem:[%s278 + $0xb8] sm:$0xff] %vm4805, %v4770
      %4830 = vst.msk [vmem:[%s278 + $0xc0] sm:$0xff] %vm4805, %v4775
      %4831 = vst.msk [vmem:[%s278 + $0xc8] sm:$0xff] %vm4805, %v4778
      %4832 = vst.msk [vmem:[%s278 + $0xd0] sm:$0xff] %vm4805, %v4783
      %4833 = vst.msk [vmem:[%s278 + $0xd8] sm:$0xff] %vm4805, %v4786
      %4834 = vst.msk [vmem:[%s278 + $0xe0] sm:$0xff] %vm4805, %v4791
      %4835 = vst.msk [vmem:[%s278 + $0xe8] sm:$0xff] %vm4805, %v4794
      %4836 = vst.msk [vmem:[%s278 + $0xf0] sm:$0xff] %vm4805, %v4799
      %4837 = vst.msk [vmem:[%s278 + $0xf8] sm:$0xff] %vm4805, %v4802
      %p4838 = scmp.lt.s32.totalorder %s18, 1
      %s4839 = scalar_select %p4838, %s18, 1
      %s4840 = smul.addr %s4839, 32
      %s4841 = smul.addr %s4840, 8
      %s4842 = scalar_lea.vmem %s7, %s4841
      // Predicated region
      $region53: #{forward.1} parent=47 // pred_check
        %p4843 = pneg %p188
      $region54: #{forward.1} parent=47 // pred_check_branch
        %4845 = sbr.rel (%p4843) target = $region56
      $region55: #{forward.1} parent=47 // pred_region
        _
      $region56: #{forward.1} parent=47 // pred_fallthru
        _
    $region48: #{forward.1} parent=5 // pred_fallthru
      _
    %p4846 = scmp.le.s32.totalorder 2, %s13
    // Predicated region
    $region57: #{forward.1} parent=5 // pred_check
      %p4847 = pneg %p4846
    $region58: #{forward.1} parent=5 // pred_check_branch
      %4849 = sbr.rel (%p4847) target = $region60
    $region59: #{forward.1} parent=5 // pred_region
      %s4850 = ssub.s32 %s13, 2
      // Predicated region
      $region61: #{forward.1} parent=59 // pred_check
        %p4851 = pneg %p194
      $region62: #{forward.1} parent=59 // pred_check_branch
        %4853 = sbr.rel (%p4851) target = $region64
      $region63: #{forward.1} parent=59 // pred_region
        %p4854 = scmp.lt.s32.totalorder %s19, 1
        %s4855 = scalar_select %p4854, %s19, 1
        %s4856 = smul.addr %s4855, 32
        %s4857 = smul.addr %s4856, 8
        %s4858 = scalar_lea.vmem %s7, %s4857
      $region64: #{forward.1} parent=59 // pred_fallthru
        _
    $region60: #{forward.1} parent=5 // pred_fallthru
      _
  $region6: #{forward.1} parent=0 // loop_footer
    %s17 = sadd.s32 1, %s13
  $region7: #{forward.1} parent=0 // loop_footer_branch
    %12 = sbr.rel target = $region3
  $region8: #{forward.1} parent=0 // loop_exit
    _

</llo_original>
